<compile_context>
chip_gen: v7x
topology: tpu7x:2x2x1
jax: 0.10.0
libtpu: 0.0.40
codegen_flags: <defaults>
</compile_context>

<pallas_src>
import functools

import jax
import jax.numpy as jnp
from jax import lax
from jax.experimental import pallas as pl
from jax.experimental.pallas import tpu as pltpu


# ----------------------------------------------------------------------------
# Fused kernel: conv1(s2) + BN1 + ReLU6 + conv2(s1) + BN2 + ReLU6, per image
# ----------------------------------------------------------------------------
def _double_conv_kernel(xph_ref, w1_ref, b1_ref, w2_ref, b2_ref, o_ref,
                        mid_ref, *, Ho, Wo):
    cin_p = xph_ref.shape[-1]
    c1p = w1_ref.shape[-1]

    # ---- conv1: 3x3 / stride 2 via the 4-phase decomposition ----
    acc = jnp.zeros((Ho * Wo, c1p), jnp.float32)
    for kh in range(3):
        for kw in range(3):
            ph = (kh % 2) * 2 + (kw % 2)          # (row parity, col parity)
            r0, c0 = kh // 2, kw // 2
            tap = xph_ref[ph, r0:r0 + Ho, c0:c0 + Wo, :]   # (Ho, Wo, cin_p) bf16
            acc += jnp.dot(tap.reshape(Ho * Wo, cin_p),
                           w1_ref[kh * 3 + kw],
                           preferred_element_type=jnp.float32)
    y1 = jnp.clip(acc + b1_ref[...], 0.0, 6.0)    # folded BN1 bias + ReLU6

    # stage-1 activation stays on-chip: zero-padded VMEM scratch for conv2
    mid_ref[...] = jnp.zeros_like(mid_ref)
    mid_ref[1:Ho + 1, 1:Wo + 1, :] = y1.reshape(Ho, Wo, c1p)

    # ---- conv2: 3x3 / stride 1 over the padded intermediate ----
    acc2 = jnp.zeros((Ho * Wo, c1p), jnp.float32)
    for kh in range(3):
        for kw in range(3):
            tap = mid_ref[kh:kh + Ho, kw:kw + Wo, :]       # (Ho, Wo, c1p) f32
            acc2 += jnp.dot(tap.reshape(Ho * Wo, c1p).astype(jnp.bfloat16),
                            w2_ref[kh * 3 + kw],
                            preferred_element_type=jnp.float32)
    y2 = jnp.clip(acc2 + b2_ref[...], 0.0, 6.0)   # folded BN2 bias + ReLU6
    o_ref[...] = y2.reshape(Ho, Wo, c1p).astype(o_ref.dtype)


# ----------------------------------------------------------------------------
# Host-side glue
# ----------------------------------------------------------------------------
def _round_up(x, m):
    return (x + m - 1) // m * m


def _phase_split_stride2(x_nhwc):
    """Zero-pad by 1 and split into 4 even/odd (row, col) phases.

    Returns (N, 4, Hh, Wh, C) with phase index = 2*row_parity + col_parity,
    so padded[2h+kh, 2w+kw] == phases[2*(kh%2)+(kw%2), h+kh//2, w+kw//2].
    """
    N, H, W, C = x_nhwc.shape
    xp = jnp.pad(x_nhwc, ((0, 0), (1, 1), (1, 1), (0, 0)))
    Hp, Wp = H + 2, W + 2
    Hp2, Wp2 = Hp + (Hp % 2), Wp + (Wp % 2)
    xp = jnp.pad(xp, ((0, 0), (0, Hp2 - Hp), (0, Wp2 - Wp), (0, 0)))
    Hh, Wh = Hp2 // 2, Wp2 // 2
    x6 = xp.reshape(N, Hh, 2, Wh, 2, C).transpose(0, 2, 4, 1, 3, 5)
    return x6.reshape(N, 4, Hh, Wh, C)


def _fold_conv_bn(w_oihw, conv_bias, gamma, beta, mean, var, cin_p, cout_p,
                  eps=1e-5):
    """Fold eval-mode BN into conv weights/bias; pad channels; cast W to bf16."""
    cout, cin = w_oihw.shape[0], w_oihw.shape[1]
    scale = gamma / jnp.sqrt(var + eps)                          # (cout,)
    # OIHW -> (kh, kw, cin, cout) -> (9, cin, cout); fold BN scale into W
    w = jnp.transpose(w_oihw, (2, 3, 1, 0)).reshape(9, cin, cout) * scale
    w = jnp.pad(w, ((0, 0), (0, cin_p - cin), (0, cout_p - cout)))
    bias = (conv_bias - mean) * scale + beta                     # (cout,)
    bias = jnp.pad(bias, (0, cout_p - cout)).reshape(1, cout_p)
    return w.astype(jnp.bfloat16), bias.astype(jnp.float32)


def double_conv_block(x_nchw, params, *, lane=128):
    N, Cin, H, W = x_nchw.shape
    Cout = params["w1"].shape[0]
    cin_p = _round_up(Cin, lane)       # K of conv1 matmuls: full 128 lanes
    c1p = _round_up(Cout, lane)        # lane-dense output / K of conv2
    Ho = (H - 1) // 2 + 1
    Wo = (W - 1) // 2 + 1

    # NCHW -> NHWC, pad channels to a full 128-lane register width, bf16 feed
    x = jnp.transpose(x_nchw, (0, 2, 3, 1))
    x = jnp.pad(x, ((0, 0), (0, 0), (0, 0), (0, cin_p - Cin)))
    xph = _phase_split_stride2(x).astype(jnp.bfloat16)   # (N, 4, Hh, Wh, cin_p)
    Hh, Wh = xph.shape[2], xph.shape[3]

    w1, b1 = _fold_conv_bn(params["w1"], params["b1"], params["g1"],
                           params["be1"], params["m1"], params["v1"],
                           cin_p, c1p)
    w2, b2 = _fold_conv_bn(params["w2"], params["b2"], params["g2"],
                           params["be2"], params["m2"], params["v2"],
                           c1p, c1p)

    kernel = functools.partial(_double_conv_kernel, Ho=Ho, Wo=Wo)
    flops = 2 * N * Ho * Wo * 9 * (cin_p * c1p + c1p * c1p)
    bytes_accessed = (xph.size * 2 + w1.size * 2 + w2.size * 2
                      + b1.size * 4 + b2.size * 4 + N * Ho * Wo * c1p * 4)

    out = pl.pallas_call(
        kernel,
        out_shape=jax.ShapeDtypeStruct((N, Ho, Wo, c1p), jnp.float32),
        grid_spec=pltpu.PrefetchScalarGridSpec(
            num_scalar_prefetch=0,
            grid=(N,),
            in_specs=[
                pl.BlockSpec((None, 4, Hh, Wh, cin_p),
                             lambda n: (n, 0, 0, 0, 0)),
                pl.BlockSpec((9, cin_p, c1p), lambda n: (0, 0, 0)),
                pl.BlockSpec((1, c1p), lambda n: (0, 0)),
                pl.BlockSpec((9, c1p, c1p), lambda n: (0, 0, 0)),
                pl.BlockSpec((1, c1p), lambda n: (0, 0)),
            ],
            out_specs=pl.BlockSpec((None, Ho, Wo, c1p),
                                   lambda n: (n, 0, 0, 0)),
            scratch_shapes=[pltpu.VMEM((Ho + 2, Wo + 2, c1p), jnp.float32)],
        ),
        compiler_params=pltpu.CompilerParams(
            dimension_semantics=("parallel",)),
        cost_estimate=pl.CostEstimate(
            flops=flops, transcendentals=0, bytes_accessed=bytes_accessed),
    )(xph, w1, b1, w2, b2)

    # drop channel padding, NHWC -> NCHW
    return jnp.transpose(out[..., :Cout], (0, 3, 1, 2))


# ----------------------------------------------------------------------------
# Pure-JAX reference (lax conv) for the correctness check
# ----------------------------------------------------------------------------
def reference(x_nchw, params):
    def stage(x, w, b, g, be, m, v, stride):
        y = lax.conv_general_dilated(
            x, w, window_strides=(stride, stride), padding=((1, 1), (1, 1)),
            dimension_numbers=("NCHW", "OIHW", "NCHW"))
        y = y + b.reshape(1, -1, 1, 1)
        y = (y - m.reshape(1, -1, 1, 1)) / jnp.sqrt(v.reshape(1, -1, 1, 1) + 1e-5)
        y = y * g.reshape(1, -1, 1, 1) + be.reshape(1, -1, 1, 1)
        return jnp.clip(y, 0.0, 6.0)

    x = stage(x_nchw, params["w1"], params["b1"], params["g1"], params["be1"],
              params["m1"], params["v1"], 2)
    x = stage(x, params["w2"], params["b2"], params["g2"], params["be2"],
              params["m2"], params["v2"], 1)
    return x


# ----------------------------------------------------------------------------
if __name__ == "__main__":
    N, Cin, H, W = 2, 4, 16, 16
    Cout = 8

    key = jax.random.PRNGKey(0)
    ks = jax.random.split(key, 12)

    params = dict(
        # conv1: Conv2d(Cin, Cout, 3, stride=2, padding=1)
        w1=0.1 * jax.random.normal(ks[0], (Cout, Cin, 3, 3), jnp.float32),
        b1=0.1 * jax.random.normal(ks[1], (Cout,), jnp.float32),
        g1=1.0 + 0.1 * jax.random.normal(ks[2], (Cout,), jnp.float32),
        be1=0.1 * jax.random.normal(ks[3], (Cout,), jnp.float32),
        m1=0.05 * jax.random.normal(ks[4], (Cout,), jnp.float32),
        v1=1.0 + 0.1 * jax.random.uniform(ks[5], (Cout,), jnp.float32),
        # conv2: Conv2d(Cout, Cout, 3, stride=1, padding=1)
        w2=0.1 * jax.random.normal(ks[6], (Cout, Cout, 3, 3), jnp.float32),
        b2=0.1 * jax.random.normal(ks[7], (Cout,), jnp.float32),
        g2=1.0 + 0.1 * jax.random.normal(ks[8], (Cout,), jnp.float32),
        be2=0.1 * jax.random.normal(ks[9], (Cout,), jnp.float32),
        m2=0.05 * jax.random.normal(ks[10], (Cout,), jnp.float32),
        v2=1.0 + 0.1 * jax.random.uniform(ks[11], (Cout,), jnp.float32),
    )

    x = jax.random.normal(jax.random.PRNGKey(42), (N, Cin, H, W), jnp.float32)

    fwd = jax.jit(double_conv_block)
    out = jax.block_until_ready(fwd(x, params))
    ref = jax.block_until_ready(reference(x, params))

    assert out.shape == (N, Cout, H // 2, W // 2), out.shape
    max_err = float(jnp.max(jnp.abs(out - ref)))
    # bf16 matmul operands (f32 accumulation) -> loosened tolerance
    assert max_err < 5e-2, f"max err {max_err}"

    print("KERNEL_OK")
</pallas_src>

<mosaic_0001>
module attributes {stable_mosaic.version = 11 : i64} {
  func.func @_double_conv_kernel(%arg0: i32, %arg1: memref<1x4x9x9x128xbf16, #tpu.memory_space<vmem>>, %arg2: memref<9x128x128xbf16, #tpu.memory_space<vmem>>, %arg3: memref<1x128xf32, #tpu.memory_space<vmem>>, %arg4: memref<9x128x128xbf16, #tpu.memory_space<vmem>>, %arg5: memref<1x128xf32, #tpu.memory_space<vmem>>, %arg6: memref<1x8x8x128xf32, #tpu.memory_space<vmem>>, %arg7: memref<10x10x128xf32, #tpu.memory_space<vmem>>) attributes {dimension_semantics = [#tpu.dimension_semantics<parallel>], iteration_bounds = array<i64: 2>, scalar_prefetch = 0 : i64, scratch_operands = 1 : i64, tpu.core_type = #tpu.core_type<tc>, window_params = [{transform_indices = @transform_0, window_bounds = array<i64: 1, 4, 9, 9, 128>}, {pipeline_mode = #tpu.pipeline_mode<synchronous>, transform_indices = @transform_1, window_bounds = array<i64: 9, 128, 128>}, {pipeline_mode = #tpu.pipeline_mode<synchronous>, transform_indices = @transform_2, window_bounds = array<i64: 1, 128>}, {pipeline_mode = #tpu.pipeline_mode<synchronous>, transform_indices = @transform_3, window_bounds = array<i64: 9, 128, 128>}, {pipeline_mode = #tpu.pipeline_mode<synchronous>, transform_indices = @transform_4, window_bounds = array<i64: 1, 128>}, {transform_indices = @transform_5, window_bounds = array<i64: 1, 8, 8, 128>}]} {
    %cst = arith.constant 0.000000e+00 : f32
    %0 = vector.broadcast %cst : f32 to vector<64x128xf32>
    %c0 = arith.constant 0 : index
    %c0_0 = arith.constant 0 : index
    %c0_1 = arith.constant 0 : index
    %c0_2 = arith.constant 0 : index
    %c0_3 = arith.constant 0 : index
    %1 = vector.load %arg1[%c0, %c0_0, %c0_1, %c0_2, %c0_3] : memref<1x4x9x9x128xbf16, #tpu.memory_space<vmem>>, vector<1x1x8x8x128xbf16>
    %2 = vector.shape_cast %1 : vector<1x1x8x8x128xbf16> to vector<8x8x128xbf16>
    %3 = vector.shape_cast %2 : vector<8x8x128xbf16> to vector<64x128xbf16>
    %c0_4 = arith.constant 0 : index
    %c0_5 = arith.constant 0 : index
    %c0_6 = arith.constant 0 : index
    %4 = vector.load %arg2[%c0_4, %c0_5, %c0_6] : memref<9x128x128xbf16, #tpu.memory_space<vmem>>, vector<1x128x128xbf16>
    %5 = vector.shape_cast %4 : vector<1x128x128xbf16> to vector<128x128xbf16>
    %cst_7 = arith.constant dense<0.000000e+00> : vector<64x128xf32>
    %6 = tpu.matmul %3, %5, %cst_7 {dimension_numbers = #tpu.dot_dimension_numbers<[1], [0], [0], [1], [0, 0, 1, 1], [], []>} : vector<64x128xbf16>, vector<128x128xbf16>, vector<64x128xf32> -> vector<64x128xf32>
    %7 = arith.addf %0, %6 : vector<64x128xf32>
    %c0_8 = arith.constant 0 : index
    %c1 = arith.constant 1 : index
    %c0_9 = arith.constant 0 : index
    %c0_10 = arith.constant 0 : index
    %c0_11 = arith.constant 0 : index
    %8 = vector.load %arg1[%c0_8, %c1, %c0_9, %c0_10, %c0_11] : memref<1x4x9x9x128xbf16, #tpu.memory_space<vmem>>, vector<1x1x8x8x128xbf16>
    %9 = vector.shape_cast %8 : vector<1x1x8x8x128xbf16> to vector<8x8x128xbf16>
    %10 = vector.shape_cast %9 : vector<8x8x128xbf16> to vector<64x128xbf16>
    %c1_12 = arith.constant 1 : index
    %c0_13 = arith.constant 0 : index
    %c0_14 = arith.constant 0 : index
    %11 = vector.load %arg2[%c1_12, %c0_13, %c0_14] : memref<9x128x128xbf16, #tpu.memory_space<vmem>>, vector<1x128x128xbf16>
    %12 = vector.shape_cast %11 : vector<1x128x128xbf16> to vector<128x128xbf16>
    %cst_15 = arith.constant dense<0.000000e+00> : vector<64x128xf32>
    %13 = tpu.matmul %10, %12, %cst_15 {dimension_numbers = #tpu.dot_dimension_numbers<[1], [0], [0], [1], [0, 0, 1, 1], [], []>} : vector<64x128xbf16>, vector<128x128xbf16>, vector<64x128xf32> -> vector<64x128xf32>
    %14 = arith.addf %7, %13 : vector<64x128xf32>
    %c0_16 = arith.constant 0 : index
    %c0_17 = arith.constant 0 : index
    %c0_18 = arith.constant 0 : index
    %c1_19 = arith.constant 1 : index
    %c0_20 = arith.constant 0 : index
    %15 = vector.load %arg1[%c0_16, %c0_17, %c0_18, %c1_19, %c0_20] : memref<1x4x9x9x128xbf16, #tpu.memory_space<vmem>>, vector<1x1x8x8x128xbf16>
    %16 = vector.shape_cast %15 : vector<1x1x8x8x128xbf16> to vector<8x8x128xbf16>
    %17 = vector.shape_cast %16 : vector<8x8x128xbf16> to vector<64x128xbf16>
    %c2 = arith.constant 2 : index
    %c0_21 = arith.constant 0 : index
    %c0_22 = arith.constant 0 : index
    %18 = vector.load %arg2[%c2, %c0_21, %c0_22] : memref<9x128x128xbf16, #tpu.memory_space<vmem>>, vector<1x128x128xbf16>
    %19 = vector.shape_cast %18 : vector<1x128x128xbf16> to vector<128x128xbf16>
    %cst_23 = arith.constant dense<0.000000e+00> : vector<64x128xf32>
    %20 = tpu.matmul %17, %19, %cst_23 {dimension_numbers = #tpu.dot_dimension_numbers<[1], [0], [0], [1], [0, 0, 1, 1], [], []>} : vector<64x128xbf16>, vector<128x128xbf16>, vector<64x128xf32> -> vector<64x128xf32>
    %21 = arith.addf %14, %20 : vector<64x128xf32>
    %c0_24 = arith.constant 0 : index
    %c2_25 = arith.constant 2 : index
    %c0_26 = arith.constant 0 : index
    %c0_27 = arith.constant 0 : index
    %c0_28 = arith.constant 0 : index
    %22 = vector.load %arg1[%c0_24, %c2_25, %c0_26, %c0_27, %c0_28] : memref<1x4x9x9x128xbf16, #tpu.memory_space<vmem>>, vector<1x1x8x8x128xbf16>
    %23 = vector.shape_cast %22 : vector<1x1x8x8x128xbf16> to vector<8x8x128xbf16>
    %24 = vector.shape_cast %23 : vector<8x8x128xbf16> to vector<64x128xbf16>
    %c3 = arith.constant 3 : index
    %c0_29 = arith.constant 0 : index
    %c0_30 = arith.constant 0 : index
    %25 = vector.load %arg2[%c3, %c0_29, %c0_30] : memref<9x128x128xbf16, #tpu.memory_space<vmem>>, vector<1x128x128xbf16>
    %26 = vector.shape_cast %25 : vector<1x128x128xbf16> to vector<128x128xbf16>
    %cst_31 = arith.constant dense<0.000000e+00> : vector<64x128xf32>
    %27 = tpu.matmul %24, %26, %cst_31 {dimension_numbers = #tpu.dot_dimension_numbers<[1], [0], [0], [1], [0, 0, 1, 1], [], []>} : vector<64x128xbf16>, vector<128x128xbf16>, vector<64x128xf32> -> vector<64x128xf32>
    %28 = arith.addf %21, %27 : vector<64x128xf32>
    %c0_32 = arith.constant 0 : index
    %c3_33 = arith.constant 3 : index
    %c0_34 = arith.constant 0 : index
    %c0_35 = arith.constant 0 : index
    %c0_36 = arith.constant 0 : index
    %29 = vector.load %arg1[%c0_32, %c3_33, %c0_34, %c0_35, %c0_36] : memref<1x4x9x9x128xbf16, #tpu.memory_space<vmem>>, vector<1x1x8x8x128xbf16>
    %30 = vector.shape_cast %29 : vector<1x1x8x8x128xbf16> to vector<8x8x128xbf16>
    %31 = vector.shape_cast %30 : vector<8x8x128xbf16> to vector<64x128xbf16>
    %c4 = arith.constant 4 : index
    %c0_37 = arith.constant 0 : index
    %c0_38 = arith.constant 0 : index
    %32 = vector.load %arg2[%c4, %c0_37, %c0_38] : memref<9x128x128xbf16, #tpu.memory_space<vmem>>, vector<1x128x128xbf16>
    %33 = vector.shape_cast %32 : vector<1x128x128xbf16> to vector<128x128xbf16>
    %cst_39 = arith.constant dense<0.000000e+00> : vector<64x128xf32>
    %34 = tpu.matmul %31, %33, %cst_39 {dimension_numbers = #tpu.dot_dimension_numbers<[1], [0], [0], [1], [0, 0, 1, 1], [], []>} : vector<64x128xbf16>, vector<128x128xbf16>, vector<64x128xf32> -> vector<64x128xf32>
    %35 = arith.addf %28, %34 : vector<64x128xf32>
    %c0_40 = arith.constant 0 : index
    %c2_41 = arith.constant 2 : index
    %c0_42 = arith.constant 0 : index
    %c1_43 = arith.constant 1 : index
    %c0_44 = arith.constant 0 : index
    %36 = vector.load %arg1[%c0_40, %c2_41, %c0_42, %c1_43, %c0_44] : memref<1x4x9x9x128xbf16, #tpu.memory_space<vmem>>, vector<1x1x8x8x128xbf16>
    %37 = vector.shape_cast %36 : vector<1x1x8x8x128xbf16> to vector<8x8x128xbf16>
    %38 = vector.shape_cast %37 : vector<8x8x128xbf16> to vector<64x128xbf16>
    %c5 = arith.constant 5 : index
    %c0_45 = arith.constant 0 : index
    %c0_46 = arith.constant 0 : index
    %39 = vector.load %arg2[%c5, %c0_45, %c0_46] : memref<9x128x128xbf16, #tpu.memory_space<vmem>>, vector<1x128x128xbf16>
    %40 = vector.shape_cast %39 : vector<1x128x128xbf16> to vector<128x128xbf16>
    %cst_47 = arith.constant dense<0.000000e+00> : vector<64x128xf32>
    %41 = tpu.matmul %38, %40, %cst_47 {dimension_numbers = #tpu.dot_dimension_numbers<[1], [0], [0], [1], [0, 0, 1, 1], [], []>} : vector<64x128xbf16>, vector<128x128xbf16>, vector<64x128xf32> -> vector<64x128xf32>
    %42 = arith.addf %35, %41 : vector<64x128xf32>
    %c0_48 = arith.constant 0 : index
    %c0_49 = arith.constant 0 : index
    %c1_50 = arith.constant 1 : index
    %c0_51 = arith.constant 0 : index
    %c0_52 = arith.constant 0 : index
    %43 = vector.load %arg1[%c0_48, %c0_49, %c1_50, %c0_51, %c0_52] : memref<1x4x9x9x128xbf16, #tpu.memory_space<vmem>>, vector<1x1x8x8x128xbf16>
    %44 = vector.shape_cast %43 : vector<1x1x8x8x128xbf16> to vector<8x8x128xbf16>
    %45 = vector.shape_cast %44 : vector<8x8x128xbf16> to vector<64x128xbf16>
    %c6 = arith.constant 6 : index
    %c0_53 = arith.constant 0 : index
    %c0_54 = arith.constant 0 : index
    %46 = vector.load %arg2[%c6, %c0_53, %c0_54] : memref<9x128x128xbf16, #tpu.memory_space<vmem>>, vector<1x128x128xbf16>
    %47 = vector.shape_cast %46 : vector<1x128x128xbf16> to vector<128x128xbf16>
    %cst_55 = arith.constant dense<0.000000e+00> : vector<64x128xf32>
    %48 = tpu.matmul %45, %47, %cst_55 {dimension_numbers = #tpu.dot_dimension_numbers<[1], [0], [0], [1], [0, 0, 1, 1], [], []>} : vector<64x128xbf16>, vector<128x128xbf16>, vector<64x128xf32> -> vector<64x128xf32>
    %49 = arith.addf %42, %48 : vector<64x128xf32>
    %c0_56 = arith.constant 0 : index
    %c1_57 = arith.constant 1 : index
    %c1_58 = arith.constant 1 : index
    %c0_59 = arith.constant 0 : index
    %c0_60 = arith.constant 0 : index
    %50 = vector.load %arg1[%c0_56, %c1_57, %c1_58, %c0_59, %c0_60] : memref<1x4x9x9x128xbf16, #tpu.memory_space<vmem>>, vector<1x1x8x8x128xbf16>
    %51 = vector.shape_cast %50 : vector<1x1x8x8x128xbf16> to vector<8x8x128xbf16>
    %52 = vector.shape_cast %51 : vector<8x8x128xbf16> to vector<64x128xbf16>
    %c7 = arith.constant 7 : index
    %c0_61 = arith.constant 0 : index
    %c0_62 = arith.constant 0 : index
    %53 = vector.load %arg2[%c7, %c0_61, %c0_62] : memref<9x128x128xbf16, #tpu.memory_space<vmem>>, vector<1x128x128xbf16>
    %54 = vector.shape_cast %53 : vector<1x128x128xbf16> to vector<128x128xbf16>
    %cst_63 = arith.constant dense<0.000000e+00> : vector<64x128xf32>
    %55 = tpu.matmul %52, %54, %cst_63 {dimension_numbers = #tpu.dot_dimension_numbers<[1], [0], [0], [1], [0, 0, 1, 1], [], []>} : vector<64x128xbf16>, vector<128x128xbf16>, vector<64x128xf32> -> vector<64x128xf32>
    %56 = arith.addf %49, %55 : vector<64x128xf32>
    %c0_64 = arith.constant 0 : index
    %c0_65 = arith.constant 0 : index
    %c1_66 = arith.constant 1 : index
    %c1_67 = arith.constant 1 : index
    %c0_68 = arith.constant 0 : index
    %57 = vector.load %arg1[%c0_64, %c0_65, %c1_66, %c1_67, %c0_68] : memref<1x4x9x9x128xbf16, #tpu.memory_space<vmem>>, vector<1x1x8x8x128xbf16>
    %58 = vector.shape_cast %57 : vector<1x1x8x8x128xbf16> to vector<8x8x128xbf16>
    %59 = vector.shape_cast %58 : vector<8x8x128xbf16> to vector<64x128xbf16>
    %c8 = arith.constant 8 : index
    %c0_69 = arith.constant 0 : index
    %c0_70 = arith.constant 0 : index
    %60 = vector.load %arg2[%c8, %c0_69, %c0_70] : memref<9x128x128xbf16, #tpu.memory_space<vmem>>, vector<1x128x128xbf16>
    %61 = vector.shape_cast %60 : vector<1x128x128xbf16> to vector<128x128xbf16>
    %cst_71 = arith.constant dense<0.000000e+00> : vector<64x128xf32>
    %62 = tpu.matmul %59, %61, %cst_71 {dimension_numbers = #tpu.dot_dimension_numbers<[1], [0], [0], [1], [0, 0, 1, 1], [], []>} : vector<64x128xbf16>, vector<128x128xbf16>, vector<64x128xf32> -> vector<64x128xf32>
    %63 = arith.addf %56, %62 : vector<64x128xf32>
    %c0_72 = arith.constant 0 : index
    %c0_73 = arith.constant 0 : index
    %64 = vector.load %arg3[%c0_72, %c0_73] : memref<1x128xf32, #tpu.memory_space<vmem>>, vector<1x128xf32>
    %65 = vector.broadcast %64 : vector<1x128xf32> to vector<64x128xf32>
    %66 = arith.addf %63, %65 : vector<64x128xf32>
    %cst_74 = arith.constant 0.000000e+00 : f32
    %cst_75 = arith.constant 6.000000e+00 : f32
    %67 = vector.broadcast %cst_74 : f32 to vector<64x128xf32>
    %68 = arith.maximumf %67, %66 : vector<64x128xf32>
    %69 = vector.broadcast %cst_75 : f32 to vector<64x128xf32>
    %70 = arith.minimumf %69, %68 : vector<64x128xf32>
    %cst_76 = arith.constant 0.000000e+00 : f32
    %71 = vector.broadcast %cst_76 : f32 to vector<10x10x128xf32>
    %c0_77 = arith.constant 0 : index
    %c0_78 = arith.constant 0 : index
    %c0_79 = arith.constant 0 : index
    %72 = vector.load %arg7[%c0_77, %c0_78, %c0_79] : memref<10x10x128xf32, #tpu.memory_space<vmem>>, vector<10x10x128xf32>
    tpu.vector_store %arg7[%c0_77, %c0_78, %c0_79], %71 {strides = array<i32>} : memref<10x10x128xf32, #tpu.memory_space<vmem>>, vector<10x10x128xf32>,
    %73 = vector.shape_cast %70 : vector<64x128xf32> to vector<8x8x128xf32>
    %c1_80 = arith.constant 1 : index
    %c1_81 = arith.constant 1 : index
    %c0_82 = arith.constant 0 : index
    %74 = vector.load %arg7[%c1_80, %c1_81, %c0_82] : memref<10x10x128xf32, #tpu.memory_space<vmem>>, vector<8x8x128xf32>
    tpu.vector_store %arg7[%c1_80, %c1_81, %c0_82], %73 {strides = array<i32>} : memref<10x10x128xf32, #tpu.memory_space<vmem>>, vector<8x8x128xf32>,
    %cst_83 = arith.constant 0.000000e+00 : f32
    %75 = vector.broadcast %cst_83 : f32 to vector<64x128xf32>
    %c0_84 = arith.constant 0 : index
    %c0_85 = arith.constant 0 : index
    %c0_86 = arith.constant 0 : index
    %76 = vector.load %arg7[%c0_84, %c0_85, %c0_86] : memref<10x10x128xf32, #tpu.memory_space<vmem>>, vector<8x8x128xf32>
    %77 = vector.shape_cast %76 : vector<8x8x128xf32> to vector<64x128xf32>
    %78 = arith.truncf %77 : vector<64x128xf32> to vector<64x128xbf16>
    %c0_87 = arith.constant 0 : index
    %c0_88 = arith.constant 0 : index
    %c0_89 = arith.constant 0 : index
    %79 = vector.load %arg4[%c0_87, %c0_88, %c0_89] : memref<9x128x128xbf16, #tpu.memory_space<vmem>>, vector<1x128x128xbf16>
    %80 = vector.shape_cast %79 : vector<1x128x128xbf16> to vector<128x128xbf16>
    %cst_90 = arith.constant dense<0.000000e+00> : vector<64x128xf32>
    %81 = tpu.matmul %78, %80, %cst_90 {dimension_numbers = #tpu.dot_dimension_numbers<[1], [0], [0], [1], [0, 0, 1, 1], [], []>} : vector<64x128xbf16>, vector<128x128xbf16>, vector<64x128xf32> -> vector<64x128xf32>
    %82 = arith.addf %75, %81 : vector<64x128xf32>
    %c0_91 = arith.constant 0 : index
    %c1_92 = arith.constant 1 : index
    %c0_93 = arith.constant 0 : index
    %83 = vector.load %arg7[%c0_91, %c1_92, %c0_93] : memref<10x10x128xf32, #tpu.memory_space<vmem>>, vector<8x8x128xf32>
    %84 = vector.shape_cast %83 : vector<8x8x128xf32> to vector<64x128xf32>
    %85 = arith.truncf %84 : vector<64x128xf32> to vector<64x128xbf16>
    %c1_94 = arith.constant 1 : index
    %c0_95 = arith.constant 0 : index
    %c0_96 = arith.constant 0 : index
    %86 = vector.load %arg4[%c1_94, %c0_95, %c0_96] : memref<9x128x128xbf16, #tpu.memory_space<vmem>>, vector<1x128x128xbf16>
    %87 = vector.shape_cast %86 : vector<1x128x128xbf16> to vector<128x128xbf16>
    %cst_97 = arith.constant dense<0.000000e+00> : vector<64x128xf32>
    %88 = tpu.matmul %85, %87, %cst_97 {dimension_numbers = #tpu.dot_dimension_numbers<[1], [0], [0], [1], [0, 0, 1, 1], [], []>} : vector<64x128xbf16>, vector<128x128xbf16>, vector<64x128xf32> -> vector<64x128xf32>
    %89 = arith.addf %82, %88 : vector<64x128xf32>
    %c0_98 = arith.constant 0 : index
    %c2_99 = arith.constant 2 : index
    %c0_100 = arith.constant 0 : index
    %90 = vector.load %arg7[%c0_98, %c2_99, %c0_100] : memref<10x10x128xf32, #tpu.memory_space<vmem>>, vector<8x8x128xf32>
    %91 = vector.shape_cast %90 : vector<8x8x128xf32> to vector<64x128xf32>
    %92 = arith.truncf %91 : vector<64x128xf32> to vector<64x128xbf16>
    %c2_101 = arith.constant 2 : index
    %c0_102 = arith.constant 0 : index
    %c0_103 = arith.constant 0 : index
    %93 = vector.load %arg4[%c2_101, %c0_102, %c0_103] : memref<9x128x128xbf16, #tpu.memory_space<vmem>>, vector<1x128x128xbf16>
    %94 = vector.shape_cast %93 : vector<1x128x128xbf16> to vector<128x128xbf16>
    %cst_104 = arith.constant dense<0.000000e+00> : vector<64x128xf32>
    %95 = tpu.matmul %92, %94, %cst_104 {dimension_numbers = #tpu.dot_dimension_numbers<[1], [0], [0], [1], [0, 0, 1, 1], [], []>} : vector<64x128xbf16>, vector<128x128xbf16>, vector<64x128xf32> -> vector<64x128xf32>
    %96 = arith.addf %89, %95 : vector<64x128xf32>
    %c1_105 = arith.constant 1 : index
    %c0_106 = arith.constant 0 : index
    %c0_107 = arith.constant 0 : index
    %97 = vector.load %arg7[%c1_105, %c0_106, %c0_107] : memref<10x10x128xf32, #tpu.memory_space<vmem>>, vector<8x8x128xf32>
    %98 = vector.shape_cast %97 : vector<8x8x128xf32> to vector<64x128xf32>
    %99 = arith.truncf %98 : vector<64x128xf32> to vector<64x128xbf16>
    %c3_108 = arith.constant 3 : index
    %c0_109 = arith.constant 0 : index
    %c0_110 = arith.constant 0 : index
    %100 = vector.load %arg4[%c3_108, %c0_109, %c0_110] : memref<9x128x128xbf16, #tpu.memory_space<vmem>>, vector<1x128x128xbf16>
    %101 = vector.shape_cast %100 : vector<1x128x128xbf16> to vector<128x128xbf16>
    %cst_111 = arith.constant dense<0.000000e+00> : vector<64x128xf32>
    %102 = tpu.matmul %99, %101, %cst_111 {dimension_numbers = #tpu.dot_dimension_numbers<[1], [0], [0], [1], [0, 0, 1, 1], [], []>} : vector<64x128xbf16>, vector<128x128xbf16>, vector<64x128xf32> -> vector<64x128xf32>
    %103 = arith.addf %96, %102 : vector<64x128xf32>
    %c1_112 = arith.constant 1 : index
    %c1_113 = arith.constant 1 : index
    %c0_114 = arith.constant 0 : index
    %104 = vector.load %arg7[%c1_112, %c1_113, %c0_114] : memref<10x10x128xf32, #tpu.memory_space<vmem>>, vector<8x8x128xf32>
    %105 = vector.shape_cast %104 : vector<8x8x128xf32> to vector<64x128xf32>
    %106 = arith.truncf %105 : vector<64x128xf32> to vector<64x128xbf16>
    %c4_115 = arith.constant 4 : index
    %c0_116 = arith.constant 0 : index
    %c0_117 = arith.constant 0 : index
    %107 = vector.load %arg4[%c4_115, %c0_116, %c0_117] : memref<9x128x128xbf16, #tpu.memory_space<vmem>>, vector<1x128x128xbf16>
    %108 = vector.shape_cast %107 : vector<1x128x128xbf16> to vector<128x128xbf16>
    %cst_118 = arith.constant dense<0.000000e+00> : vector<64x128xf32>
    %109 = tpu.matmul %106, %108, %cst_118 {dimension_numbers = #tpu.dot_dimension_numbers<[1], [0], [0], [1], [0, 0, 1, 1], [], []>} : vector<64x128xbf16>, vector<128x128xbf16>, vector<64x128xf32> -> vector<64x128xf32>
    %110 = arith.addf %103, %109 : vector<64x128xf32>
    %c1_119 = arith.constant 1 : index
    %c2_120 = arith.constant 2 : index
    %c0_121 = arith.constant 0 : index
    %111 = vector.load %arg7[%c1_119, %c2_120, %c0_121] : memref<10x10x128xf32, #tpu.memory_space<vmem>>, vector<8x8x128xf32>
    %112 = vector.shape_cast %111 : vector<8x8x128xf32> to vector<64x128xf32>
    %113 = arith.truncf %112 : vector<64x128xf32> to vector<64x128xbf16>
    %c5_122 = arith.constant 5 : index
    %c0_123 = arith.constant 0 : index
    %c0_124 = arith.constant 0 : index
    %114 = vector.load %arg4[%c5_122, %c0_123, %c0_124] : memref<9x128x128xbf16, #tpu.memory_space<vmem>>, vector<1x128x128xbf16>
    %115 = vector.shape_cast %114 : vector<1x128x128xbf16> to vector<128x128xbf16>
    %cst_125 = arith.constant dense<0.000000e+00> : vector<64x128xf32>
    %116 = tpu.matmul %113, %115, %cst_125 {dimension_numbers = #tpu.dot_dimension_numbers<[1], [0], [0], [1], [0, 0, 1, 1], [], []>} : vector<64x128xbf16>, vector<128x128xbf16>, vector<64x128xf32> -> vector<64x128xf32>
    %117 = arith.addf %110, %116 : vector<64x128xf32>
    %c2_126 = arith.constant 2 : index
    %c0_127 = arith.constant 0 : index
    %c0_128 = arith.constant 0 : index
    %118 = vector.load %arg7[%c2_126, %c0_127, %c0_128] : memref<10x10x128xf32, #tpu.memory_space<vmem>>, vector<8x8x128xf32>
    %119 = vector.shape_cast %118 : vector<8x8x128xf32> to vector<64x128xf32>
    %120 = arith.truncf %119 : vector<64x128xf32> to vector<64x128xbf16>
    %c6_129 = arith.constant 6 : index
    %c0_130 = arith.constant 0 : index
    %c0_131 = arith.constant 0 : index
    %121 = vector.load %arg4[%c6_129, %c0_130, %c0_131] : memref<9x128x128xbf16, #tpu.memory_space<vmem>>, vector<1x128x128xbf16>
    %122 = vector.shape_cast %121 : vector<1x128x128xbf16> to vector<128x128xbf16>
    %cst_132 = arith.constant dense<0.000000e+00> : vector<64x128xf32>
    %123 = tpu.matmul %120, %122, %cst_132 {dimension_numbers = #tpu.dot_dimension_numbers<[1], [0], [0], [1], [0, 0, 1, 1], [], []>} : vector<64x128xbf16>, vector<128x128xbf16>, vector<64x128xf32> -> vector<64x128xf32>
    %124 = arith.addf %117, %123 : vector<64x128xf32>
    %c2_133 = arith.constant 2 : index
    %c1_134 = arith.constant 1 : index
    %c0_135 = arith.constant 0 : index
    %125 = vector.load %arg7[%c2_133, %c1_134, %c0_135] : memref<10x10x128xf32, #tpu.memory_space<vmem>>, vector<8x8x128xf32>
    %126 = vector.shape_cast %125 : vector<8x8x128xf32> to vector<64x128xf32>
    %127 = arith.truncf %126 : vector<64x128xf32> to vector<64x128xbf16>
    %c7_136 = arith.constant 7 : index
    %c0_137 = arith.constant 0 : index
    %c0_138 = arith.constant 0 : index
    %128 = vector.load %arg4[%c7_136, %c0_137, %c0_138] : memref<9x128x128xbf16, #tpu.memory_space<vmem>>, vector<1x128x128xbf16>
    %129 = vector.shape_cast %128 : vector<1x128x128xbf16> to vector<128x128xbf16>
    %cst_139 = arith.constant dense<0.000000e+00> : vector<64x128xf32>
    %130 = tpu.matmul %127, %129, %cst_139 {dimension_numbers = #tpu.dot_dimension_numbers<[1], [0], [0], [1], [0, 0, 1, 1], [], []>} : vector<64x128xbf16>, vector<128x128xbf16>, vector<64x128xf32> -> vector<64x128xf32>
    %131 = arith.addf %124, %130 : vector<64x128xf32>
    %c2_140 = arith.constant 2 : index
    %c2_141 = arith.constant 2 : index
    %c0_142 = arith.constant 0 : index
    %132 = vector.load %arg7[%c2_140, %c2_141, %c0_142] : memref<10x10x128xf32, #tpu.memory_space<vmem>>, vector<8x8x128xf32>
    %133 = vector.shape_cast %132 : vector<8x8x128xf32> to vector<64x128xf32>
    %134 = arith.truncf %133 : vector<64x128xf32> to vector<64x128xbf16>
    %c8_143 = arith.constant 8 : index
    %c0_144 = arith.constant 0 : index
    %c0_145 = arith.constant 0 : index
    %135 = vector.load %arg4[%c8_143, %c0_144, %c0_145] : memref<9x128x128xbf16, #tpu.memory_space<vmem>>, vector<1x128x128xbf16>
    %136 = vector.shape_cast %135 : vector<1x128x128xbf16> to vector<128x128xbf16>
    %cst_146 = arith.constant dense<0.000000e+00> : vector<64x128xf32>
    %137 = tpu.matmul %134, %136, %cst_146 {dimension_numbers = #tpu.dot_dimension_numbers<[1], [0], [0], [1], [0, 0, 1, 1], [], []>} : vector<64x128xbf16>, vector<128x128xbf16>, vector<64x128xf32> -> vector<64x128xf32>
    %138 = arith.addf %131, %137 : vector<64x128xf32>
    %c0_147 = arith.constant 0 : index
    %c0_148 = arith.constant 0 : index
    %139 = vector.load %arg5[%c0_147, %c0_148] : memref<1x128xf32, #tpu.memory_space<vmem>>, vector<1x128xf32>
    %140 = vector.broadcast %139 : vector<1x128xf32> to vector<64x128xf32>
    %141 = arith.addf %138, %140 : vector<64x128xf32>
    %cst_149 = arith.constant 0.000000e+00 : f32
    %cst_150 = arith.constant 6.000000e+00 : f32
    %142 = vector.broadcast %cst_149 : f32 to vector<64x128xf32>
    %143 = arith.maximumf %142, %141 : vector<64x128xf32>
    %144 = vector.broadcast %cst_150 : f32 to vector<64x128xf32>
    %145 = arith.minimumf %144, %143 : vector<64x128xf32>
    %146 = vector.shape_cast %145 : vector<64x128xf32> to vector<8x8x128xf32>
    %c0_151 = arith.constant 0 : index
    %c0_152 = arith.constant 0 : index
    %c0_153 = arith.constant 0 : index
    %c0_154 = arith.constant 0 : index
    %147 = vector.load %arg6[%c0_151, %c0_152, %c0_153, %c0_154] : memref<1x8x8x128xf32, #tpu.memory_space<vmem>>, vector<1x8x8x128xf32>
    %148 = vector.shape_cast %147 : vector<1x8x8x128xf32> to vector<8x8x128xf32>
    %149 = vector.shape_cast %146 : vector<8x8x128xf32> to vector<1x8x8x128xf32>
    tpu.vector_store %arg6[%c0_151, %c0_152, %c0_153, %c0_154], %149 {strides = array<i32>} : memref<1x8x8x128xf32, #tpu.memory_space<vmem>>, vector<1x8x8x128xf32>,
    return
  }
  func.func @transform_0(%arg0: i32) -> (i32, i32, i32, i32, i32) {
    %c0_i32 = arith.constant 0 : i32
    %c0_i32_0 = arith.constant 0 : i32
    %c0_i32_1 = arith.constant 0 : i32
    %c0_i32_2 = arith.constant 0 : i32
    %c0_i32_3 = arith.constant 0 : i32
    return %arg0, %c0_i32, %c0_i32_0, %c0_i32_1, %c0_i32_2 : i32, i32, i32, i32, i32
  }
  func.func @transform_1(%arg0: i32) -> (i32, i32, i32) {
    %c0_i32 = arith.constant 0 : i32
    %c0_i32_0 = arith.constant 0 : i32
    %c0_i32_1 = arith.constant 0 : i32
    %c0_i32_2 = arith.constant 0 : i32
    return %c0_i32, %c0_i32_0, %c0_i32_1 : i32, i32, i32
  }
  func.func @transform_2(%arg0: i32) -> (i32, i32) {
    %c0_i32 = arith.constant 0 : i32
    %c0_i32_0 = arith.constant 0 : i32
    %c0_i32_1 = arith.constant 0 : i32
    return %c0_i32, %c0_i32_0 : i32, i32
  }
  func.func @transform_3(%arg0: i32) -> (i32, i32, i32) {
    %c0_i32 = arith.constant 0 : i32
    %c0_i32_0 = arith.constant 0 : i32
    %c0_i32_1 = arith.constant 0 : i32
    %c0_i32_2 = arith.constant 0 : i32
    return %c0_i32, %c0_i32_0, %c0_i32_1 : i32, i32, i32
  }
  func.func @transform_4(%arg0: i32) -> (i32, i32) {
    %c0_i32 = arith.constant 0 : i32
    %c0_i32_0 = arith.constant 0 : i32
    %c0_i32_1 = arith.constant 0 : i32
    return %c0_i32, %c0_i32_0 : i32, i32
  }
  func.func @transform_5(%arg0: i32) -> (i32, i32, i32, i32) {
    %c0_i32 = arith.constant 0 : i32
    %c0_i32_0 = arith.constant 0 : i32
    %c0_i32_1 = arith.constant 0 : i32
    %c0_i32_2 = arith.constant 0 : i32
    return %arg0, %c0_i32, %c0_i32_0, %c0_i32_1 : i32, i32, i32, i32
  }
}

</mosaic_0001>

<llo_original>
// kernel: double_conv_block.1
$region0: #{double_conv_block.1}
  #allocation0 [shape = 'u32[]', space=smem, size = 0x4, offset = 0x4, fixed_abs, tag = 'smem constant byte address 0x4 - core index']
  #allocation1 [shape = 'u32[144,128]{1,0:T(1,128)}', space=vmem, size = 0x12000, scoped, tag = 'internal scratch']
  #allocation2 [shape = 'f32[10,10,128]{2,1,0:T(8,128)}', space=vmem, size = 0x14000, scoped, tag = 'scratch operand']
  %s0 = inlined_call_operand.vmem [shape: bf16[2,4,9,9,128], index: 0, kind: input, shape index: {}]
  %s1 = inlined_call_operand.vmem [shape: bf16[9,128,128], index: 1, kind: input, shape index: {}]
  %s2 = inlined_call_operand.vmem [shape: f32[1,128], index: 2, kind: input, shape index: {}]
  %s3 = inlined_call_operand.vmem [shape: bf16[9,128,128], index: 3, kind: input, shape index: {}]
  %s4 = inlined_call_operand.vmem [shape: f32[1,128], index: 4, kind: input, shape index: {}]
  %s5 = inlined_call_operand.vmem [shape: f32[2,8,8,128], index: 5, kind: output, shape index: {}]
  %s6 = sld [smem:[#allocation0]]
  $region53: #{double_conv_block.1} parent=0
    _
  %s8 = ssub.s32 1, %s6
  %s9 = scalar_select 0, %s8, %s6
  loop: start=0, step=1, limit=4
  $region2: #{double_conv_block.1} parent=0 // loop_pre_header
    _
  $region3: #{double_conv_block.1} parent=0 // loop_header
    %s11 = sphi 0, %s15
    %p12 = scmp.ge.s32.totalorder %s11, 4
    %s21 = sphi 0, %s23
    %s24 = sphi 0, %s21
    %s25 = sphi 0, %s24
    %s41 = sphi 0, %s25
    %s45 = sphi 0, %s45
    %s47 = sphi 0, %s45
    %s48 = sphi 0, %s47
    %s62 = sphi 0, %s48
    %s66 = sphi 0, %s66
    %s68 = sphi 0, %s66
    %s69 = sphi 0, %s68
    %s83 = sphi 0, %s69
    %s87 = sphi 0, %s87
    %s89 = sphi 0, %s87
    %s90 = sphi 0, %s89
    %s104 = sphi 0, %s90
    %s108 = sphi 0, %s108
    %s110 = sphi 0, %s108
    %s111 = sphi 0, %s110
    %s125 = sphi 0, %s111
    %s131 = sphi 0, %s133
    %s134 = sphi 0, %s131
    %s135 = sphi 0, %s134
    %s151 = sphi 0, %s135
  $region4: #{double_conv_block.1} parent=0 // loop_header_branch
    %14 = sbr.rel (%p12) target = $region8
  $region5: #{double_conv_block.1} parent=0 // loop_body
    %s16 = ssub.s32 %s11, 1
    %s17 = ssub.s32 %s11, 2
    %s18 = sadd.s32 %s11, 1
    %s19 = ssub.s32 %s11, %s18
    %p20 = scmp.eq.s32.totalorder %s19, 0
    %s22 = sadd.s32 %s21, 1
    %s23 = scalar_select %p20, %s21, %s22
    %p26 = pneg %p20
    %p27 = scmp.eq.s32.totalorder %s11, 1
    %p28 = por %p26, %p27
    %p29 = scmp.ne.s32.totalorder %s21, %s24
    %p30 = scmp.eq.s32.totalorder %s11, 0
    %p31 = por %p29, %p30
    %p32 = scmp.ne.s32.totalorder %s21, %s24
    %p33 = scmp.eq.s32.totalorder %s16, 1
    %p34 = por %p32, %p33
    %p35 = scmp.ne.s32.totalorder %s24, %s25
    %p36 = scmp.eq.s32.totalorder %s16, 0
    %p37 = por %p35, %p36
    %p38 = scmp.ne.s32.totalorder %s24, %s25
    %p39 = scmp.eq.s32.totalorder %s17, 1
    %p40 = por %p38, %p39
    %p42 = scmp.ne.s32.totalorder %s25, %s41
    %p43 = scmp.eq.s32.totalorder %s17, 0
    %p44 = por %p42, %p43
    %s46 = sadd.s32 %s45, 1
    %p49 = scmp.eq.s32.totalorder %s11, 1
    %p50 = scmp.ne.s32.totalorder %s45, %s47
    %p51 = scmp.eq.s32.totalorder %s11, 0
    %p52 = por %p50, %p51
    %p53 = scmp.ne.s32.totalorder %s45, %s47
    %p54 = scmp.eq.s32.totalorder %s16, 1
    %p55 = por %p53, %p54
    %p56 = scmp.ne.s32.totalorder %s47, %s48
    %p57 = scmp.eq.s32.totalorder %s16, 0
    %p58 = por %p56, %p57
    %p59 = scmp.ne.s32.totalorder %s47, %s48
    %p60 = scmp.eq.s32.totalorder %s17, 1
    %p61 = por %p59, %p60
    %p63 = scmp.ne.s32.totalorder %s48, %s62
    %p64 = scmp.eq.s32.totalorder %s17, 0
    %p65 = por %p63, %p64
    %s67 = sadd.s32 %s66, 1
    %p70 = scmp.eq.s32.totalorder %s11, 1
    %p71 = scmp.ne.s32.totalorder %s66, %s68
    %p72 = scmp.eq.s32.totalorder %s11, 0
    %p73 = por %p71, %p72
    %p74 = scmp.ne.s32.totalorder %s66, %s68
    %p75 = scmp.eq.s32.totalorder %s16, 1
    %p76 = por %p74, %p75
    %p77 = scmp.ne.s32.totalorder %s68, %s69
    %p78 = scmp.eq.s32.totalorder %s16, 0
    %p79 = por %p77, %p78
    %p80 = scmp.ne.s32.totalorder %s68, %s69
    %p81 = scmp.eq.s32.totalorder %s17, 1
    %p82 = por %p80, %p81
    %p84 = scmp.ne.s32.totalorder %s69, %s83
    %p85 = scmp.eq.s32.totalorder %s17, 0
    %p86 = por %p84, %p85
    %s88 = sadd.s32 %s87, 1
    %p91 = scmp.eq.s32.totalorder %s11, 1
    %p92 = scmp.ne.s32.totalorder %s87, %s89
    %p93 = scmp.eq.s32.totalorder %s11, 0
    %p94 = por %p92, %p93
    %p95 = scmp.ne.s32.totalorder %s87, %s89
    %p96 = scmp.eq.s32.totalorder %s16, 1
    %p97 = por %p95, %p96
    %p98 = scmp.ne.s32.totalorder %s89, %s90
    %p99 = scmp.eq.s32.totalorder %s16, 0
    %p100 = por %p98, %p99
    %p101 = scmp.ne.s32.totalorder %s89, %s90
    %p102 = scmp.eq.s32.totalorder %s17, 1
    %p103 = por %p101, %p102
    %p105 = scmp.ne.s32.totalorder %s90, %s104
    %p106 = scmp.eq.s32.totalorder %s17, 0
    %p107 = por %p105, %p106
    %s109 = sadd.s32 %s108, 1
    %p112 = scmp.eq.s32.totalorder %s11, 1
    %p113 = scmp.ne.s32.totalorder %s108, %s110
    %p114 = scmp.eq.s32.totalorder %s11, 0
    %p115 = por %p113, %p114
    %p116 = scmp.ne.s32.totalorder %s108, %s110
    %p117 = scmp.eq.s32.totalorder %s16, 1
    %p118 = por %p116, %p117
    %p119 = scmp.ne.s32.totalorder %s110, %s111
    %p120 = scmp.eq.s32.totalorder %s16, 0
    %p121 = por %p119, %p120
    %p122 = scmp.ne.s32.totalorder %s110, %s111
    %p123 = scmp.eq.s32.totalorder %s17, 1
    %p124 = por %p122, %p123
    %p126 = scmp.ne.s32.totalorder %s111, %s125
    %p127 = scmp.eq.s32.totalorder %s17, 0
    %p128 = por %p126, %p127
    %s129 = ssub.s32 %s11, %s18
    %p130 = scmp.eq.s32.totalorder %s129, 0
    %s132 = sadd.s32 %s131, 1
    %s133 = scalar_select %p130, %s131, %s132
    %p136 = pneg %p130
    %p137 = scmp.eq.s32.totalorder %s11, 1
    %p138 = por %p136, %p137
    %p139 = scmp.ne.s32.totalorder %s131, %s134
    %p140 = scmp.eq.s32.totalorder %s11, 0
    %p141 = por %p139, %p140
    %p142 = scmp.ne.s32.totalorder %s131, %s134
    %p143 = scmp.eq.s32.totalorder %s16, 1
    %p144 = por %p142, %p143
    %p145 = scmp.ne.s32.totalorder %s134, %s135
    %p146 = scmp.eq.s32.totalorder %s16, 0
    %p147 = por %p145, %p146
    %p148 = scmp.ne.s32.totalorder %s134, %s135
    %p149 = scmp.eq.s32.totalorder %s17, 1
    %p150 = por %p148, %p149
    %p152 = scmp.ne.s32.totalorder %s135, %s151
    %p153 = scmp.eq.s32.totalorder %s17, 0
    %p154 = por %p152, %p153
    %p155 = scmp.le.s32.totalorder 1, %s11
    %p156 = scmp.lt.s32.totalorder %s11, 3
    %p157 = pnand %p155, %p156
    %p158 = pneg %p157
    // Predicated region
    $region9: #{double_conv_block.1} parent=5 // pred_check
      _
    $region10: #{double_conv_block.1} parent=5 // pred_check_branch
      %160 = sbr.rel (%p157) target = $region12
    $region11: #{double_conv_block.1} parent=5 // pred_region
      %s161 = ssub.s32 %s11, 1
      // Predicated region
      $region13: #{double_conv_block.1} parent=11 // pred_check
        %p162 = pneg %p58
      $region14: #{double_conv_block.1} parent=11 // pred_check_branch
        %164 = sbr.rel (%p162) target = $region16
      $region15: #{double_conv_block.1} parent=11 // pred_region
        _
      $region16: #{double_conv_block.1} parent=11 // pred_fallthru
        _
      // Predicated region
      $region17: #{double_conv_block.1} parent=11 // pred_check
        %p165 = pneg %p79
      $region18: #{double_conv_block.1} parent=11 // pred_check_branch
        %167 = sbr.rel (%p165) target = $region20
      $region19: #{double_conv_block.1} parent=11 // pred_region
        _
      $region20: #{double_conv_block.1} parent=11 // pred_fallthru
        _
      // Predicated region
      $region21: #{double_conv_block.1} parent=11 // pred_check
        %p168 = pneg %p100
      $region22: #{double_conv_block.1} parent=11 // pred_check_branch
        %170 = sbr.rel (%p168) target = $region24
      $region23: #{double_conv_block.1} parent=11 // pred_region
        _
      $region24: #{double_conv_block.1} parent=11 // pred_fallthru
        _
      // Predicated region
      $region25: #{double_conv_block.1} parent=11 // pred_check
        %p171 = pneg %p121
      $region26: #{double_conv_block.1} parent=11 // pred_check_branch
        %173 = sbr.rel (%p171) target = $region28
      $region27: #{double_conv_block.1} parent=11 // pred_region
        _
      $region28: #{double_conv_block.1} parent=11 // pred_fallthru
        _
    $region12: #{double_conv_block.1} parent=5 // pred_fallthru
      _
    %p174 = scmp.lt.s32.totalorder %s11, 2
    // Predicated region
    $region29: #{double_conv_block.1} parent=5 // pred_check
      %p175 = pneg %p174
    $region30: #{double_conv_block.1} parent=5 // pred_check_branch
      %177 = sbr.rel (%p175) target = $region32
    $region31: #{double_conv_block.1} parent=5 // pred_region
      // Predicated region
      $region33: #{double_conv_block.1} parent=31 // pred_check
        %p178 = pneg %p31
      $region34: #{double_conv_block.1} parent=31 // pred_check_branch
        %180 = sbr.rel (%p178) target = $region36
      $region35: #{double_conv_block.1} parent=31 // pred_region
        %p181 = scmp.lt.s32.totalorder %s11, 1
        %s182 = scalar_select %p181, %s11, 1
        %s183 = smul.addr %s182, 72
        %s184 = smul.addr %s183, 4
        %s185 = scalar_lea.vmem %s0, %s184
      $region36: #{double_conv_block.1} parent=31 // pred_fallthru
        _
    $region32: #{double_conv_block.1} parent=5 // pred_fallthru
      _
    %p186 = scmp.le.s32.totalorder 1, %s11
    %p187 = scmp.lt.s32.totalorder %s11, 3
    %p188 = pnand %p186, %p187
    %p189 = pneg %p188
    // Predicated region
    $region37: #{double_conv_block.1} parent=5 // pred_check
      _
    $region38: #{double_conv_block.1} parent=5 // pred_check_branch
      %191 = sbr.rel (%p188) target = $region40
    $region39: #{double_conv_block.1} parent=5 // pred_region
      %s192 = ssub.s32 %s11, 1
      %p193 = scmp.lt.s32.totalorder %s16, 1
      %s194 = scalar_select %p193, %s16, 1
      %s195 = smul.addr %s194, 72
      %s196 = smul.addr %s195, 4
      %s197 = scalar_lea.vmem %s0, %s196
      %p198 = pneg %p37
      %p199 = pneg %p34
      %p200 = pneg %p58
      %p201 = pneg %p55
      %p202 = pneg %p79
      %p203 = pneg %p76
      %p204 = pneg %p100
      %p205 = pneg %p97
      %p206 = pneg %p121
      %p207 = pneg %p118
      %p208 = pneg %p147
      %p209 = pneg %p144
      %p210 = scmp.lt.s32.totalorder %s16, 1
      %s211 = scalar_select %p210, %s16, 1
      %s212 = smul.addr %s211, 8
      %s213 = smul.addr %s212, 8
      %s214 = scalar_lea.vmem %s5, %s213
      %p215 = scmp.lt.s32.totalorder %s16, 1
      %s216 = scalar_select %p215, %s16, 1
      %s217 = smul.addr %s216, 72
      %s218 = smul.addr %s217, 4
      %s219 = scalar_lea.vmem %s0, %s218
      %p220 = scmp.lt.s32.totalorder %s16, 1
      %s221 = scalar_select %p220, %s16, 1
      %s222 = smul.addr %s221, 8
      %s223 = smul.addr %s222, 8
      %s224 = scalar_lea.vmem %s5, %s223
      %v226 = vld [vmem:[%s219] sm:$0xf]
      %v227 = vld [vmem:[%s219 + $0x8] sm:$0xf]
      %v228 = vld [vmem:[%s219 + $0x10] sm:$0xf]
      %v229 = vld [vmem:[%s219 + $0x18] sm:$0xf]
      %v230 = vld [vmem:[%s219 + $0x20] sm:$0xf]
      %v231 = vld [vmem:[%s219 + $0x28] sm:$0xf]
      %v232 = vld [vmem:[%s219 + $0x30] sm:$0xf]
      %v233 = vld [vmem:[%s219 + $0x38] sm:$0xf]
      %v234 = vld [vmem:[%s1] sm:$0xf]
      %v235 = vld [vmem:[%s1 + $0x4] sm:$0xf]
      %v236 = vld [vmem:[%s1 + $0x8] sm:$0xf]
      %v237 = vld [vmem:[%s1 + $0xc] sm:$0xf]
      %v238 = vld [vmem:[%s1 + $0x10] sm:$0xf]
      %v239 = vld [vmem:[%s1 + $0x14] sm:$0xf]
      %v240 = vld [vmem:[%s1 + $0x18] sm:$0xf]
      %v241 = vld [vmem:[%s1 + $0x1c] sm:$0xf]
      %v242 = vld [vmem:[%s1 + $0x20] sm:$0xf]
      %v243 = vld [vmem:[%s1 + $0x24] sm:$0xf]
      %v244 = vld [vmem:[%s1 + $0x28] sm:$0xf]
      %v245 = vld [vmem:[%s1 + $0x2c] sm:$0xf]
      %v246 = vld [vmem:[%s1 + $0x30] sm:$0xf]
      %v247 = vld [vmem:[%s1 + $0x34] sm:$0xf]
      %v248 = vld [vmem:[%s1 + $0x38] sm:$0xf]
      %v249 = vld [vmem:[%s1 + $0x3c] sm:$0xf]
      %s250 = scalar_lea.vmem %s219, 72
      %v251 = vld [vmem:[%s250] sm:$0xf]
      %v252 = vld [vmem:[%s250 + $0x8] sm:$0xf]
      %v253 = vld [vmem:[%s250 + $0x10] sm:$0xf]
      %v254 = vld [vmem:[%s250 + $0x18] sm:$0xf]
      %v255 = vld [vmem:[%s250 + $0x20] sm:$0xf]
      %v256 = vld [vmem:[%s250 + $0x28] sm:$0xf]
      %v257 = vld [vmem:[%s250 + $0x30] sm:$0xf]
      %v258 = vld [vmem:[%s250 + $0x38] sm:$0xf]
      %s259 = scalar_lea.vmem %s1, 64
      %v260 = vld [vmem:[%s259] sm:$0xf]
      %v261 = vld [vmem:[%s259 + $0x4] sm:$0xf]
      %v262 = vld [vmem:[%s259 + $0x8] sm:$0xf]
      %v263 = vld [vmem:[%s259 + $0xc] sm:$0xf]
      %v264 = vld [vmem:[%s259 + $0x10] sm:$0xf]
      %v265 = vld [vmem:[%s259 + $0x14] sm:$0xf]
      %v266 = vld [vmem:[%s259 + $0x18] sm:$0xf]
      %v267 = vld [vmem:[%s259 + $0x1c] sm:$0xf]
      %v268 = vld [vmem:[%s259 + $0x20] sm:$0xf]
      %v269 = vld [vmem:[%s259 + $0x24] sm:$0xf]
      %v270 = vld [vmem:[%s259 + $0x28] sm:$0xf]
      %v271 = vld [vmem:[%s259 + $0x2c] sm:$0xf]
      %v272 = vld [vmem:[%s259 + $0x30] sm:$0xf]
      %v273 = vld [vmem:[%s259 + $0x34] sm:$0xf]
      %v274 = vld [vmem:[%s259 + $0x38] sm:$0xf]
      %v275 = vld [vmem:[%s259 + $0x3c] sm:$0xf]
      %v284 = vunpack.c.l.b16 %v251
      %v285 = vunpack.c.l.b16 %v252
      %v286 = vunpack.c.l.b16 %v253
      %v287 = vunpack.c.l.b16 %v254
      %v288 = vunpack.c.l.b16 %v255
      %v289 = vunpack.c.l.b16 %v256
      %v290 = vunpack.c.l.b16 %v257
      %v291 = vunpack.c.l.b16 %v258
      %v292 = vpack.c.b16 %v285, %v284
      %v293 = vpack.c.b16 %v287, %v286
      %v294 = vpack.c.b16 %v289, %v288
      %v295 = vpack.c.b16 %v291, %v290
      %v316 = vunpack.c.l.b16 %v260
      %v317 = vunpack.c.l.b16 %v261
      %v318 = vunpack.c.l.b16 %v262
      %v319 = vunpack.c.l.b16 %v263
      %v320 = vunpack.c.l.b16 %v264
      %v321 = vunpack.c.l.b16 %v265
      %v322 = vunpack.c.l.b16 %v266
      %v323 = vunpack.c.l.b16 %v267
      %v324 = vunpack.c.l.b16 %v268
      %v325 = vunpack.c.l.b16 %v269
      %v326 = vunpack.c.l.b16 %v270
      %v327 = vunpack.c.l.b16 %v271
      %v328 = vunpack.c.l.b16 %v272
      %v329 = vunpack.c.l.b16 %v273
      %v330 = vunpack.c.l.b16 %v274
      %v331 = vunpack.c.l.b16 %v275
      %v332 = vpack.c.b16 %v317, %v316
      %v333 = vpack.c.b16 %v319, %v318
      %v334 = vpack.c.b16 %v321, %v320
      %v335 = vpack.c.b16 %v323, %v322
      %v336 = vpack.c.b16 %v325, %v324
      %v337 = vpack.c.b16 %v327, %v326
      %v338 = vpack.c.b16 %v329, %v328
      %v339 = vpack.c.b16 %v331, %v330
      %348 = vmatprep.subr.bf16.mxu0 0
      %349 = vmatpush1.bf16.msra.mxu0 %v332
      %350 = vmatprep.subr.bf16.mxu0 0
      %351 = vmatpush1.bf16.msra.mxu0 %v333
      %352 = vmatprep.subr.bf16.mxu0 0
      %353 = vmatpush1.bf16.msra.mxu0 %v334
      %354 = vmatprep.subr.bf16.mxu0 0
      %355 = vmatpush1.bf16.msra.mxu0 %v335
      %356 = vmatprep.subr.bf16.mxu0 0
      %357 = vmatpush1.bf16.msra.mxu0 %v336
      %358 = vmatprep.subr.bf16.mxu0 0
      %359 = vmatpush1.bf16.msra.mxu0 %v337
      %360 = vmatprep.subr.bf16.mxu0 0
      %361 = vmatpush1.bf16.msra.mxu0 %v338
      %362 = vmatprep.subr.bf16.mxu0 0
      %363 = vmatpush1.bf16.msra.mxu0 %v339
      %364 = vmatprep.subr.bf16.mxu0 0
      %365 = vmatpush1.bf16.msra.mxu0 0
      %366 = vmatprep.subr.bf16.mxu0 0
      %367 = vmatpush1.bf16.msra.mxu0 0
      %368 = vmatprep.subr.bf16.mxu0 0
      %369 = vmatpush1.bf16.msra.mxu0 0
      %370 = vmatprep.subr.bf16.mxu0 0
      %371 = vmatpush1.bf16.msra.mxu0 0
      %372 = vmatprep.subr.bf16.mxu0 0
      %373 = vmatpush1.bf16.msra.mxu0 0
      %374 = vmatprep.subr.bf16.mxu0 0
      %375 = vmatpush1.bf16.msra.mxu0 0
      %376 = vmatprep.subr.bf16.mxu0 0
      %377 = vmatpush1.bf16.msra.mxu0 0
      %378 = vmatprep.subr.bf16.mxu0 0
      %379 = vmatpush1.bf16.msra.mxu0 0
      %380 = vmatprep.mubr.bf16.mxu0 0
      %381 = vmatmul.mubr.bf16.gmra.mrb[0].mxu0 %v292
      %v382 = vpop.f32.mrb[0].mxu0
      %v383 = vadd.f32 0.0, %v382
      %v384 = vpop.f32.mrb[0].mxu0
      %v385 = vpop.f32.mrb[0].mxu0
      %v386 = vadd.f32 0.0, %v385
      %v387 = vpop.f32.mrb[0].mxu0
      %388 = vmatprep.mubr.bf16.mxu0 0
      %389 = vmatmul.mubr.bf16.gmra.mrb[0].mxu0 %v293
      %v390 = vpop.f32.mrb[0].mxu0
      %v391 = vadd.f32 0.0, %v390
      %v392 = vpop.f32.mrb[0].mxu0
      %v393 = vpop.f32.mrb[0].mxu0
      %v394 = vadd.f32 0.0, %v393
      %v395 = vpop.f32.mrb[0].mxu0
      %396 = vmatprep.mubr.bf16.mxu0 0
      %397 = vmatmul.mubr.bf16.gmra.mrb[0].mxu0 %v294
      %v398 = vpop.f32.mrb[0].mxu0
      %v399 = vadd.f32 0.0, %v398
      %v400 = vpop.f32.mrb[0].mxu0
      %v401 = vpop.f32.mrb[0].mxu0
      %v402 = vadd.f32 0.0, %v401
      %v403 = vpop.f32.mrb[0].mxu0
      %404 = vmatprep.mubr.bf16.mxu0 0
      %405 = vmatmul.mubr.bf16.gmra.mrb[0].mxu0 %v295
      %v406 = vpop.f32.mrb[0].mxu0
      %v407 = vadd.f32 0.0, %v406
      %v408 = vpop.f32.mrb[0].mxu0
      %v409 = vpop.f32.mrb[0].mxu0
      %v410 = vadd.f32 0.0, %v409
      %v411 = vpop.f32.mrb[0].mxu0
      %412 = vdwg.mxu0
      %v421 = vunpack.c.l.b16 %v226
      %v422 = vunpack.c.l.b16 %v227
      %v423 = vunpack.c.l.b16 %v228
      %v424 = vunpack.c.l.b16 %v229
      %v425 = vunpack.c.l.b16 %v230
      %v426 = vunpack.c.l.b16 %v231
      %v427 = vunpack.c.l.b16 %v232
      %v428 = vunpack.c.l.b16 %v233
      %v429 = vpack.c.b16 %v422, %v421
      %v430 = vpack.c.b16 %v424, %v423
      %v431 = vpack.c.b16 %v426, %v425
      %v432 = vpack.c.b16 %v428, %v427
      %v453 = vunpack.c.l.b16 %v234
      %v454 = vunpack.c.l.b16 %v235
      %v455 = vunpack.c.l.b16 %v236
      %v456 = vunpack.c.l.b16 %v237
      %v457 = vunpack.c.l.b16 %v238
      %v458 = vunpack.c.l.b16 %v239
      %v459 = vunpack.c.l.b16 %v240
      %v460 = vunpack.c.l.b16 %v241
      %v461 = vunpack.c.l.b16 %v242
      %v462 = vunpack.c.l.b16 %v243
      %v463 = vunpack.c.l.b16 %v244
      %v464 = vunpack.c.l.b16 %v245
      %v465 = vunpack.c.l.b16 %v246
      %v466 = vunpack.c.l.b16 %v247
      %v467 = vunpack.c.l.b16 %v248
      %v468 = vunpack.c.l.b16 %v249
      %v469 = vpack.c.b16 %v454, %v453
      %v470 = vpack.c.b16 %v456, %v455
      %v471 = vpack.c.b16 %v458, %v457
      %v472 = vpack.c.b16 %v460, %v459
      %v473 = vpack.c.b16 %v462, %v461
      %v474 = vpack.c.b16 %v464, %v463
      %v475 = vpack.c.b16 %v466, %v465
      %v476 = vpack.c.b16 %v468, %v467
      %485 = vmatprep.subr.bf16.mxu0 0
      %486 = vmatpush1.bf16.msra.mxu0 %v469
      %487 = vmatprep.subr.bf16.mxu0 0
      %488 = vmatpush1.bf16.msra.mxu0 %v470
      %489 = vmatprep.subr.bf16.mxu0 0
      %490 = vmatpush1.bf16.msra.mxu0 %v471
      %491 = vmatprep.subr.bf16.mxu0 0
      %492 = vmatpush1.bf16.msra.mxu0 %v472
      %493 = vmatprep.subr.bf16.mxu0 0
      %494 = vmatpush1.bf16.msra.mxu0 %v473
      %495 = vmatprep.subr.bf16.mxu0 0
      %496 = vmatpush1.bf16.msra.mxu0 %v474
      %497 = vmatprep.subr.bf16.mxu0 0
      %498 = vmatpush1.bf16.msra.mxu0 %v475
      %499 = vmatprep.subr.bf16.mxu0 0
      %500 = vmatpush1.bf16.msra.mxu0 %v476
      %501 = vmatprep.subr.bf16.mxu0 0
      %502 = vmatpush1.bf16.msra.mxu0 0
      %503 = vmatprep.subr.bf16.mxu0 0
      %504 = vmatpush1.bf16.msra.mxu0 0
      %505 = vmatprep.subr.bf16.mxu0 0
      %506 = vmatpush1.bf16.msra.mxu0 0
      %507 = vmatprep.subr.bf16.mxu0 0
      %508 = vmatpush1.bf16.msra.mxu0 0
      %509 = vmatprep.subr.bf16.mxu0 0
      %510 = vmatpush1.bf16.msra.mxu0 0
      %511 = vmatprep.subr.bf16.mxu0 0
      %512 = vmatpush1.bf16.msra.mxu0 0
      %513 = vmatprep.subr.bf16.mxu0 0
      %514 = vmatpush1.bf16.msra.mxu0 0
      %515 = vmatprep.subr.bf16.mxu0 0
      %516 = vmatpush1.bf16.msra.mxu0 0
      %517 = vmatprep.mubr.bf16.mxu0 0
      %518 = vmatmul.mubr.bf16.gmra.mrb[0].mxu0 %v429
      %v519 = vpop.f32.mrb[0].mxu0
      %v520 = vadd.f32 %v383, %v519
      %v521 = vpop.f32.mrb[0].mxu0
      %v522 = vpop.f32.mrb[0].mxu0
      %v523 = vadd.f32 %v386, %v522
      %v524 = vpop.f32.mrb[0].mxu0
      %525 = vmatprep.mubr.bf16.mxu0 0
      %526 = vmatmul.mubr.bf16.gmra.mrb[0].mxu0 %v430
      %v527 = vpop.f32.mrb[0].mxu0
      %v528 = vadd.f32 %v391, %v527
      %v529 = vpop.f32.mrb[0].mxu0
      %v530 = vpop.f32.mrb[0].mxu0
      %v531 = vadd.f32 %v394, %v530
      %v532 = vpop.f32.mrb[0].mxu0
      %533 = vmatprep.mubr.bf16.mxu0 0
      %534 = vmatmul.mubr.bf16.gmra.mrb[0].mxu0 %v431
      %v535 = vpop.f32.mrb[0].mxu0
      %v536 = vadd.f32 %v399, %v535
      %v537 = vpop.f32.mrb[0].mxu0
      %v538 = vpop.f32.mrb[0].mxu0
      %v539 = vadd.f32 %v402, %v538
      %v540 = vpop.f32.mrb[0].mxu0
      %541 = vmatprep.mubr.bf16.mxu0 0
      %542 = vmatmul.mubr.bf16.gmra.mrb[0].mxu0 %v432
      %v543 = vpop.f32.mrb[0].mxu0
      %v544 = vadd.f32 %v407, %v543
      %v545 = vpop.f32.mrb[0].mxu0
      %v546 = vpop.f32.mrb[0].mxu0
      %v547 = vadd.f32 %v410, %v546
      %v548 = vpop.f32.mrb[0].mxu0
      %549 = vdwg.mxu0
      %v550 = vld [vmem:[%s219] sm:$0xf]
      %v551 = vld [vmem:[%s219 + $0x4] sm:$0x1]
      %v552 = vld [vmem:[%s219 + $0x8] sm:$0xf]
      %v553 = vld [vmem:[%s219 + $0xc] sm:$0x1]
      %v554 = vld [vmem:[%s219 + $0x10] sm:$0xf]
      %v555 = vld [vmem:[%s219 + $0x14] sm:$0x1]
      %v556 = vld [vmem:[%s219 + $0x18] sm:$0xf]
      %v557 = vld [vmem:[%s219 + $0x1c] sm:$0x1]
      %v558 = vld [vmem:[%s219 + $0x20] sm:$0xf]
      %v559 = vld [vmem:[%s219 + $0x24] sm:$0x1]
      %v560 = vld [vmem:[%s219 + $0x28] sm:$0xf]
      %v561 = vld [vmem:[%s219 + $0x2c] sm:$0x1]
      %v562 = vld [vmem:[%s219 + $0x30] sm:$0xf]
      %v563 = vld [vmem:[%s219 + $0x34] sm:$0x1]
      %v564 = vld [vmem:[%s219 + $0x38] sm:$0xf]
      %v565 = vld [vmem:[%s219 + $0x3c] sm:$0x1]
      %vm566 = vsmask.f32 3328
      %vm567 = vsmask.f32 7440
      %vm568 = vmor %vm566, %vm567
      %v570 = vshrl.u32 %v550, 16
      %v572 = vrot.slane %v570, 4
      %v573 = vshll.u32 %v550, 16
      %v575 = vrot.slane %v573, 5
      %v576 = vor.u32 %v572, %v575
      %v577 = vrot.slane %v576, 4
      %v579 = vshll.u32 %v551, 16
      %v581 = vrot.slane %v579, 5
      %v582 = vsel %vm568, %v577, %v581
      %v584 = vshrl.u32 %v552, 16
      %v586 = vrot.slane %v584, 4
      %v587 = vshll.u32 %v552, 16
      %v589 = vrot.slane %v587, 5
      %v590 = vor.u32 %v586, %v589
      %v591 = vrot.slane %v590, 4
      %v593 = vshll.u32 %v553, 16
      %v595 = vrot.slane %v593, 5
      %v596 = vsel %vm568, %v591, %v595
      %v598 = vshrl.u32 %v554, 16
      %v600 = vrot.slane %v598, 4
      %v601 = vshll.u32 %v554, 16
      %v603 = vrot.slane %v601, 5
      %v604 = vor.u32 %v600, %v603
      %v605 = vrot.slane %v604, 4
      %v607 = vshll.u32 %v555, 16
      %v609 = vrot.slane %v607, 5
      %v610 = vsel %vm568, %v605, %v609
      %v612 = vshrl.u32 %v556, 16
      %v614 = vrot.slane %v612, 4
      %v615 = vshll.u32 %v556, 16
      %v617 = vrot.slane %v615, 5
      %v618 = vor.u32 %v614, %v617
      %v619 = vrot.slane %v618, 4
      %v621 = vshll.u32 %v557, 16
      %v623 = vrot.slane %v621, 5
      %v624 = vsel %vm568, %v619, %v623
      %v626 = vshrl.u32 %v558, 16
      %v628 = vrot.slane %v626, 4
      %v629 = vshll.u32 %v558, 16
      %v631 = vrot.slane %v629, 5
      %v632 = vor.u32 %v628, %v631
      %v633 = vrot.slane %v632, 4
      %v635 = vshll.u32 %v559, 16
      %v637 = vrot.slane %v635, 5
      %v638 = vsel %vm568, %v633, %v637
      %v640 = vshrl.u32 %v560, 16
      %v642 = vrot.slane %v640, 4
      %v643 = vshll.u32 %v560, 16
      %v645 = vrot.slane %v643, 5
      %v646 = vor.u32 %v642, %v645
      %v647 = vrot.slane %v646, 4
      %v649 = vshll.u32 %v561, 16
      %v651 = vrot.slane %v649, 5
      %v652 = vsel %vm568, %v647, %v651
      %v654 = vshrl.u32 %v562, 16
      %v656 = vrot.slane %v654, 4
      %v657 = vshll.u32 %v562, 16
      %v659 = vrot.slane %v657, 5
      %v660 = vor.u32 %v656, %v659
      %v661 = vrot.slane %v660, 4
      %v663 = vshll.u32 %v563, 16
      %v665 = vrot.slane %v663, 5
      %v666 = vsel %vm568, %v661, %v665
      %v668 = vshrl.u32 %v564, 16
      %v670 = vrot.slane %v668, 4
      %v671 = vshll.u32 %v564, 16
      %v673 = vrot.slane %v671, 5
      %v674 = vor.u32 %v670, %v673
      %v675 = vrot.slane %v674, 4
      %v677 = vshll.u32 %v565, 16
      %v679 = vrot.slane %v677, 5
      %v680 = vsel %vm568, %v675, %v679
      %s681 = scalar_lea.vmem %s1, 128
      %v682 = vld [vmem:[%s681] sm:$0xf]
      %v683 = vld [vmem:[%s681 + $0x4] sm:$0xf]
      %v684 = vld [vmem:[%s681 + $0x8] sm:$0xf]
      %v685 = vld [vmem:[%s681 + $0xc] sm:$0xf]
      %v686 = vld [vmem:[%s681 + $0x10] sm:$0xf]
      %v687 = vld [vmem:[%s681 + $0x14] sm:$0xf]
      %v688 = vld [vmem:[%s681 + $0x18] sm:$0xf]
      %v689 = vld [vmem:[%s681 + $0x1c] sm:$0xf]
      %v690 = vld [vmem:[%s681 + $0x20] sm:$0xf]
      %v691 = vld [vmem:[%s681 + $0x24] sm:$0xf]
      %v692 = vld [vmem:[%s681 + $0x28] sm:$0xf]
      %v693 = vld [vmem:[%s681 + $0x2c] sm:$0xf]
      %v694 = vld [vmem:[%s681 + $0x30] sm:$0xf]
      %v695 = vld [vmem:[%s681 + $0x34] sm:$0xf]
      %v696 = vld [vmem:[%s681 + $0x38] sm:$0xf]
      %v697 = vld [vmem:[%s681 + $0x3c] sm:$0xf]
      %v698 = vunpack.c.l.b16 %v582
      %v699 = vunpack.c.l.b16 %v596
      %v700 = vunpack.c.l.b16 %v610
      %v701 = vunpack.c.l.b16 %v624
      %v702 = vunpack.c.l.b16 %v638
      %v703 = vunpack.c.l.b16 %v652
      %v704 = vunpack.c.l.b16 %v666
      %v705 = vunpack.c.l.b16 %v680
      %v706 = vpack.c.b16 %v699, %v698
      %v707 = vpack.c.b16 %v701, %v700
      %v708 = vpack.c.b16 %v703, %v702
      %v709 = vpack.c.b16 %v705, %v704
      %v730 = vunpack.c.l.b16 %v682
      %v731 = vunpack.c.l.b16 %v683
      %v732 = vunpack.c.l.b16 %v684
      %v733 = vunpack.c.l.b16 %v685
      %v734 = vunpack.c.l.b16 %v686
      %v735 = vunpack.c.l.b16 %v687
      %v736 = vunpack.c.l.b16 %v688
      %v737 = vunpack.c.l.b16 %v689
      %v738 = vunpack.c.l.b16 %v690
      %v739 = vunpack.c.l.b16 %v691
      %v740 = vunpack.c.l.b16 %v692
      %v741 = vunpack.c.l.b16 %v693
      %v742 = vunpack.c.l.b16 %v694
      %v743 = vunpack.c.l.b16 %v695
      %v744 = vunpack.c.l.b16 %v696
      %v745 = vunpack.c.l.b16 %v697
      %v746 = vpack.c.b16 %v731, %v730
      %v747 = vpack.c.b16 %v733, %v732
      %v748 = vpack.c.b16 %v735, %v734
      %v749 = vpack.c.b16 %v737, %v736
      %v750 = vpack.c.b16 %v739, %v738
      %v751 = vpack.c.b16 %v741, %v740
      %v752 = vpack.c.b16 %v743, %v742
      %v753 = vpack.c.b16 %v745, %v744
      %762 = vmatprep.subr.bf16.mxu0 0
      %763 = vmatpush1.bf16.msra.mxu0 %v746
      %764 = vmatprep.subr.bf16.mxu0 0
      %765 = vmatpush1.bf16.msra.mxu0 %v747
      %766 = vmatprep.subr.bf16.mxu0 0
      %767 = vmatpush1.bf16.msra.mxu0 %v748
      %768 = vmatprep.subr.bf16.mxu0 0
      %769 = vmatpush1.bf16.msra.mxu0 %v749
      %770 = vmatprep.subr.bf16.mxu0 0
      %771 = vmatpush1.bf16.msra.mxu0 %v750
      %772 = vmatprep.subr.bf16.mxu0 0
      %773 = vmatpush1.bf16.msra.mxu0 %v751
      %774 = vmatprep.subr.bf16.mxu0 0
      %775 = vmatpush1.bf16.msra.mxu0 %v752
      %776 = vmatprep.subr.bf16.mxu0 0
      %777 = vmatpush1.bf16.msra.mxu0 %v753
      %778 = vmatprep.subr.bf16.mxu0 0
      %779 = vmatpush1.bf16.msra.mxu0 0
      %780 = vmatprep.subr.bf16.mxu0 0
      %781 = vmatpush1.bf16.msra.mxu0 0
      %782 = vmatprep.subr.bf16.mxu0 0
      %783 = vmatpush1.bf16.msra.mxu0 0
      %784 = vmatprep.subr.bf16.mxu0 0
      %785 = vmatpush1.bf16.msra.mxu0 0
      %786 = vmatprep.subr.bf16.mxu0 0
      %787 = vmatpush1.bf16.msra.mxu0 0
      %788 = vmatprep.subr.bf16.mxu0 0
      %789 = vmatpush1.bf16.msra.mxu0 0
      %790 = vmatprep.subr.bf16.mxu0 0
      %791 = vmatpush1.bf16.msra.mxu0 0
      %792 = vmatprep.subr.bf16.mxu0 0
      %793 = vmatpush1.bf16.msra.mxu0 0
      %794 = vmatprep.mubr.bf16.mxu0 0
      %795 = vmatmul.mubr.bf16.gmra.mrb[0].mxu0 %v706
      %v796 = vpop.f32.mrb[0].mxu0
      %v797 = vadd.f32 0.0, %v796
      %v798 = vpop.f32.mrb[0].mxu0
      %v799 = vpop.f32.mrb[0].mxu0
      %v800 = vadd.f32 0.0, %v799
      %v801 = vpop.f32.mrb[0].mxu0
      %802 = vmatprep.mubr.bf16.mxu0 0
      %803 = vmatmul.mubr.bf16.gmra.mrb[0].mxu0 %v707
      %v804 = vpop.f32.mrb[0].mxu0
      %v805 = vadd.f32 0.0, %v804
      %v806 = vpop.f32.mrb[0].mxu0
      %v807 = vpop.f32.mrb[0].mxu0
      %v808 = vadd.f32 0.0, %v807
      %v809 = vpop.f32.mrb[0].mxu0
      %810 = vmatprep.mubr.bf16.mxu0 0
      %811 = vmatmul.mubr.bf16.gmra.mrb[0].mxu0 %v708
      %v812 = vpop.f32.mrb[0].mxu0
      %v813 = vadd.f32 0.0, %v812
      %v814 = vpop.f32.mrb[0].mxu0
      %v815 = vpop.f32.mrb[0].mxu0
      %v816 = vadd.f32 0.0, %v815
      %v817 = vpop.f32.mrb[0].mxu0
      %818 = vmatprep.mubr.bf16.mxu0 0
      %819 = vmatmul.mubr.bf16.gmra.mrb[0].mxu0 %v709
      %v820 = vpop.f32.mrb[0].mxu0
      %v821 = vadd.f32 0.0, %v820
      %v822 = vpop.f32.mrb[0].mxu0
      %v823 = vpop.f32.mrb[0].mxu0
      %v824 = vadd.f32 0.0, %v823
      %v825 = vpop.f32.mrb[0].mxu0
      %826 = vdwg.mxu0
      %v827 = vadd.f32 %v520, %v797
      %v828 = vadd.f32 %v523, %v800
      %v829 = vadd.f32 %v528, %v805
      %v830 = vadd.f32 %v531, %v808
      %v831 = vadd.f32 %v536, %v813
      %v832 = vadd.f32 %v539, %v816
      %v833 = vadd.f32 %v544, %v821
      %v834 = vadd.f32 %v547, %v824
      %s835 = scalar_lea.vmem %s219, 144
      %v836 = vld [vmem:[%s835] sm:$0xf]
      %v837 = vld [vmem:[%s835 + $0x8] sm:$0xf]
      %v838 = vld [vmem:[%s835 + $0x10] sm:$0xf]
      %v839 = vld [vmem:[%s835 + $0x18] sm:$0xf]
      %v840 = vld [vmem:[%s835 + $0x20] sm:$0xf]
      %v841 = vld [vmem:[%s835 + $0x28] sm:$0xf]
      %v842 = vld [vmem:[%s835 + $0x30] sm:$0xf]
      %v843 = vld [vmem:[%s835 + $0x38] sm:$0xf]
      %s844 = scalar_lea.vmem %s1, 192
      %v845 = vld [vmem:[%s844] sm:$0xf]
      %v846 = vld [vmem:[%s844 + $0x4] sm:$0xf]
      %v847 = vld [vmem:[%s844 + $0x8] sm:$0xf]
      %v848 = vld [vmem:[%s844 + $0xc] sm:$0xf]
      %v849 = vld [vmem:[%s844 + $0x10] sm:$0xf]
      %v850 = vld [vmem:[%s844 + $0x14] sm:$0xf]
      %v851 = vld [vmem:[%s844 + $0x18] sm:$0xf]
      %v852 = vld [vmem:[%s844 + $0x1c] sm:$0xf]
      %v853 = vld [vmem:[%s844 + $0x20] sm:$0xf]
      %v854 = vld [vmem:[%s844 + $0x24] sm:$0xf]
      %v855 = vld [vmem:[%s844 + $0x28] sm:$0xf]
      %v856 = vld [vmem:[%s844 + $0x2c] sm:$0xf]
      %v857 = vld [vmem:[%s844 + $0x30] sm:$0xf]
      %v858 = vld [vmem:[%s844 + $0x34] sm:$0xf]
      %v859 = vld [vmem:[%s844 + $0x38] sm:$0xf]
      %v860 = vld [vmem:[%s844 + $0x3c] sm:$0xf]
      %v869 = vunpack.c.l.b16 %v836
      %v870 = vunpack.c.l.b16 %v837
      %v871 = vunpack.c.l.b16 %v838
      %v872 = vunpack.c.l.b16 %v839
      %v873 = vunpack.c.l.b16 %v840
      %v874 = vunpack.c.l.b16 %v841
      %v875 = vunpack.c.l.b16 %v842
      %v876 = vunpack.c.l.b16 %v843
      %v877 = vpack.c.b16 %v870, %v869
      %v878 = vpack.c.b16 %v872, %v871
      %v879 = vpack.c.b16 %v874, %v873
      %v880 = vpack.c.b16 %v876, %v875
      %v901 = vunpack.c.l.b16 %v845
      %v902 = vunpack.c.l.b16 %v846
      %v903 = vunpack.c.l.b16 %v847
      %v904 = vunpack.c.l.b16 %v848
      %v905 = vunpack.c.l.b16 %v849
      %v906 = vunpack.c.l.b16 %v850
      %v907 = vunpack.c.l.b16 %v851
      %v908 = vunpack.c.l.b16 %v852
      %v909 = vunpack.c.l.b16 %v853
      %v910 = vunpack.c.l.b16 %v854
      %v911 = vunpack.c.l.b16 %v855
      %v912 = vunpack.c.l.b16 %v856
      %v913 = vunpack.c.l.b16 %v857
      %v914 = vunpack.c.l.b16 %v858
      %v915 = vunpack.c.l.b16 %v859
      %v916 = vunpack.c.l.b16 %v860
      %v917 = vpack.c.b16 %v902, %v901
      %v918 = vpack.c.b16 %v904, %v903
      %v919 = vpack.c.b16 %v906, %v905
      %v920 = vpack.c.b16 %v908, %v907
      %v921 = vpack.c.b16 %v910, %v909
      %v922 = vpack.c.b16 %v912, %v911
      %v923 = vpack.c.b16 %v914, %v913
      %v924 = vpack.c.b16 %v916, %v915
      %933 = vmatprep.subr.bf16.mxu0 0
      %934 = vmatpush1.bf16.msra.mxu0 %v917
      %935 = vmatprep.subr.bf16.mxu0 0
      %936 = vmatpush1.bf16.msra.mxu0 %v918
      %937 = vmatprep.subr.bf16.mxu0 0
      %938 = vmatpush1.bf16.msra.mxu0 %v919
      %939 = vmatprep.subr.bf16.mxu0 0
      %940 = vmatpush1.bf16.msra.mxu0 %v920
      %941 = vmatprep.subr.bf16.mxu0 0
      %942 = vmatpush1.bf16.msra.mxu0 %v921
      %943 = vmatprep.subr.bf16.mxu0 0
      %944 = vmatpush1.bf16.msra.mxu0 %v922
      %945 = vmatprep.subr.bf16.mxu0 0
      %946 = vmatpush1.bf16.msra.mxu0 %v923
      %947 = vmatprep.subr.bf16.mxu0 0
      %948 = vmatpush1.bf16.msra.mxu0 %v924
      %949 = vmatprep.subr.bf16.mxu0 0
      %950 = vmatpush1.bf16.msra.mxu0 0
      %951 = vmatprep.subr.bf16.mxu0 0
      %952 = vmatpush1.bf16.msra.mxu0 0
      %953 = vmatprep.subr.bf16.mxu0 0
      %954 = vmatpush1.bf16.msra.mxu0 0
      %955 = vmatprep.subr.bf16.mxu0 0
      %956 = vmatpush1.bf16.msra.mxu0 0
      %957 = vmatprep.subr.bf16.mxu0 0
      %958 = vmatpush1.bf16.msra.mxu0 0
      %959 = vmatprep.subr.bf16.mxu0 0
      %960 = vmatpush1.bf16.msra.mxu0 0
      %961 = vmatprep.subr.bf16.mxu0 0
      %962 = vmatpush1.bf16.msra.mxu0 0
      %963 = vmatprep.subr.bf16.mxu0 0
      %964 = vmatpush1.bf16.msra.mxu0 0
      %965 = vmatprep.mubr.bf16.mxu0 0
      %966 = vmatmul.mubr.bf16.gmra.mrb[0].mxu0 %v877
      %v967 = vpop.f32.mrb[0].mxu0
      %v968 = vadd.f32 0.0, %v967
      %v969 = vpop.f32.mrb[0].mxu0
      %v970 = vpop.f32.mrb[0].mxu0
      %v971 = vadd.f32 0.0, %v970
      %v972 = vpop.f32.mrb[0].mxu0
      %973 = vmatprep.mubr.bf16.mxu0 0
      %974 = vmatmul.mubr.bf16.gmra.mrb[0].mxu0 %v878
      %v975 = vpop.f32.mrb[0].mxu0
      %v976 = vadd.f32 0.0, %v975
      %v977 = vpop.f32.mrb[0].mxu0
      %v978 = vpop.f32.mrb[0].mxu0
      %v979 = vadd.f32 0.0, %v978
      %v980 = vpop.f32.mrb[0].mxu0
      %981 = vmatprep.mubr.bf16.mxu0 0
      %982 = vmatmul.mubr.bf16.gmra.mrb[0].mxu0 %v879
      %v983 = vpop.f32.mrb[0].mxu0
      %v984 = vadd.f32 0.0, %v983
      %v985 = vpop.f32.mrb[0].mxu0
      %v986 = vpop.f32.mrb[0].mxu0
      %v987 = vadd.f32 0.0, %v986
      %v988 = vpop.f32.mrb[0].mxu0
      %989 = vmatprep.mubr.bf16.mxu0 0
      %990 = vmatmul.mubr.bf16.gmra.mrb[0].mxu0 %v880
      %v991 = vpop.f32.mrb[0].mxu0
      %v992 = vadd.f32 0.0, %v991
      %v993 = vpop.f32.mrb[0].mxu0
      %v994 = vpop.f32.mrb[0].mxu0
      %v995 = vadd.f32 0.0, %v994
      %v996 = vpop.f32.mrb[0].mxu0
      %997 = vdwg.mxu0
      %v998 = vadd.f32 %v827, %v968
      %v999 = vadd.f32 %v828, %v971
      %v1000 = vadd.f32 %v829, %v976
      %v1001 = vadd.f32 %v830, %v979
      %v1002 = vadd.f32 %v831, %v984
      %v1003 = vadd.f32 %v832, %v987
      %v1004 = vadd.f32 %v833, %v992
      %v1005 = vadd.f32 %v834, %v995
      %s1006 = scalar_lea.vmem %s219, 216
      %v1007 = vld [vmem:[%s1006] sm:$0xf]
      %v1008 = vld [vmem:[%s1006 + $0x8] sm:$0xf]
      %v1009 = vld [vmem:[%s1006 + $0x10] sm:$0xf]
      %v1010 = vld [vmem:[%s1006 + $0x18] sm:$0xf]
      %v1011 = vld [vmem:[%s1006 + $0x20] sm:$0xf]
      %v1012 = vld [vmem:[%s1006 + $0x28] sm:$0xf]
      %v1013 = vld [vmem:[%s1006 + $0x30] sm:$0xf]
      %v1014 = vld [vmem:[%s1006 + $0x38] sm:$0xf]
      %s1015 = scalar_lea.vmem %s1, 256
      %v1016 = vld [vmem:[%s1015] sm:$0xf]
      %v1017 = vld [vmem:[%s1015 + $0x4] sm:$0xf]
      %v1018 = vld [vmem:[%s1015 + $0x8] sm:$0xf]
      %v1019 = vld [vmem:[%s1015 + $0xc] sm:$0xf]
      %v1020 = vld [vmem:[%s1015 + $0x10] sm:$0xf]
      %v1021 = vld [vmem:[%s1015 + $0x14] sm:$0xf]
      %v1022 = vld [vmem:[%s1015 + $0x18] sm:$0xf]
      %v1023 = vld [vmem:[%s1015 + $0x1c] sm:$0xf]
      %v1024 = vld [vmem:[%s1015 + $0x20] sm:$0xf]
      %v1025 = vld [vmem:[%s1015 + $0x24] sm:$0xf]
      %v1026 = vld [vmem:[%s1015 + $0x28] sm:$0xf]
      %v1027 = vld [vmem:[%s1015 + $0x2c] sm:$0xf]
      %v1028 = vld [vmem:[%s1015 + $0x30] sm:$0xf]
      %v1029 = vld [vmem:[%s1015 + $0x34] sm:$0xf]
      %v1030 = vld [vmem:[%s1015 + $0x38] sm:$0xf]
      %v1031 = vld [vmem:[%s1015 + $0x3c] sm:$0xf]
      %v1040 = vunpack.c.l.b16 %v1007
      %v1041 = vunpack.c.l.b16 %v1008
      %v1042 = vunpack.c.l.b16 %v1009
      %v1043 = vunpack.c.l.b16 %v1010
      %v1044 = vunpack.c.l.b16 %v1011
      %v1045 = vunpack.c.l.b16 %v1012
      %v1046 = vunpack.c.l.b16 %v1013
      %v1047 = vunpack.c.l.b16 %v1014
      %v1048 = vpack.c.b16 %v1041, %v1040
      %v1049 = vpack.c.b16 %v1043, %v1042
      %v1050 = vpack.c.b16 %v1045, %v1044
      %v1051 = vpack.c.b16 %v1047, %v1046
      %v1072 = vunpack.c.l.b16 %v1016
      %v1073 = vunpack.c.l.b16 %v1017
      %v1074 = vunpack.c.l.b16 %v1018
      %v1075 = vunpack.c.l.b16 %v1019
      %v1076 = vunpack.c.l.b16 %v1020
      %v1077 = vunpack.c.l.b16 %v1021
      %v1078 = vunpack.c.l.b16 %v1022
      %v1079 = vunpack.c.l.b16 %v1023
      %v1080 = vunpack.c.l.b16 %v1024
      %v1081 = vunpack.c.l.b16 %v1025
      %v1082 = vunpack.c.l.b16 %v1026
      %v1083 = vunpack.c.l.b16 %v1027
      %v1084 = vunpack.c.l.b16 %v1028
      %v1085 = vunpack.c.l.b16 %v1029
      %v1086 = vunpack.c.l.b16 %v1030
      %v1087 = vunpack.c.l.b16 %v1031
      %v1088 = vpack.c.b16 %v1073, %v1072
      %v1089 = vpack.c.b16 %v1075, %v1074
      %v1090 = vpack.c.b16 %v1077, %v1076
      %v1091 = vpack.c.b16 %v1079, %v1078
      %v1092 = vpack.c.b16 %v1081, %v1080
      %v1093 = vpack.c.b16 %v1083, %v1082
      %v1094 = vpack.c.b16 %v1085, %v1084
      %v1095 = vpack.c.b16 %v1087, %v1086
      %1104 = vmatprep.subr.bf16.mxu0 0
      %1105 = vmatpush1.bf16.msra.mxu0 %v1088
      %1106 = vmatprep.subr.bf16.mxu0 0
      %1107 = vmatpush1.bf16.msra.mxu0 %v1089
      %1108 = vmatprep.subr.bf16.mxu0 0
      %1109 = vmatpush1.bf16.msra.mxu0 %v1090
      %1110 = vmatprep.subr.bf16.mxu0 0
      %1111 = vmatpush1.bf16.msra.mxu0 %v1091
      %1112 = vmatprep.subr.bf16.mxu0 0
      %1113 = vmatpush1.bf16.msra.mxu0 %v1092
      %1114 = vmatprep.subr.bf16.mxu0 0
      %1115 = vmatpush1.bf16.msra.mxu0 %v1093
      %1116 = vmatprep.subr.bf16.mxu0 0
      %1117 = vmatpush1.bf16.msra.mxu0 %v1094
      %1118 = vmatprep.subr.bf16.mxu0 0
      %1119 = vmatpush1.bf16.msra.mxu0 %v1095
      %1120 = vmatprep.subr.bf16.mxu0 0
      %1121 = vmatpush1.bf16.msra.mxu0 0
      %1122 = vmatprep.subr.bf16.mxu0 0
      %1123 = vmatpush1.bf16.msra.mxu0 0
      %1124 = vmatprep.subr.bf16.mxu0 0
      %1125 = vmatpush1.bf16.msra.mxu0 0
      %1126 = vmatprep.subr.bf16.mxu0 0
      %1127 = vmatpush1.bf16.msra.mxu0 0
      %1128 = vmatprep.subr.bf16.mxu0 0
      %1129 = vmatpush1.bf16.msra.mxu0 0
      %1130 = vmatprep.subr.bf16.mxu0 0
      %1131 = vmatpush1.bf16.msra.mxu0 0
      %1132 = vmatprep.subr.bf16.mxu0 0
      %1133 = vmatpush1.bf16.msra.mxu0 0
      %1134 = vmatprep.subr.bf16.mxu0 0
      %1135 = vmatpush1.bf16.msra.mxu0 0
      %1136 = vmatprep.mubr.bf16.mxu0 0
      %1137 = vmatmul.mubr.bf16.gmra.mrb[0].mxu0 %v1048
      %v1138 = vpop.f32.mrb[0].mxu0
      %v1139 = vadd.f32 0.0, %v1138
      %v1140 = vpop.f32.mrb[0].mxu0
      %v1141 = vpop.f32.mrb[0].mxu0
      %v1142 = vadd.f32 0.0, %v1141
      %v1143 = vpop.f32.mrb[0].mxu0
      %1144 = vmatprep.mubr.bf16.mxu0 0
      %1145 = vmatmul.mubr.bf16.gmra.mrb[0].mxu0 %v1049
      %v1146 = vpop.f32.mrb[0].mxu0
      %v1147 = vadd.f32 0.0, %v1146
      %v1148 = vpop.f32.mrb[0].mxu0
      %v1149 = vpop.f32.mrb[0].mxu0
      %v1150 = vadd.f32 0.0, %v1149
      %v1151 = vpop.f32.mrb[0].mxu0
      %1152 = vmatprep.mubr.bf16.mxu0 0
      %1153 = vmatmul.mubr.bf16.gmra.mrb[0].mxu0 %v1050
      %v1154 = vpop.f32.mrb[0].mxu0
      %v1155 = vadd.f32 0.0, %v1154
      %v1156 = vpop.f32.mrb[0].mxu0
      %v1157 = vpop.f32.mrb[0].mxu0
      %v1158 = vadd.f32 0.0, %v1157
      %v1159 = vpop.f32.mrb[0].mxu0
      %1160 = vmatprep.mubr.bf16.mxu0 0
      %1161 = vmatmul.mubr.bf16.gmra.mrb[0].mxu0 %v1051
      %v1162 = vpop.f32.mrb[0].mxu0
      %v1163 = vadd.f32 0.0, %v1162
      %v1164 = vpop.f32.mrb[0].mxu0
      %v1165 = vpop.f32.mrb[0].mxu0
      %v1166 = vadd.f32 0.0, %v1165
      %v1167 = vpop.f32.mrb[0].mxu0
      %1168 = vdwg.mxu0
      %v1169 = vadd.f32 %v998, %v1139
      %v1170 = vadd.f32 %v999, %v1142
      %v1171 = vadd.f32 %v1000, %v1147
      %v1172 = vadd.f32 %v1001, %v1150
      %v1173 = vadd.f32 %v1002, %v1155
      %v1174 = vadd.f32 %v1003, %v1158
      %v1175 = vadd.f32 %v1004, %v1163
      %v1176 = vadd.f32 %v1005, %v1166
      %v1177 = vld [vmem:[%s835] sm:$0xf]
      %v1178 = vld [vmem:[%s835 + $0x4] sm:$0x1]
      %v1179 = vld [vmem:[%s835 + $0x8] sm:$0xf]
      %v1180 = vld [vmem:[%s835 + $0xc] sm:$0x1]
      %v1181 = vld [vmem:[%s835 + $0x10] sm:$0xf]
      %v1182 = vld [vmem:[%s835 + $0x14] sm:$0x1]
      %v1183 = vld [vmem:[%s835 + $0x18] sm:$0xf]
      %v1184 = vld [vmem:[%s835 + $0x1c] sm:$0x1]
      %v1185 = vld [vmem:[%s835 + $0x20] sm:$0xf]
      %v1186 = vld [vmem:[%s835 + $0x24] sm:$0x1]
      %v1187 = vld [vmem:[%s835 + $0x28] sm:$0xf]
      %v1188 = vld [vmem:[%s835 + $0x2c] sm:$0x1]
      %v1189 = vld [vmem:[%s835 + $0x30] sm:$0xf]
      %v1190 = vld [vmem:[%s835 + $0x34] sm:$0x1]
      %v1191 = vld [vmem:[%s835 + $0x38] sm:$0xf]
      %v1192 = vld [vmem:[%s835 + $0x3c] sm:$0x1]
      %v1194 = vshrl.u32 %v1177, 16
      %v1196 = vrot.slane %v1194, 4
      %v1197 = vshll.u32 %v1177, 16
      %v1199 = vrot.slane %v1197, 5
      %v1200 = vor.u32 %v1196, %v1199
      %v1201 = vrot.slane %v1200, 4
      %v1203 = vshll.u32 %v1178, 16
      %v1205 = vrot.slane %v1203, 5
      %v1206 = vsel %vm568, %v1201, %v1205
      %v1208 = vshrl.u32 %v1179, 16
      %v1210 = vrot.slane %v1208, 4
      %v1211 = vshll.u32 %v1179, 16
      %v1213 = vrot.slane %v1211, 5
      %v1214 = vor.u32 %v1210, %v1213
      %v1215 = vrot.slane %v1214, 4
      %v1217 = vshll.u32 %v1180, 16
      %v1219 = vrot.slane %v1217, 5
      %v1220 = vsel %vm568, %v1215, %v1219
      %v1222 = vshrl.u32 %v1181, 16
      %v1224 = vrot.slane %v1222, 4
      %v1225 = vshll.u32 %v1181, 16
      %v1227 = vrot.slane %v1225, 5
      %v1228 = vor.u32 %v1224, %v1227
      %v1229 = vrot.slane %v1228, 4
      %v1231 = vshll.u32 %v1182, 16
      %v1233 = vrot.slane %v1231, 5
      %v1234 = vsel %vm568, %v1229, %v1233
      %v1236 = vshrl.u32 %v1183, 16
      %v1238 = vrot.slane %v1236, 4
      %v1239 = vshll.u32 %v1183, 16
      %v1241 = vrot.slane %v1239, 5
      %v1242 = vor.u32 %v1238, %v1241
      %v1243 = vrot.slane %v1242, 4
      %v1245 = vshll.u32 %v1184, 16
      %v1247 = vrot.slane %v1245, 5
      %v1248 = vsel %vm568, %v1243, %v1247
      %v1250 = vshrl.u32 %v1185, 16
      %v1252 = vrot.slane %v1250, 4
      %v1253 = vshll.u32 %v1185, 16
      %v1255 = vrot.slane %v1253, 5
      %v1256 = vor.u32 %v1252, %v1255
      %v1257 = vrot.slane %v1256, 4
      %v1259 = vshll.u32 %v1186, 16
      %v1261 = vrot.slane %v1259, 5
      %v1262 = vsel %vm568, %v1257, %v1261
      %v1264 = vshrl.u32 %v1187, 16
      %v1266 = vrot.slane %v1264, 4
      %v1267 = vshll.u32 %v1187, 16
      %v1269 = vrot.slane %v1267, 5
      %v1270 = vor.u32 %v1266, %v1269
      %v1271 = vrot.slane %v1270, 4
      %v1273 = vshll.u32 %v1188, 16
      %v1275 = vrot.slane %v1273, 5
      %v1276 = vsel %vm568, %v1271, %v1275
      %v1278 = vshrl.u32 %v1189, 16
      %v1280 = vrot.slane %v1278, 4
      %v1281 = vshll.u32 %v1189, 16
      %v1283 = vrot.slane %v1281, 5
      %v1284 = vor.u32 %v1280, %v1283
      %v1285 = vrot.slane %v1284, 4
      %v1287 = vshll.u32 %v1190, 16
      %v1289 = vrot.slane %v1287, 5
      %v1290 = vsel %vm568, %v1285, %v1289
      %v1292 = vshrl.u32 %v1191, 16
      %v1294 = vrot.slane %v1292, 4
      %v1295 = vshll.u32 %v1191, 16
      %v1297 = vrot.slane %v1295, 5
      %v1298 = vor.u32 %v1294, %v1297
      %v1299 = vrot.slane %v1298, 4
      %v1301 = vshll.u32 %v1192, 16
      %v1303 = vrot.slane %v1301, 5
      %v1304 = vsel %vm568, %v1299, %v1303
      %s1305 = scalar_lea.vmem %s1, 320
      %v1306 = vld [vmem:[%s1305] sm:$0xf]
      %v1307 = vld [vmem:[%s1305 + $0x4] sm:$0xf]
      %v1308 = vld [vmem:[%s1305 + $0x8] sm:$0xf]
      %v1309 = vld [vmem:[%s1305 + $0xc] sm:$0xf]
      %v1310 = vld [vmem:[%s1305 + $0x10] sm:$0xf]
      %v1311 = vld [vmem:[%s1305 + $0x14] sm:$0xf]
      %v1312 = vld [vmem:[%s1305 + $0x18] sm:$0xf]
      %v1313 = vld [vmem:[%s1305 + $0x1c] sm:$0xf]
      %v1314 = vld [vmem:[%s1305 + $0x20] sm:$0xf]
      %v1315 = vld [vmem:[%s1305 + $0x24] sm:$0xf]
      %v1316 = vld [vmem:[%s1305 + $0x28] sm:$0xf]
      %v1317 = vld [vmem:[%s1305 + $0x2c] sm:$0xf]
      %v1318 = vld [vmem:[%s1305 + $0x30] sm:$0xf]
      %v1319 = vld [vmem:[%s1305 + $0x34] sm:$0xf]
      %v1320 = vld [vmem:[%s1305 + $0x38] sm:$0xf]
      %v1321 = vld [vmem:[%s1305 + $0x3c] sm:$0xf]
      %v1322 = vunpack.c.l.b16 %v1206
      %v1323 = vunpack.c.l.b16 %v1220
      %v1324 = vunpack.c.l.b16 %v1234
      %v1325 = vunpack.c.l.b16 %v1248
      %v1326 = vunpack.c.l.b16 %v1262
      %v1327 = vunpack.c.l.b16 %v1276
      %v1328 = vunpack.c.l.b16 %v1290
      %v1329 = vunpack.c.l.b16 %v1304
      %v1330 = vpack.c.b16 %v1323, %v1322
      %v1331 = vpack.c.b16 %v1325, %v1324
      %v1332 = vpack.c.b16 %v1327, %v1326
      %v1333 = vpack.c.b16 %v1329, %v1328
      %v1354 = vunpack.c.l.b16 %v1306
      %v1355 = vunpack.c.l.b16 %v1307
      %v1356 = vunpack.c.l.b16 %v1308
      %v1357 = vunpack.c.l.b16 %v1309
      %v1358 = vunpack.c.l.b16 %v1310
      %v1359 = vunpack.c.l.b16 %v1311
      %v1360 = vunpack.c.l.b16 %v1312
      %v1361 = vunpack.c.l.b16 %v1313
      %v1362 = vunpack.c.l.b16 %v1314
      %v1363 = vunpack.c.l.b16 %v1315
      %v1364 = vunpack.c.l.b16 %v1316
      %v1365 = vunpack.c.l.b16 %v1317
      %v1366 = vunpack.c.l.b16 %v1318
      %v1367 = vunpack.c.l.b16 %v1319
      %v1368 = vunpack.c.l.b16 %v1320
      %v1369 = vunpack.c.l.b16 %v1321
      %v1370 = vpack.c.b16 %v1355, %v1354
      %v1371 = vpack.c.b16 %v1357, %v1356
      %v1372 = vpack.c.b16 %v1359, %v1358
      %v1373 = vpack.c.b16 %v1361, %v1360
      %v1374 = vpack.c.b16 %v1363, %v1362
      %v1375 = vpack.c.b16 %v1365, %v1364
      %v1376 = vpack.c.b16 %v1367, %v1366
      %v1377 = vpack.c.b16 %v1369, %v1368
      %1386 = vmatprep.subr.bf16.mxu0 0
      %1387 = vmatpush1.bf16.msra.mxu0 %v1370
      %1388 = vmatprep.subr.bf16.mxu0 0
      %1389 = vmatpush1.bf16.msra.mxu0 %v1371
      %1390 = vmatprep.subr.bf16.mxu0 0
      %1391 = vmatpush1.bf16.msra.mxu0 %v1372
      %1392 = vmatprep.subr.bf16.mxu0 0
      %1393 = vmatpush1.bf16.msra.mxu0 %v1373
      %1394 = vmatprep.subr.bf16.mxu0 0
      %1395 = vmatpush1.bf16.msra.mxu0 %v1374
      %1396 = vmatprep.subr.bf16.mxu0 0
      %1397 = vmatpush1.bf16.msra.mxu0 %v1375
      %1398 = vmatprep.subr.bf16.mxu0 0
      %1399 = vmatpush1.bf16.msra.mxu0 %v1376
      %1400 = vmatprep.subr.bf16.mxu0 0
      %1401 = vmatpush1.bf16.msra.mxu0 %v1377
      %1402 = vmatprep.subr.bf16.mxu0 0
      %1403 = vmatpush1.bf16.msra.mxu0 0
      %1404 = vmatprep.subr.bf16.mxu0 0
      %1405 = vmatpush1.bf16.msra.mxu0 0
      %1406 = vmatprep.subr.bf16.mxu0 0
      %1407 = vmatpush1.bf16.msra.mxu0 0
      %1408 = vmatprep.subr.bf16.mxu0 0
      %1409 = vmatpush1.bf16.msra.mxu0 0
      %1410 = vmatprep.subr.bf16.mxu0 0
      %1411 = vmatpush1.bf16.msra.mxu0 0
      %1412 = vmatprep.subr.bf16.mxu0 0
      %1413 = vmatpush1.bf16.msra.mxu0 0
      %1414 = vmatprep.subr.bf16.mxu0 0
      %1415 = vmatpush1.bf16.msra.mxu0 0
      %1416 = vmatprep.subr.bf16.mxu0 0
      %1417 = vmatpush1.bf16.msra.mxu0 0
      %1418 = vmatprep.mubr.bf16.mxu0 0
      %1419 = vmatmul.mubr.bf16.gmra.mrb[0].mxu0 %v1330
      %v1420 = vpop.f32.mrb[0].mxu0
      %v1421 = vadd.f32 0.0, %v1420
      %v1422 = vpop.f32.mrb[0].mxu0
      %v1423 = vpop.f32.mrb[0].mxu0
      %v1424 = vadd.f32 0.0, %v1423
      %v1425 = vpop.f32.mrb[0].mxu0
      %1426 = vmatprep.mubr.bf16.mxu0 0
      %1427 = vmatmul.mubr.bf16.gmra.mrb[0].mxu0 %v1331
      %v1428 = vpop.f32.mrb[0].mxu0
      %v1429 = vadd.f32 0.0, %v1428
      %v1430 = vpop.f32.mrb[0].mxu0
      %v1431 = vpop.f32.mrb[0].mxu0
      %v1432 = vadd.f32 0.0, %v1431
      %v1433 = vpop.f32.mrb[0].mxu0
      %1434 = vmatprep.mubr.bf16.mxu0 0
      %1435 = vmatmul.mubr.bf16.gmra.mrb[0].mxu0 %v1332
      %v1436 = vpop.f32.mrb[0].mxu0
      %v1437 = vadd.f32 0.0, %v1436
      %v1438 = vpop.f32.mrb[0].mxu0
      %v1439 = vpop.f32.mrb[0].mxu0
      %v1440 = vadd.f32 0.0, %v1439
      %v1441 = vpop.f32.mrb[0].mxu0
      %1442 = vmatprep.mubr.bf16.mxu0 0
      %1443 = vmatmul.mubr.bf16.gmra.mrb[0].mxu0 %v1333
      %v1444 = vpop.f32.mrb[0].mxu0
      %v1445 = vadd.f32 0.0, %v1444
      %v1446 = vpop.f32.mrb[0].mxu0
      %v1447 = vpop.f32.mrb[0].mxu0
      %v1448 = vadd.f32 0.0, %v1447
      %v1449 = vpop.f32.mrb[0].mxu0
      %1450 = vdwg.mxu0
      %v1451 = vadd.f32 %v1169, %v1421
      %v1452 = vadd.f32 %v1170, %v1424
      %v1453 = vadd.f32 %v1171, %v1429
      %v1454 = vadd.f32 %v1172, %v1432
      %v1455 = vadd.f32 %v1173, %v1437
      %v1456 = vadd.f32 %v1174, %v1440
      %v1457 = vadd.f32 %v1175, %v1445
      %v1458 = vadd.f32 %v1176, %v1448
      %s1459 = scalar_lea.vmem %s219, 8
      %v1460 = vld [vmem:[%s1459] sm:$0xf]
      %v1461 = vld [vmem:[%s1459 + $0x8] sm:$0xf]
      %v1462 = vld [vmem:[%s1459 + $0x10] sm:$0xf]
      %v1463 = vld [vmem:[%s1459 + $0x18] sm:$0xf]
      %v1464 = vld [vmem:[%s1459 + $0x20] sm:$0xf]
      %v1465 = vld [vmem:[%s1459 + $0x28] sm:$0xf]
      %v1466 = vld [vmem:[%s1459 + $0x30] sm:$0xf]
      %v1467 = vld [vmem:[%s1459 + $0x38] sm:$0xf]
      %s1468 = scalar_lea.vmem %s1, 384
      %v1469 = vld [vmem:[%s1468] sm:$0xf]
      %v1470 = vld [vmem:[%s1468 + $0x4] sm:$0xf]
      %v1471 = vld [vmem:[%s1468 + $0x8] sm:$0xf]
      %v1472 = vld [vmem:[%s1468 + $0xc] sm:$0xf]
      %v1473 = vld [vmem:[%s1468 + $0x10] sm:$0xf]
      %v1474 = vld [vmem:[%s1468 + $0x14] sm:$0xf]
      %v1475 = vld [vmem:[%s1468 + $0x18] sm:$0xf]
      %v1476 = vld [vmem:[%s1468 + $0x1c] sm:$0xf]
      %v1477 = vld [vmem:[%s1468 + $0x20] sm:$0xf]
      %v1478 = vld [vmem:[%s1468 + $0x24] sm:$0xf]
      %v1479 = vld [vmem:[%s1468 + $0x28] sm:$0xf]
      %v1480 = vld [vmem:[%s1468 + $0x2c] sm:$0xf]
      %v1481 = vld [vmem:[%s1468 + $0x30] sm:$0xf]
      %v1482 = vld [vmem:[%s1468 + $0x34] sm:$0xf]
      %v1483 = vld [vmem:[%s1468 + $0x38] sm:$0xf]
      %v1484 = vld [vmem:[%s1468 + $0x3c] sm:$0xf]
      %v1493 = vunpack.c.l.b16 %v1460
      %v1494 = vunpack.c.l.b16 %v1461
      %v1495 = vunpack.c.l.b16 %v1462
      %v1496 = vunpack.c.l.b16 %v1463
      %v1497 = vunpack.c.l.b16 %v1464
      %v1498 = vunpack.c.l.b16 %v1465
      %v1499 = vunpack.c.l.b16 %v1466
      %v1500 = vunpack.c.l.b16 %v1467
      %v1501 = vpack.c.b16 %v1494, %v1493
      %v1502 = vpack.c.b16 %v1496, %v1495
      %v1503 = vpack.c.b16 %v1498, %v1497
      %v1504 = vpack.c.b16 %v1500, %v1499
      %v1525 = vunpack.c.l.b16 %v1469
      %v1526 = vunpack.c.l.b16 %v1470
      %v1527 = vunpack.c.l.b16 %v1471
      %v1528 = vunpack.c.l.b16 %v1472
      %v1529 = vunpack.c.l.b16 %v1473
      %v1530 = vunpack.c.l.b16 %v1474
      %v1531 = vunpack.c.l.b16 %v1475
      %v1532 = vunpack.c.l.b16 %v1476
      %v1533 = vunpack.c.l.b16 %v1477
      %v1534 = vunpack.c.l.b16 %v1478
      %v1535 = vunpack.c.l.b16 %v1479
      %v1536 = vunpack.c.l.b16 %v1480
      %v1537 = vunpack.c.l.b16 %v1481
      %v1538 = vunpack.c.l.b16 %v1482
      %v1539 = vunpack.c.l.b16 %v1483
      %v1540 = vunpack.c.l.b16 %v1484
      %v1541 = vpack.c.b16 %v1526, %v1525
      %v1542 = vpack.c.b16 %v1528, %v1527
      %v1543 = vpack.c.b16 %v1530, %v1529
      %v1544 = vpack.c.b16 %v1532, %v1531
      %v1545 = vpack.c.b16 %v1534, %v1533
      %v1546 = vpack.c.b16 %v1536, %v1535
      %v1547 = vpack.c.b16 %v1538, %v1537
      %v1548 = vpack.c.b16 %v1540, %v1539
      %1557 = vmatprep.subr.bf16.mxu0 0
      %1558 = vmatpush1.bf16.msra.mxu0 %v1541
      %1559 = vmatprep.subr.bf16.mxu0 0
      %1560 = vmatpush1.bf16.msra.mxu0 %v1542
      %1561 = vmatprep.subr.bf16.mxu0 0
      %1562 = vmatpush1.bf16.msra.mxu0 %v1543
      %1563 = vmatprep.subr.bf16.mxu0 0
      %1564 = vmatpush1.bf16.msra.mxu0 %v1544
      %1565 = vmatprep.subr.bf16.mxu0 0
      %1566 = vmatpush1.bf16.msra.mxu0 %v1545
      %1567 = vmatprep.subr.bf16.mxu0 0
      %1568 = vmatpush1.bf16.msra.mxu0 %v1546
      %1569 = vmatprep.subr.bf16.mxu0 0
      %1570 = vmatpush1.bf16.msra.mxu0 %v1547
      %1571 = vmatprep.subr.bf16.mxu0 0
      %1572 = vmatpush1.bf16.msra.mxu0 %v1548
      %1573 = vmatprep.subr.bf16.mxu0 0
      %1574 = vmatpush1.bf16.msra.mxu0 0
      %1575 = vmatprep.subr.bf16.mxu0 0
      %1576 = vmatpush1.bf16.msra.mxu0 0
      %1577 = vmatprep.subr.bf16.mxu0 0
      %1578 = vmatpush1.bf16.msra.mxu0 0
      %1579 = vmatprep.subr.bf16.mxu0 0
      %1580 = vmatpush1.bf16.msra.mxu0 0
      %1581 = vmatprep.subr.bf16.mxu0 0
      %1582 = vmatpush1.bf16.msra.mxu0 0
      %1583 = vmatprep.subr.bf16.mxu0 0
      %1584 = vmatpush1.bf16.msra.mxu0 0
      %1585 = vmatprep.subr.bf16.mxu0 0
      %1586 = vmatpush1.bf16.msra.mxu0 0
      %1587 = vmatprep.subr.bf16.mxu0 0
      %1588 = vmatpush1.bf16.msra.mxu0 0
      %1589 = vmatprep.mubr.bf16.mxu0 0
      %1590 = vmatmul.mubr.bf16.gmra.mrb[0].mxu0 %v1501
      %v1591 = vpop.f32.mrb[0].mxu0
      %v1592 = vadd.f32 0.0, %v1591
      %v1593 = vpop.f32.mrb[0].mxu0
      %v1594 = vpop.f32.mrb[0].mxu0
      %v1595 = vadd.f32 0.0, %v1594
      %v1596 = vpop.f32.mrb[0].mxu0
      %1597 = vmatprep.mubr.bf16.mxu0 0
      %1598 = vmatmul.mubr.bf16.gmra.mrb[0].mxu0 %v1502
      %v1599 = vpop.f32.mrb[0].mxu0
      %v1600 = vadd.f32 0.0, %v1599
      %v1601 = vpop.f32.mrb[0].mxu0
      %v1602 = vpop.f32.mrb[0].mxu0
      %v1603 = vadd.f32 0.0, %v1602
      %v1604 = vpop.f32.mrb[0].mxu0
      %1605 = vmatprep.mubr.bf16.mxu0 0
      %1606 = vmatmul.mubr.bf16.gmra.mrb[0].mxu0 %v1503
      %v1607 = vpop.f32.mrb[0].mxu0
      %v1608 = vadd.f32 0.0, %v1607
      %v1609 = vpop.f32.mrb[0].mxu0
      %v1610 = vpop.f32.mrb[0].mxu0
      %v1611 = vadd.f32 0.0, %v1610
      %v1612 = vpop.f32.mrb[0].mxu0
      %1613 = vmatprep.mubr.bf16.mxu0 0
      %1614 = vmatmul.mubr.bf16.gmra.mrb[0].mxu0 %v1504
      %v1615 = vpop.f32.mrb[0].mxu0
      %v1616 = vadd.f32 0.0, %v1615
      %v1617 = vpop.f32.mrb[0].mxu0
      %v1618 = vpop.f32.mrb[0].mxu0
      %v1619 = vadd.f32 0.0, %v1618
      %v1620 = vpop.f32.mrb[0].mxu0
      %1621 = vdwg.mxu0
      %v1622 = vadd.f32 %v1451, %v1592
      %v1623 = vadd.f32 %v1452, %v1595
      %v1624 = vadd.f32 %v1453, %v1600
      %v1625 = vadd.f32 %v1454, %v1603
      %v1626 = vadd.f32 %v1455, %v1608
      %v1627 = vadd.f32 %v1456, %v1611
      %v1628 = vadd.f32 %v1457, %v1616
      %v1629 = vadd.f32 %v1458, %v1619
      %s1630 = scalar_lea.vmem %s219, 80
      %v1631 = vld [vmem:[%s1630] sm:$0xf]
      %v1632 = vld [vmem:[%s1630 + $0x8] sm:$0xf]
      %v1633 = vld [vmem:[%s1630 + $0x10] sm:$0xf]
      %v1634 = vld [vmem:[%s1630 + $0x18] sm:$0xf]
      %v1635 = vld [vmem:[%s1630 + $0x20] sm:$0xf]
      %v1636 = vld [vmem:[%s1630 + $0x28] sm:$0xf]
      %v1637 = vld [vmem:[%s1630 + $0x30] sm:$0xf]
      %v1638 = vld [vmem:[%s1630 + $0x38] sm:$0xf]
      %s1639 = scalar_lea.vmem %s1, 448
      %v1640 = vld [vmem:[%s1639] sm:$0xf]
      %v1641 = vld [vmem:[%s1639 + $0x4] sm:$0xf]
      %v1642 = vld [vmem:[%s1639 + $0x8] sm:$0xf]
      %v1643 = vld [vmem:[%s1639 + $0xc] sm:$0xf]
      %v1644 = vld [vmem:[%s1639 + $0x10] sm:$0xf]
      %v1645 = vld [vmem:[%s1639 + $0x14] sm:$0xf]
      %v1646 = vld [vmem:[%s1639 + $0x18] sm:$0xf]
      %v1647 = vld [vmem:[%s1639 + $0x1c] sm:$0xf]
      %v1648 = vld [vmem:[%s1639 + $0x20] sm:$0xf]
      %v1649 = vld [vmem:[%s1639 + $0x24] sm:$0xf]
      %v1650 = vld [vmem:[%s1639 + $0x28] sm:$0xf]
      %v1651 = vld [vmem:[%s1639 + $0x2c] sm:$0xf]
      %v1652 = vld [vmem:[%s1639 + $0x30] sm:$0xf]
      %v1653 = vld [vmem:[%s1639 + $0x34] sm:$0xf]
      %v1654 = vld [vmem:[%s1639 + $0x38] sm:$0xf]
      %v1655 = vld [vmem:[%s1639 + $0x3c] sm:$0xf]
      %v1664 = vunpack.c.l.b16 %v1631
      %v1665 = vunpack.c.l.b16 %v1632
      %v1666 = vunpack.c.l.b16 %v1633
      %v1667 = vunpack.c.l.b16 %v1634
      %v1668 = vunpack.c.l.b16 %v1635
      %v1669 = vunpack.c.l.b16 %v1636
      %v1670 = vunpack.c.l.b16 %v1637
      %v1671 = vunpack.c.l.b16 %v1638
      %v1672 = vpack.c.b16 %v1665, %v1664
      %v1673 = vpack.c.b16 %v1667, %v1666
      %v1674 = vpack.c.b16 %v1669, %v1668
      %v1675 = vpack.c.b16 %v1671, %v1670
      %v1696 = vunpack.c.l.b16 %v1640
      %v1697 = vunpack.c.l.b16 %v1641
      %v1698 = vunpack.c.l.b16 %v1642
      %v1699 = vunpack.c.l.b16 %v1643
      %v1700 = vunpack.c.l.b16 %v1644
      %v1701 = vunpack.c.l.b16 %v1645
      %v1702 = vunpack.c.l.b16 %v1646
      %v1703 = vunpack.c.l.b16 %v1647
      %v1704 = vunpack.c.l.b16 %v1648
      %v1705 = vunpack.c.l.b16 %v1649
      %v1706 = vunpack.c.l.b16 %v1650
      %v1707 = vunpack.c.l.b16 %v1651
      %v1708 = vunpack.c.l.b16 %v1652
      %v1709 = vunpack.c.l.b16 %v1653
      %v1710 = vunpack.c.l.b16 %v1654
      %v1711 = vunpack.c.l.b16 %v1655
      %v1712 = vpack.c.b16 %v1697, %v1696
      %v1713 = vpack.c.b16 %v1699, %v1698
      %v1714 = vpack.c.b16 %v1701, %v1700
      %v1715 = vpack.c.b16 %v1703, %v1702
      %v1716 = vpack.c.b16 %v1705, %v1704
      %v1717 = vpack.c.b16 %v1707, %v1706
      %v1718 = vpack.c.b16 %v1709, %v1708
      %v1719 = vpack.c.b16 %v1711, %v1710
      %1728 = vmatprep.subr.bf16.mxu0 0
      %1729 = vmatpush1.bf16.msra.mxu0 %v1712
      %1730 = vmatprep.subr.bf16.mxu0 0
      %1731 = vmatpush1.bf16.msra.mxu0 %v1713
      %1732 = vmatprep.subr.bf16.mxu0 0
      %1733 = vmatpush1.bf16.msra.mxu0 %v1714
      %1734 = vmatprep.subr.bf16.mxu0 0
      %1735 = vmatpush1.bf16.msra.mxu0 %v1715
      %1736 = vmatprep.subr.bf16.mxu0 0
      %1737 = vmatpush1.bf16.msra.mxu0 %v1716
      %1738 = vmatprep.subr.bf16.mxu0 0
      %1739 = vmatpush1.bf16.msra.mxu0 %v1717
      %1740 = vmatprep.subr.bf16.mxu0 0
      %1741 = vmatpush1.bf16.msra.mxu0 %v1718
      %1742 = vmatprep.subr.bf16.mxu0 0
      %1743 = vmatpush1.bf16.msra.mxu0 %v1719
      %1744 = vmatprep.subr.bf16.mxu0 0
      %1745 = vmatpush1.bf16.msra.mxu0 0
      %1746 = vmatprep.subr.bf16.mxu0 0
      %1747 = vmatpush1.bf16.msra.mxu0 0
      %1748 = vmatprep.subr.bf16.mxu0 0
      %1749 = vmatpush1.bf16.msra.mxu0 0
      %1750 = vmatprep.subr.bf16.mxu0 0
      %1751 = vmatpush1.bf16.msra.mxu0 0
      %1752 = vmatprep.subr.bf16.mxu0 0
      %1753 = vmatpush1.bf16.msra.mxu0 0
      %1754 = vmatprep.subr.bf16.mxu0 0
      %1755 = vmatpush1.bf16.msra.mxu0 0
      %1756 = vmatprep.subr.bf16.mxu0 0
      %1757 = vmatpush1.bf16.msra.mxu0 0
      %1758 = vmatprep.subr.bf16.mxu0 0
      %1759 = vmatpush1.bf16.msra.mxu0 0
      %1760 = vmatprep.mubr.bf16.mxu0 0
      %1761 = vmatmul.mubr.bf16.gmra.mrb[0].mxu0 %v1672
      %v1762 = vpop.f32.mrb[0].mxu0
      %v1763 = vadd.f32 0.0, %v1762
      %v1764 = vpop.f32.mrb[0].mxu0
      %v1765 = vpop.f32.mrb[0].mxu0
      %v1766 = vadd.f32 0.0, %v1765
      %v1767 = vpop.f32.mrb[0].mxu0
      %1768 = vmatprep.mubr.bf16.mxu0 0
      %1769 = vmatmul.mubr.bf16.gmra.mrb[0].mxu0 %v1673
      %v1770 = vpop.f32.mrb[0].mxu0
      %v1771 = vadd.f32 0.0, %v1770
      %v1772 = vpop.f32.mrb[0].mxu0
      %v1773 = vpop.f32.mrb[0].mxu0
      %v1774 = vadd.f32 0.0, %v1773
      %v1775 = vpop.f32.mrb[0].mxu0
      %1776 = vmatprep.mubr.bf16.mxu0 0
      %1777 = vmatmul.mubr.bf16.gmra.mrb[0].mxu0 %v1674
      %v1778 = vpop.f32.mrb[0].mxu0
      %v1779 = vadd.f32 0.0, %v1778
      %v1780 = vpop.f32.mrb[0].mxu0
      %v1781 = vpop.f32.mrb[0].mxu0
      %v1782 = vadd.f32 0.0, %v1781
      %v1783 = vpop.f32.mrb[0].mxu0
      %1784 = vmatprep.mubr.bf16.mxu0 0
      %1785 = vmatmul.mubr.bf16.gmra.mrb[0].mxu0 %v1675
      %v1786 = vpop.f32.mrb[0].mxu0
      %v1787 = vadd.f32 0.0, %v1786
      %v1788 = vpop.f32.mrb[0].mxu0
      %v1789 = vpop.f32.mrb[0].mxu0
      %v1790 = vadd.f32 0.0, %v1789
      %v1791 = vpop.f32.mrb[0].mxu0
      %1792 = vdwg.mxu0
      %v1793 = vadd.f32 %v1622, %v1763
      %v1794 = vadd.f32 %v1623, %v1766
      %v1795 = vadd.f32 %v1624, %v1771
      %v1796 = vadd.f32 %v1625, %v1774
      %v1797 = vadd.f32 %v1626, %v1779
      %v1798 = vadd.f32 %v1627, %v1782
      %v1799 = vadd.f32 %v1628, %v1787
      %v1800 = vadd.f32 %v1629, %v1790
      %v1801 = vld [vmem:[%s1459] sm:$0xf]
      %v1802 = vld [vmem:[%s1459 + $0x4] sm:$0x1]
      %v1803 = vld [vmem:[%s1459 + $0x8] sm:$0xf]
      %v1804 = vld [vmem:[%s1459 + $0xc] sm:$0x1]
      %v1805 = vld [vmem:[%s1459 + $0x10] sm:$0xf]
      %v1806 = vld [vmem:[%s1459 + $0x14] sm:$0x1]
      %v1807 = vld [vmem:[%s1459 + $0x18] sm:$0xf]
      %v1808 = vld [vmem:[%s1459 + $0x1c] sm:$0x1]
      %v1809 = vld [vmem:[%s1459 + $0x20] sm:$0xf]
      %v1810 = vld [vmem:[%s1459 + $0x24] sm:$0x1]
      %v1811 = vld [vmem:[%s1459 + $0x28] sm:$0xf]
      %v1812 = vld [vmem:[%s1459 + $0x2c] sm:$0x1]
      %v1813 = vld [vmem:[%s1459 + $0x30] sm:$0xf]
      %v1814 = vld [vmem:[%s1459 + $0x34] sm:$0x1]
      %v1815 = vld [vmem:[%s1459 + $0x38] sm:$0xf]
      %v1816 = vld [vmem:[%s1459 + $0x3c] sm:$0x1]
      %v1818 = vshrl.u32 %v1801, 16
      %v1820 = vrot.slane %v1818, 4
      %v1821 = vshll.u32 %v1801, 16
      %v1823 = vrot.slane %v1821, 5
      %v1824 = vor.u32 %v1820, %v1823
      %v1825 = vrot.slane %v1824, 4
      %v1827 = vshll.u32 %v1802, 16
      %v1829 = vrot.slane %v1827, 5
      %v1830 = vsel %vm568, %v1825, %v1829
      %v1832 = vshrl.u32 %v1803, 16
      %v1834 = vrot.slane %v1832, 4
      %v1835 = vshll.u32 %v1803, 16
      %v1837 = vrot.slane %v1835, 5
      %v1838 = vor.u32 %v1834, %v1837
      %v1839 = vrot.slane %v1838, 4
      %v1841 = vshll.u32 %v1804, 16
      %v1843 = vrot.slane %v1841, 5
      %v1844 = vsel %vm568, %v1839, %v1843
      %v1846 = vshrl.u32 %v1805, 16
      %v1848 = vrot.slane %v1846, 4
      %v1849 = vshll.u32 %v1805, 16
      %v1851 = vrot.slane %v1849, 5
      %v1852 = vor.u32 %v1848, %v1851
      %v1853 = vrot.slane %v1852, 4
      %v1855 = vshll.u32 %v1806, 16
      %v1857 = vrot.slane %v1855, 5
      %v1858 = vsel %vm568, %v1853, %v1857
      %v1860 = vshrl.u32 %v1807, 16
      %v1862 = vrot.slane %v1860, 4
      %v1863 = vshll.u32 %v1807, 16
      %v1865 = vrot.slane %v1863, 5
      %v1866 = vor.u32 %v1862, %v1865
      %v1867 = vrot.slane %v1866, 4
      %v1869 = vshll.u32 %v1808, 16
      %v1871 = vrot.slane %v1869, 5
      %v1872 = vsel %vm568, %v1867, %v1871
      %v1874 = vshrl.u32 %v1809, 16
      %v1876 = vrot.slane %v1874, 4
      %v1877 = vshll.u32 %v1809, 16
      %v1879 = vrot.slane %v1877, 5
      %v1880 = vor.u32 %v1876, %v1879
      %v1881 = vrot.slane %v1880, 4
      %v1883 = vshll.u32 %v1810, 16
      %v1885 = vrot.slane %v1883, 5
      %v1886 = vsel %vm568, %v1881, %v1885
      %v1888 = vshrl.u32 %v1811, 16
      %v1890 = vrot.slane %v1888, 4
      %v1891 = vshll.u32 %v1811, 16
      %v1893 = vrot.slane %v1891, 5
      %v1894 = vor.u32 %v1890, %v1893
      %v1895 = vrot.slane %v1894, 4
      %v1897 = vshll.u32 %v1812, 16
      %v1899 = vrot.slane %v1897, 5
      %v1900 = vsel %vm568, %v1895, %v1899
      %v1902 = vshrl.u32 %v1813, 16
      %v1904 = vrot.slane %v1902, 4
      %v1905 = vshll.u32 %v1813, 16
      %v1907 = vrot.slane %v1905, 5
      %v1908 = vor.u32 %v1904, %v1907
      %v1909 = vrot.slane %v1908, 4
      %v1911 = vshll.u32 %v1814, 16
      %v1913 = vrot.slane %v1911, 5
      %v1914 = vsel %vm568, %v1909, %v1913
      %v1916 = vshrl.u32 %v1815, 16
      %v1918 = vrot.slane %v1916, 4
      %v1919 = vshll.u32 %v1815, 16
      %v1921 = vrot.slane %v1919, 5
      %v1922 = vor.u32 %v1918, %v1921
      %v1923 = vrot.slane %v1922, 4
      %v1925 = vshll.u32 %v1816, 16
      %v1927 = vrot.slane %v1925, 5
      %v1928 = vsel %vm568, %v1923, %v1927
      %s1929 = scalar_lea.vmem %s1, 512
      %v1930 = vld [vmem:[%s1929] sm:$0xf]
      %v1931 = vld [vmem:[%s1929 + $0x4] sm:$0xf]
      %v1932 = vld [vmem:[%s1929 + $0x8] sm:$0xf]
      %v1933 = vld [vmem:[%s1929 + $0xc] sm:$0xf]
      %v1934 = vld [vmem:[%s1929 + $0x10] sm:$0xf]
      %v1935 = vld [vmem:[%s1929 + $0x14] sm:$0xf]
      %v1936 = vld [vmem:[%s1929 + $0x18] sm:$0xf]
      %v1937 = vld [vmem:[%s1929 + $0x1c] sm:$0xf]
      %v1938 = vld [vmem:[%s1929 + $0x20] sm:$0xf]
      %v1939 = vld [vmem:[%s1929 + $0x24] sm:$0xf]
      %v1940 = vld [vmem:[%s1929 + $0x28] sm:$0xf]
      %v1941 = vld [vmem:[%s1929 + $0x2c] sm:$0xf]
      %v1942 = vld [vmem:[%s1929 + $0x30] sm:$0xf]
      %v1943 = vld [vmem:[%s1929 + $0x34] sm:$0xf]
      %v1944 = vld [vmem:[%s1929 + $0x38] sm:$0xf]
      %v1945 = vld [vmem:[%s1929 + $0x3c] sm:$0xf]
      %v1946 = vunpack.c.l.b16 %v1830
      %v1947 = vunpack.c.l.b16 %v1844
      %v1948 = vunpack.c.l.b16 %v1858
      %v1949 = vunpack.c.l.b16 %v1872
      %v1950 = vunpack.c.l.b16 %v1886
      %v1951 = vunpack.c.l.b16 %v1900
      %v1952 = vunpack.c.l.b16 %v1914
      %v1953 = vunpack.c.l.b16 %v1928
      %v1954 = vpack.c.b16 %v1947, %v1946
      %v1955 = vpack.c.b16 %v1949, %v1948
      %v1956 = vpack.c.b16 %v1951, %v1950
      %v1957 = vpack.c.b16 %v1953, %v1952
      %v1978 = vunpack.c.l.b16 %v1930
      %v1979 = vunpack.c.l.b16 %v1931
      %v1980 = vunpack.c.l.b16 %v1932
      %v1981 = vunpack.c.l.b16 %v1933
      %v1982 = vunpack.c.l.b16 %v1934
      %v1983 = vunpack.c.l.b16 %v1935
      %v1984 = vunpack.c.l.b16 %v1936
      %v1985 = vunpack.c.l.b16 %v1937
      %v1986 = vunpack.c.l.b16 %v1938
      %v1987 = vunpack.c.l.b16 %v1939
      %v1988 = vunpack.c.l.b16 %v1940
      %v1989 = vunpack.c.l.b16 %v1941
      %v1990 = vunpack.c.l.b16 %v1942
      %v1991 = vunpack.c.l.b16 %v1943
      %v1992 = vunpack.c.l.b16 %v1944
      %v1993 = vunpack.c.l.b16 %v1945
      %v1994 = vpack.c.b16 %v1979, %v1978
      %v1995 = vpack.c.b16 %v1981, %v1980
      %v1996 = vpack.c.b16 %v1983, %v1982
      %v1997 = vpack.c.b16 %v1985, %v1984
      %v1998 = vpack.c.b16 %v1987, %v1986
      %v1999 = vpack.c.b16 %v1989, %v1988
      %v2000 = vpack.c.b16 %v1991, %v1990
      %v2001 = vpack.c.b16 %v1993, %v1992
      %2010 = vmatprep.subr.bf16.mxu0 0
      %2011 = vmatpush1.bf16.msra.mxu0 %v1994
      %2012 = vmatprep.subr.bf16.mxu0 0
      %2013 = vmatpush1.bf16.msra.mxu0 %v1995
      %2014 = vmatprep.subr.bf16.mxu0 0
      %2015 = vmatpush1.bf16.msra.mxu0 %v1996
      %2016 = vmatprep.subr.bf16.mxu0 0
      %2017 = vmatpush1.bf16.msra.mxu0 %v1997
      %2018 = vmatprep.subr.bf16.mxu0 0
      %2019 = vmatpush1.bf16.msra.mxu0 %v1998
      %2020 = vmatprep.subr.bf16.mxu0 0
      %2021 = vmatpush1.bf16.msra.mxu0 %v1999
      %2022 = vmatprep.subr.bf16.mxu0 0
      %2023 = vmatpush1.bf16.msra.mxu0 %v2000
      %2024 = vmatprep.subr.bf16.mxu0 0
      %2025 = vmatpush1.bf16.msra.mxu0 %v2001
      %2026 = vmatprep.subr.bf16.mxu0 0
      %2027 = vmatpush1.bf16.msra.mxu0 0
      %2028 = vmatprep.subr.bf16.mxu0 0
      %2029 = vmatpush1.bf16.msra.mxu0 0
      %2030 = vmatprep.subr.bf16.mxu0 0
      %2031 = vmatpush1.bf16.msra.mxu0 0
      %2032 = vmatprep.subr.bf16.mxu0 0
      %2033 = vmatpush1.bf16.msra.mxu0 0
      %2034 = vmatprep.subr.bf16.mxu0 0
      %2035 = vmatpush1.bf16.msra.mxu0 0
      %2036 = vmatprep.subr.bf16.mxu0 0
      %2037 = vmatpush1.bf16.msra.mxu0 0
      %2038 = vmatprep.subr.bf16.mxu0 0
      %2039 = vmatpush1.bf16.msra.mxu0 0
      %2040 = vmatprep.subr.bf16.mxu0 0
      %2041 = vmatpush1.bf16.msra.mxu0 0
      %2042 = vmatprep.mubr.bf16.mxu0 0
      %2043 = vmatmul.mubr.bf16.gmra.mrb[0].mxu0 %v1954
      %v2044 = vpop.f32.mrb[0].mxu0
      %v2045 = vadd.f32 0.0, %v2044
      %v2046 = vpop.f32.mrb[0].mxu0
      %v2047 = vpop.f32.mrb[0].mxu0
      %v2048 = vadd.f32 0.0, %v2047
      %v2049 = vpop.f32.mrb[0].mxu0
      %2050 = vmatprep.mubr.bf16.mxu0 0
      %2051 = vmatmul.mubr.bf16.gmra.mrb[0].mxu0 %v1955
      %v2052 = vpop.f32.mrb[0].mxu0
      %v2053 = vadd.f32 0.0, %v2052
      %v2054 = vpop.f32.mrb[0].mxu0
      %v2055 = vpop.f32.mrb[0].mxu0
      %v2056 = vadd.f32 0.0, %v2055
      %v2057 = vpop.f32.mrb[0].mxu0
      %2058 = vmatprep.mubr.bf16.mxu0 0
      %2059 = vmatmul.mubr.bf16.gmra.mrb[0].mxu0 %v1956
      %v2060 = vpop.f32.mrb[0].mxu0
      %v2061 = vadd.f32 0.0, %v2060
      %v2062 = vpop.f32.mrb[0].mxu0
      %v2063 = vpop.f32.mrb[0].mxu0
      %v2064 = vadd.f32 0.0, %v2063
      %v2065 = vpop.f32.mrb[0].mxu0
      %2066 = vmatprep.mubr.bf16.mxu0 0
      %2067 = vmatmul.mubr.bf16.gmra.mrb[0].mxu0 %v1957
      %v2068 = vpop.f32.mrb[0].mxu0
      %v2069 = vadd.f32 0.0, %v2068
      %v2070 = vpop.f32.mrb[0].mxu0
      %v2071 = vpop.f32.mrb[0].mxu0
      %v2072 = vadd.f32 0.0, %v2071
      %v2073 = vpop.f32.mrb[0].mxu0
      %2074 = vdwg.mxu0
      %v2075 = vadd.f32 %v1793, %v2045
      %v2076 = vadd.f32 %v1794, %v2048
      %v2077 = vadd.f32 %v1795, %v2053
      %v2078 = vadd.f32 %v1796, %v2056
      %v2079 = vadd.f32 %v1797, %v2061
      %v2080 = vadd.f32 %v1798, %v2064
      %v2081 = vadd.f32 %v1799, %v2069
      %v2082 = vadd.f32 %v1800, %v2072
      %v2083 = vld [vmem:[%s2] sm:$0x1]
      %v2085 = vlaneseq
      %v2086 = vshrl.u32 %v2085, 7
      %v2087 = vsub.s32 0, %v2086
      %v2088 = vrot.slane %v2083, %v2087
      %v2090 = vadd.f32 %v2075, %v2088
      %v2091 = vadd.f32 %v2076, %v2088
      %v2092 = vadd.f32 %v2077, %v2088
      %v2093 = vadd.f32 %v2078, %v2088
      %v2094 = vadd.f32 %v2079, %v2088
      %v2095 = vadd.f32 %v2080, %v2088
      %v2096 = vadd.f32 %v2081, %v2088
      %v2097 = vadd.f32 %v2082, %v2088
      %v2098 = vmax.f32 %v2090, 0.0
      %v2099 = vmax.f32 %v2091, 0.0
      %v2100 = vmax.f32 %v2092, 0.0
      %v2101 = vmax.f32 %v2093, 0.0
      %v2102 = vmax.f32 %v2094, 0.0
      %v2103 = vmax.f32 %v2095, 0.0
      %v2104 = vmax.f32 %v2096, 0.0
      %v2105 = vmax.f32 %v2097, 0.0
      %v2106 = vmin.f32 %v2098, 6.0
      %v2107 = vmin.f32 %v2099, 6.0
      %v2108 = vmin.f32 %v2100, 6.0
      %v2109 = vmin.f32 %v2101, 6.0
      %v2110 = vmin.f32 %v2102, 6.0
      %v2111 = vmin.f32 %v2103, 6.0
      %v2112 = vmin.f32 %v2104, 6.0
      %v2113 = vmin.f32 %v2105, 6.0
      %2114 = vst [vmem:[#allocation2] sm:$0xff] 0.0
      %2115 = vst [vmem:[#allocation2 + $0x8] sm:$0x3] 0.0
      %2116 = vst [vmem:[#allocation2 + $0x10] sm:$0xff] 0.0
      %2117 = vst [vmem:[#allocation2 + $0x18] sm:$0x3] 0.0
      %2118 = vst [vmem:[#allocation2 + $0x20] sm:$0xff] 0.0
      %2119 = vst [vmem:[#allocation2 + $0x28] sm:$0x3] 0.0
      %2120 = vst [vmem:[#allocation2 + $0x30] sm:$0xff] 0.0
      %2121 = vst [vmem:[#allocation2 + $0x38] sm:$0x3] 0.0
      %2122 = vst [vmem:[#allocation2 + $0x40] sm:$0xff] 0.0
      %2123 = vst [vmem:[#allocation2 + $0x48] sm:$0x3] 0.0
      %2124 = vst [vmem:[#allocation2 + $0x50] sm:$0xff] 0.0
      %2125 = vst [vmem:[#allocation2 + $0x58] sm:$0x3] 0.0
      %2126 = vst [vmem:[#allocation2 + $0x60] sm:$0xff] 0.0
      %2127 = vst [vmem:[#allocation2 + $0x68] sm:$0x3] 0.0
      %2128 = vst [vmem:[#allocation2 + $0x70] sm:$0xff] 0.0
      %2129 = vst [vmem:[#allocation2 + $0x78] sm:$0x3] 0.0
      %2130 = vst [vmem:[#allocation2 + $0x80] sm:$0xff] 0.0
      %2131 = vst [vmem:[#allocation2 + $0x88] sm:$0x3] 0.0
      %2132 = vst [vmem:[#allocation2 + $0x90] sm:$0xff] 0.0
      %2133 = vst [vmem:[#allocation2 + $0x98] sm:$0x3] 0.0
      %s2134 = scalar_lea.vmem [#allocation2], 16
      %2135 = vst [vmem:[%s2134 + $0x1] sm:$0xff] %v2106
      %2136 = vst [vmem:[%s2134 + $0x11] sm:$0xff] %v2107
      %2137 = vst [vmem:[%s2134 + $0x21] sm:$0xff] %v2108
      %2138 = vst [vmem:[%s2134 + $0x31] sm:$0xff] %v2109
      %2139 = vst [vmem:[%s2134 + $0x41] sm:$0xff] %v2110
      %2140 = vst [vmem:[%s2134 + $0x51] sm:$0xff] %v2111
      %2141 = vst [vmem:[%s2134 + $0x61] sm:$0xff] %v2112
      %2142 = vst [vmem:[%s2134 + $0x71] sm:$0xff] %v2113
      %v2143 = vld [vmem:[#allocation2] sm:$0xff]
      %v2144 = vld [vmem:[#allocation2 + $0x10] sm:$0xff]
      %v2145 = vld [vmem:[#allocation2 + $0x20] sm:$0xff]
      %v2146 = vld [vmem:[#allocation2 + $0x30] sm:$0xff]
      %v2147 = vld [vmem:[#allocation2 + $0x40] sm:$0xff]
      %v2148 = vld [vmem:[#allocation2 + $0x50] sm:$0xff]
      %v2149 = vld [vmem:[#allocation2 + $0x60] sm:$0xff]
      %v2150 = vld [vmem:[#allocation2 + $0x70] sm:$0xff]
      %v2151 = vpack.c.bf16 %v2144, %v2143
      %v2152 = vpack.c.bf16 %v2146, %v2145
      %v2153 = vpack.c.bf16 %v2148, %v2147
      %v2154 = vpack.c.bf16 %v2150, %v2149
      %v2155 = vld [vmem:[%s3] sm:$0xf]
      %v2156 = vld [vmem:[%s3 + $0x4] sm:$0xf]
      %v2157 = vld [vmem:[%s3 + $0x8] sm:$0xf]
      %v2158 = vld [vmem:[%s3 + $0xc] sm:$0xf]
      %v2159 = vld [vmem:[%s3 + $0x10] sm:$0xf]
      %v2160 = vld [vmem:[%s3 + $0x14] sm:$0xf]
      %v2161 = vld [vmem:[%s3 + $0x18] sm:$0xf]
      %v2162 = vld [vmem:[%s3 + $0x1c] sm:$0xf]
      %v2163 = vld [vmem:[%s3 + $0x20] sm:$0xf]
      %v2164 = vld [vmem:[%s3 + $0x24] sm:$0xf]
      %v2165 = vld [vmem:[%s3 + $0x28] sm:$0xf]
      %v2166 = vld [vmem:[%s3 + $0x2c] sm:$0xf]
      %v2167 = vld [vmem:[%s3 + $0x30] sm:$0xf]
      %v2168 = vld [vmem:[%s3 + $0x34] sm:$0xf]
      %v2169 = vld [vmem:[%s3 + $0x38] sm:$0xf]
      %v2170 = vld [vmem:[%s3 + $0x3c] sm:$0xf]
      %v2171 = vld [vmem:[#allocation2 + $0x1] sm:$0xff]
      %v2172 = vld [vmem:[#allocation2 + $0x11] sm:$0xff]
      %v2173 = vld [vmem:[#allocation2 + $0x21] sm:$0xff]
      %v2174 = vld [vmem:[#allocation2 + $0x31] sm:$0xff]
      %v2175 = vld [vmem:[#allocation2 + $0x41] sm:$0xff]
      %v2176 = vld [vmem:[#allocation2 + $0x51] sm:$0xff]
      %v2177 = vld [vmem:[#allocation2 + $0x61] sm:$0xff]
      %v2178 = vld [vmem:[#allocation2 + $0x71] sm:$0xff]
      %v2179 = vpack.c.bf16 %v2172, %v2171
      %v2180 = vpack.c.bf16 %v2174, %v2173
      %v2181 = vpack.c.bf16 %v2176, %v2175
      %v2182 = vpack.c.bf16 %v2178, %v2177
      %s2183 = scalar_lea.vmem %s3, 64
      %v2184 = vld [vmem:[%s2183] sm:$0xf]
      %v2185 = vld [vmem:[%s2183 + $0x4] sm:$0xf]
      %v2186 = vld [vmem:[%s2183 + $0x8] sm:$0xf]
      %v2187 = vld [vmem:[%s2183 + $0xc] sm:$0xf]
      %v2188 = vld [vmem:[%s2183 + $0x10] sm:$0xf]
      %v2189 = vld [vmem:[%s2183 + $0x14] sm:$0xf]
      %v2190 = vld [vmem:[%s2183 + $0x18] sm:$0xf]
      %v2191 = vld [vmem:[%s2183 + $0x1c] sm:$0xf]
      %v2192 = vld [vmem:[%s2183 + $0x20] sm:$0xf]
      %v2193 = vld [vmem:[%s2183 + $0x24] sm:$0xf]
      %v2194 = vld [vmem:[%s2183 + $0x28] sm:$0xf]
      %v2195 = vld [vmem:[%s2183 + $0x2c] sm:$0xf]
      %v2196 = vld [vmem:[%s2183 + $0x30] sm:$0xf]
      %v2197 = vld [vmem:[%s2183 + $0x34] sm:$0xf]
      %v2198 = vld [vmem:[%s2183 + $0x38] sm:$0xf]
      %v2199 = vld [vmem:[%s2183 + $0x3c] sm:$0xf]
      %v2216 = vunpack.c.l.b16 %v2184
      %v2217 = vunpack.c.l.b16 %v2185
      %v2218 = vunpack.c.l.b16 %v2186
      %v2219 = vunpack.c.l.b16 %v2187
      %v2220 = vunpack.c.l.b16 %v2188
      %v2221 = vunpack.c.l.b16 %v2189
      %v2222 = vunpack.c.l.b16 %v2190
      %v2223 = vunpack.c.l.b16 %v2191
      %v2224 = vunpack.c.l.b16 %v2192
      %v2225 = vunpack.c.l.b16 %v2193
      %v2226 = vunpack.c.l.b16 %v2194
      %v2227 = vunpack.c.l.b16 %v2195
      %v2228 = vunpack.c.l.b16 %v2196
      %v2229 = vunpack.c.l.b16 %v2197
      %v2230 = vunpack.c.l.b16 %v2198
      %v2231 = vunpack.c.l.b16 %v2199
      %v2232 = vpack.c.b16 %v2217, %v2216
      %v2233 = vpack.c.b16 %v2219, %v2218
      %v2234 = vpack.c.b16 %v2221, %v2220
      %v2235 = vpack.c.b16 %v2223, %v2222
      %v2236 = vpack.c.b16 %v2225, %v2224
      %v2237 = vpack.c.b16 %v2227, %v2226
      %v2238 = vpack.c.b16 %v2229, %v2228
      %v2239 = vpack.c.b16 %v2231, %v2230
      %2248 = vmatprep.subr.bf16.mxu0 0
      %2249 = vmatpush1.bf16.msra.mxu0 %v2232
      %2250 = vmatprep.subr.bf16.mxu0 0
      %2251 = vmatpush1.bf16.msra.mxu0 %v2233
      %2252 = vmatprep.subr.bf16.mxu0 0
      %2253 = vmatpush1.bf16.msra.mxu0 %v2234
      %2254 = vmatprep.subr.bf16.mxu0 0
      %2255 = vmatpush1.bf16.msra.mxu0 %v2235
      %2256 = vmatprep.subr.bf16.mxu0 0
      %2257 = vmatpush1.bf16.msra.mxu0 %v2236
      %2258 = vmatprep.subr.bf16.mxu0 0
      %2259 = vmatpush1.bf16.msra.mxu0 %v2237
      %2260 = vmatprep.subr.bf16.mxu0 0
      %2261 = vmatpush1.bf16.msra.mxu0 %v2238
      %2262 = vmatprep.subr.bf16.mxu0 0
      %2263 = vmatpush1.bf16.msra.mxu0 %v2239
      %2264 = vmatprep.subr.bf16.mxu0 0
      %2265 = vmatpush1.bf16.msra.mxu0 0
      %2266 = vmatprep.subr.bf16.mxu0 0
      %2267 = vmatpush1.bf16.msra.mxu0 0
      %2268 = vmatprep.subr.bf16.mxu0 0
      %2269 = vmatpush1.bf16.msra.mxu0 0
      %2270 = vmatprep.subr.bf16.mxu0 0
      %2271 = vmatpush1.bf16.msra.mxu0 0
      %2272 = vmatprep.subr.bf16.mxu0 0
      %2273 = vmatpush1.bf16.msra.mxu0 0
      %2274 = vmatprep.subr.bf16.mxu0 0
      %2275 = vmatpush1.bf16.msra.mxu0 0
      %2276 = vmatprep.subr.bf16.mxu0 0
      %2277 = vmatpush1.bf16.msra.mxu0 0
      %2278 = vmatprep.subr.bf16.mxu0 0
      %2279 = vmatpush1.bf16.msra.mxu0 0
      %2280 = vmatprep.mubr.bf16.mxu0 0
      %2281 = vmatmul.mubr.bf16.gmra.mrb[0].mxu0 %v2179
      %v2282 = vpop.f32.mrb[0].mxu0
      %v2283 = vadd.f32 0.0, %v2282
      %v2284 = vpop.f32.mrb[0].mxu0
      %v2285 = vpop.f32.mrb[0].mxu0
      %v2286 = vadd.f32 0.0, %v2285
      %v2287 = vpop.f32.mrb[0].mxu0
      %2288 = vmatprep.mubr.bf16.mxu0 0
      %2289 = vmatmul.mubr.bf16.gmra.mrb[0].mxu0 %v2180
      %v2290 = vpop.f32.mrb[0].mxu0
      %v2291 = vadd.f32 0.0, %v2290
      %v2292 = vpop.f32.mrb[0].mxu0
      %v2293 = vpop.f32.mrb[0].mxu0
      %v2294 = vadd.f32 0.0, %v2293
      %v2295 = vpop.f32.mrb[0].mxu0
      %2296 = vmatprep.mubr.bf16.mxu0 0
      %2297 = vmatmul.mubr.bf16.gmra.mrb[0].mxu0 %v2181
      %v2298 = vpop.f32.mrb[0].mxu0
      %v2299 = vadd.f32 0.0, %v2298
      %v2300 = vpop.f32.mrb[0].mxu0
      %v2301 = vpop.f32.mrb[0].mxu0
      %v2302 = vadd.f32 0.0, %v2301
      %v2303 = vpop.f32.mrb[0].mxu0
      %2304 = vmatprep.mubr.bf16.mxu0 0
      %2305 = vmatmul.mubr.bf16.gmra.mrb[0].mxu0 %v2182
      %v2306 = vpop.f32.mrb[0].mxu0
      %v2307 = vadd.f32 0.0, %v2306
      %v2308 = vpop.f32.mrb[0].mxu0
      %v2309 = vpop.f32.mrb[0].mxu0
      %v2310 = vadd.f32 0.0, %v2309
      %v2311 = vpop.f32.mrb[0].mxu0
      %2312 = vdwg.mxu0
      %v2329 = vunpack.c.l.b16 %v2155
      %v2330 = vunpack.c.l.b16 %v2156
      %v2331 = vunpack.c.l.b16 %v2157
      %v2332 = vunpack.c.l.b16 %v2158
      %v2333 = vunpack.c.l.b16 %v2159
      %v2334 = vunpack.c.l.b16 %v2160
      %v2335 = vunpack.c.l.b16 %v2161
      %v2336 = vunpack.c.l.b16 %v2162
      %v2337 = vunpack.c.l.b16 %v2163
      %v2338 = vunpack.c.l.b16 %v2164
      %v2339 = vunpack.c.l.b16 %v2165
      %v2340 = vunpack.c.l.b16 %v2166
      %v2341 = vunpack.c.l.b16 %v2167
      %v2342 = vunpack.c.l.b16 %v2168
      %v2343 = vunpack.c.l.b16 %v2169
      %v2344 = vunpack.c.l.b16 %v2170
      %v2345 = vpack.c.b16 %v2330, %v2329
      %v2346 = vpack.c.b16 %v2332, %v2331
      %v2347 = vpack.c.b16 %v2334, %v2333
      %v2348 = vpack.c.b16 %v2336, %v2335
      %v2349 = vpack.c.b16 %v2338, %v2337
      %v2350 = vpack.c.b16 %v2340, %v2339
      %v2351 = vpack.c.b16 %v2342, %v2341
      %v2352 = vpack.c.b16 %v2344, %v2343
      %2361 = vmatprep.subr.bf16.mxu0 0
      %2362 = vmatpush1.bf16.msra.mxu0 %v2345
      %2363 = vmatprep.subr.bf16.mxu0 0
      %2364 = vmatpush1.bf16.msra.mxu0 %v2346
      %2365 = vmatprep.subr.bf16.mxu0 0
      %2366 = vmatpush1.bf16.msra.mxu0 %v2347
      %2367 = vmatprep.subr.bf16.mxu0 0
      %2368 = vmatpush1.bf16.msra.mxu0 %v2348
      %2369 = vmatprep.subr.bf16.mxu0 0
      %2370 = vmatpush1.bf16.msra.mxu0 %v2349
      %2371 = vmatprep.subr.bf16.mxu0 0
      %2372 = vmatpush1.bf16.msra.mxu0 %v2350
      %2373 = vmatprep.subr.bf16.mxu0 0
      %2374 = vmatpush1.bf16.msra.mxu0 %v2351
      %2375 = vmatprep.subr.bf16.mxu0 0
      %2376 = vmatpush1.bf16.msra.mxu0 %v2352
      %2377 = vmatprep.subr.bf16.mxu0 0
      %2378 = vmatpush1.bf16.msra.mxu0 0
      %2379 = vmatprep.subr.bf16.mxu0 0
      %2380 = vmatpush1.bf16.msra.mxu0 0
      %2381 = vmatprep.subr.bf16.mxu0 0
      %2382 = vmatpush1.bf16.msra.mxu0 0
      %2383 = vmatprep.subr.bf16.mxu0 0
      %2384 = vmatpush1.bf16.msra.mxu0 0
      %2385 = vmatprep.subr.bf16.mxu0 0
      %2386 = vmatpush1.bf16.msra.mxu0 0
      %2387 = vmatprep.subr.bf16.mxu0 0
      %2388 = vmatpush1.bf16.msra.mxu0 0
      %2389 = vmatprep.subr.bf16.mxu0 0
      %2390 = vmatpush1.bf16.msra.mxu0 0
      %2391 = vmatprep.subr.bf16.mxu0 0
      %2392 = vmatpush1.bf16.msra.mxu0 0
      %2393 = vmatprep.mubr.bf16.mxu0 0
      %2394 = vmatmul.mubr.bf16.gmra.mrb[0].mxu0 %v2151
      %v2395 = vpop.f32.mrb[0].mxu0
      %v2396 = vadd.f32 %v2283, %v2395
      %v2397 = vpop.f32.mrb[0].mxu0
      %v2398 = vpop.f32.mrb[0].mxu0
      %v2399 = vadd.f32 %v2286, %v2398
      %v2400 = vpop.f32.mrb[0].mxu0
      %2401 = vmatprep.mubr.bf16.mxu0 0
      %2402 = vmatmul.mubr.bf16.gmra.mrb[0].mxu0 %v2152
      %v2403 = vpop.f32.mrb[0].mxu0
      %v2404 = vadd.f32 %v2291, %v2403
      %v2405 = vpop.f32.mrb[0].mxu0
      %v2406 = vpop.f32.mrb[0].mxu0
      %v2407 = vadd.f32 %v2294, %v2406
      %v2408 = vpop.f32.mrb[0].mxu0
      %2409 = vmatprep.mubr.bf16.mxu0 0
      %2410 = vmatmul.mubr.bf16.gmra.mrb[0].mxu0 %v2153
      %v2411 = vpop.f32.mrb[0].mxu0
      %v2412 = vadd.f32 %v2299, %v2411
      %v2413 = vpop.f32.mrb[0].mxu0
      %v2414 = vpop.f32.mrb[0].mxu0
      %v2415 = vadd.f32 %v2302, %v2414
      %v2416 = vpop.f32.mrb[0].mxu0
      %2417 = vmatprep.mubr.bf16.mxu0 0
      %2418 = vmatmul.mubr.bf16.gmra.mrb[0].mxu0 %v2154
      %v2419 = vpop.f32.mrb[0].mxu0
      %v2420 = vadd.f32 %v2307, %v2419
      %v2421 = vpop.f32.mrb[0].mxu0
      %v2422 = vpop.f32.mrb[0].mxu0
      %v2423 = vadd.f32 %v2310, %v2422
      %v2424 = vpop.f32.mrb[0].mxu0
      %2425 = vdwg.mxu0
      %v2426 = vld [vmem:[#allocation2 + $0x2] sm:$0xff]
      %v2427 = vld [vmem:[#allocation2 + $0x12] sm:$0xff]
      %v2428 = vld [vmem:[#allocation2 + $0x22] sm:$0xff]
      %v2429 = vld [vmem:[#allocation2 + $0x32] sm:$0xff]
      %v2430 = vld [vmem:[#allocation2 + $0x42] sm:$0xff]
      %v2431 = vld [vmem:[#allocation2 + $0x52] sm:$0xff]
      %v2432 = vld [vmem:[#allocation2 + $0x62] sm:$0xff]
      %v2433 = vld [vmem:[#allocation2 + $0x72] sm:$0xff]
      %v2434 = vpack.c.bf16 %v2427, %v2426
      %v2435 = vpack.c.bf16 %v2429, %v2428
      %v2436 = vpack.c.bf16 %v2431, %v2430
      %v2437 = vpack.c.bf16 %v2433, %v2432
      %s2438 = scalar_lea.vmem %s3, 128
      %v2439 = vld [vmem:[%s2438] sm:$0xf]
      %v2440 = vld [vmem:[%s2438 + $0x4] sm:$0xf]
      %v2441 = vld [vmem:[%s2438 + $0x8] sm:$0xf]
      %v2442 = vld [vmem:[%s2438 + $0xc] sm:$0xf]
      %v2443 = vld [vmem:[%s2438 + $0x10] sm:$0xf]
      %v2444 = vld [vmem:[%s2438 + $0x14] sm:$0xf]
      %v2445 = vld [vmem:[%s2438 + $0x18] sm:$0xf]
      %v2446 = vld [vmem:[%s2438 + $0x1c] sm:$0xf]
      %v2447 = vld [vmem:[%s2438 + $0x20] sm:$0xf]
      %v2448 = vld [vmem:[%s2438 + $0x24] sm:$0xf]
      %v2449 = vld [vmem:[%s2438 + $0x28] sm:$0xf]
      %v2450 = vld [vmem:[%s2438 + $0x2c] sm:$0xf]
      %v2451 = vld [vmem:[%s2438 + $0x30] sm:$0xf]
      %v2452 = vld [vmem:[%s2438 + $0x34] sm:$0xf]
      %v2453 = vld [vmem:[%s2438 + $0x38] sm:$0xf]
      %v2454 = vld [vmem:[%s2438 + $0x3c] sm:$0xf]
      %v2471 = vunpack.c.l.b16 %v2439
      %v2472 = vunpack.c.l.b16 %v2440
      %v2473 = vunpack.c.l.b16 %v2441
      %v2474 = vunpack.c.l.b16 %v2442
      %v2475 = vunpack.c.l.b16 %v2443
      %v2476 = vunpack.c.l.b16 %v2444
      %v2477 = vunpack.c.l.b16 %v2445
      %v2478 = vunpack.c.l.b16 %v2446
      %v2479 = vunpack.c.l.b16 %v2447
      %v2480 = vunpack.c.l.b16 %v2448
      %v2481 = vunpack.c.l.b16 %v2449
      %v2482 = vunpack.c.l.b16 %v2450
      %v2483 = vunpack.c.l.b16 %v2451
      %v2484 = vunpack.c.l.b16 %v2452
      %v2485 = vunpack.c.l.b16 %v2453
      %v2486 = vunpack.c.l.b16 %v2454
      %v2487 = vpack.c.b16 %v2472, %v2471
      %v2488 = vpack.c.b16 %v2474, %v2473
      %v2489 = vpack.c.b16 %v2476, %v2475
      %v2490 = vpack.c.b16 %v2478, %v2477
      %v2491 = vpack.c.b16 %v2480, %v2479
      %v2492 = vpack.c.b16 %v2482, %v2481
      %v2493 = vpack.c.b16 %v2484, %v2483
      %v2494 = vpack.c.b16 %v2486, %v2485
      %2503 = vmatprep.subr.bf16.mxu0 0
      %2504 = vmatpush1.bf16.msra.mxu0 %v2487
      %2505 = vmatprep.subr.bf16.mxu0 0
      %2506 = vmatpush1.bf16.msra.mxu0 %v2488
      %2507 = vmatprep.subr.bf16.mxu0 0
      %2508 = vmatpush1.bf16.msra.mxu0 %v2489
      %2509 = vmatprep.subr.bf16.mxu0 0
      %2510 = vmatpush1.bf16.msra.mxu0 %v2490
      %2511 = vmatprep.subr.bf16.mxu0 0
      %2512 = vmatpush1.bf16.msra.mxu0 %v2491
      %2513 = vmatprep.subr.bf16.mxu0 0
      %2514 = vmatpush1.bf16.msra.mxu0 %v2492
      %2515 = vmatprep.subr.bf16.mxu0 0
      %2516 = vmatpush1.bf16.msra.mxu0 %v2493
      %2517 = vmatprep.subr.bf16.mxu0 0
      %2518 = vmatpush1.bf16.msra.mxu0 %v2494
      %2519 = vmatprep.subr.bf16.mxu0 0
      %2520 = vmatpush1.bf16.msra.mxu0 0
      %2521 = vmatprep.subr.bf16.mxu0 0
      %2522 = vmatpush1.bf16.msra.mxu0 0
      %2523 = vmatprep.subr.bf16.mxu0 0
      %2524 = vmatpush1.bf16.msra.mxu0 0
      %2525 = vmatprep.subr.bf16.mxu0 0
      %2526 = vmatpush1.bf16.msra.mxu0 0
      %2527 = vmatprep.subr.bf16.mxu0 0
      %2528 = vmatpush1.bf16.msra.mxu0 0
      %2529 = vmatprep.subr.bf16.mxu0 0
      %2530 = vmatpush1.bf16.msra.mxu0 0
      %2531 = vmatprep.subr.bf16.mxu0 0
      %2532 = vmatpush1.bf16.msra.mxu0 0
      %2533 = vmatprep.subr.bf16.mxu0 0
      %2534 = vmatpush1.bf16.msra.mxu0 0
      %2535 = vmatprep.mubr.bf16.mxu0 0
      %2536 = vmatmul.mubr.bf16.gmra.mrb[0].mxu0 %v2434
      %v2537 = vpop.f32.mrb[0].mxu0
      %v2538 = vadd.f32 0.0, %v2537
      %v2539 = vpop.f32.mrb[0].mxu0
      %v2540 = vpop.f32.mrb[0].mxu0
      %v2541 = vadd.f32 0.0, %v2540
      %v2542 = vpop.f32.mrb[0].mxu0
      %2543 = vmatprep.mubr.bf16.mxu0 0
      %2544 = vmatmul.mubr.bf16.gmra.mrb[0].mxu0 %v2435
      %v2545 = vpop.f32.mrb[0].mxu0
      %v2546 = vadd.f32 0.0, %v2545
      %v2547 = vpop.f32.mrb[0].mxu0
      %v2548 = vpop.f32.mrb[0].mxu0
      %v2549 = vadd.f32 0.0, %v2548
      %v2550 = vpop.f32.mrb[0].mxu0
      %2551 = vmatprep.mubr.bf16.mxu0 0
      %2552 = vmatmul.mubr.bf16.gmra.mrb[0].mxu0 %v2436
      %v2553 = vpop.f32.mrb[0].mxu0
      %v2554 = vadd.f32 0.0, %v2553
      %v2555 = vpop.f32.mrb[0].mxu0
      %v2556 = vpop.f32.mrb[0].mxu0
      %v2557 = vadd.f32 0.0, %v2556
      %v2558 = vpop.f32.mrb[0].mxu0
      %2559 = vmatprep.mubr.bf16.mxu0 0
      %2560 = vmatmul.mubr.bf16.gmra.mrb[0].mxu0 %v2437
      %v2561 = vpop.f32.mrb[0].mxu0
      %v2562 = vadd.f32 0.0, %v2561
      %v2563 = vpop.f32.mrb[0].mxu0
      %v2564 = vpop.f32.mrb[0].mxu0
      %v2565 = vadd.f32 0.0, %v2564
      %v2566 = vpop.f32.mrb[0].mxu0
      %2567 = vdwg.mxu0
      %v2568 = vadd.f32 %v2396, %v2538
      %v2569 = vadd.f32 %v2399, %v2541
      %v2570 = vadd.f32 %v2404, %v2546
      %v2571 = vadd.f32 %v2407, %v2549
      %v2572 = vadd.f32 %v2412, %v2554
      %v2573 = vadd.f32 %v2415, %v2557
      %v2574 = vadd.f32 %v2420, %v2562
      %v2575 = vadd.f32 %v2423, %v2565
      %v2576 = vld [vmem:[%s2134] sm:$0xff]
      %v2577 = vld [vmem:[%s2134 + $0x10] sm:$0xff]
      %v2578 = vld [vmem:[%s2134 + $0x20] sm:$0xff]
      %v2579 = vld [vmem:[%s2134 + $0x30] sm:$0xff]
      %v2580 = vld [vmem:[%s2134 + $0x40] sm:$0xff]
      %v2581 = vld [vmem:[%s2134 + $0x50] sm:$0xff]
      %v2582 = vld [vmem:[%s2134 + $0x60] sm:$0xff]
      %v2583 = vld [vmem:[%s2134 + $0x70] sm:$0xff]
      %v2584 = vpack.c.bf16 %v2577, %v2576
      %v2585 = vpack.c.bf16 %v2579, %v2578
      %v2586 = vpack.c.bf16 %v2581, %v2580
      %v2587 = vpack.c.bf16 %v2583, %v2582
      %s2588 = scalar_lea.vmem %s3, 192
      %v2589 = vld [vmem:[%s2588] sm:$0xf]
      %v2590 = vld [vmem:[%s2588 + $0x4] sm:$0xf]
      %v2591 = vld [vmem:[%s2588 + $0x8] sm:$0xf]
      %v2592 = vld [vmem:[%s2588 + $0xc] sm:$0xf]
      %v2593 = vld [vmem:[%s2588 + $0x10] sm:$0xf]
      %v2594 = vld [vmem:[%s2588 + $0x14] sm:$0xf]
      %v2595 = vld [vmem:[%s2588 + $0x18] sm:$0xf]
      %v2596 = vld [vmem:[%s2588 + $0x1c] sm:$0xf]
      %v2597 = vld [vmem:[%s2588 + $0x20] sm:$0xf]
      %v2598 = vld [vmem:[%s2588 + $0x24] sm:$0xf]
      %v2599 = vld [vmem:[%s2588 + $0x28] sm:$0xf]
      %v2600 = vld [vmem:[%s2588 + $0x2c] sm:$0xf]
      %v2601 = vld [vmem:[%s2588 + $0x30] sm:$0xf]
      %v2602 = vld [vmem:[%s2588 + $0x34] sm:$0xf]
      %v2603 = vld [vmem:[%s2588 + $0x38] sm:$0xf]
      %v2604 = vld [vmem:[%s2588 + $0x3c] sm:$0xf]
      %v2621 = vunpack.c.l.b16 %v2589
      %v2622 = vunpack.c.l.b16 %v2590
      %v2623 = vunpack.c.l.b16 %v2591
      %v2624 = vunpack.c.l.b16 %v2592
      %v2625 = vunpack.c.l.b16 %v2593
      %v2626 = vunpack.c.l.b16 %v2594
      %v2627 = vunpack.c.l.b16 %v2595
      %v2628 = vunpack.c.l.b16 %v2596
      %v2629 = vunpack.c.l.b16 %v2597
      %v2630 = vunpack.c.l.b16 %v2598
      %v2631 = vunpack.c.l.b16 %v2599
      %v2632 = vunpack.c.l.b16 %v2600
      %v2633 = vunpack.c.l.b16 %v2601
      %v2634 = vunpack.c.l.b16 %v2602
      %v2635 = vunpack.c.l.b16 %v2603
      %v2636 = vunpack.c.l.b16 %v2604
      %v2637 = vpack.c.b16 %v2622, %v2621
      %v2638 = vpack.c.b16 %v2624, %v2623
      %v2639 = vpack.c.b16 %v2626, %v2625
      %v2640 = vpack.c.b16 %v2628, %v2627
      %v2641 = vpack.c.b16 %v2630, %v2629
      %v2642 = vpack.c.b16 %v2632, %v2631
      %v2643 = vpack.c.b16 %v2634, %v2633
      %v2644 = vpack.c.b16 %v2636, %v2635
      %2653 = vmatprep.subr.bf16.mxu0 0
      %2654 = vmatpush1.bf16.msra.mxu0 %v2637
      %2655 = vmatprep.subr.bf16.mxu0 0
      %2656 = vmatpush1.bf16.msra.mxu0 %v2638
      %2657 = vmatprep.subr.bf16.mxu0 0
      %2658 = vmatpush1.bf16.msra.mxu0 %v2639
      %2659 = vmatprep.subr.bf16.mxu0 0
      %2660 = vmatpush1.bf16.msra.mxu0 %v2640
      %2661 = vmatprep.subr.bf16.mxu0 0
      %2662 = vmatpush1.bf16.msra.mxu0 %v2641
      %2663 = vmatprep.subr.bf16.mxu0 0
      %2664 = vmatpush1.bf16.msra.mxu0 %v2642
      %2665 = vmatprep.subr.bf16.mxu0 0
      %2666 = vmatpush1.bf16.msra.mxu0 %v2643
      %2667 = vmatprep.subr.bf16.mxu0 0
      %2668 = vmatpush1.bf16.msra.mxu0 %v2644
      %2669 = vmatprep.subr.bf16.mxu0 0
      %2670 = vmatpush1.bf16.msra.mxu0 0
      %2671 = vmatprep.subr.bf16.mxu0 0
      %2672 = vmatpush1.bf16.msra.mxu0 0
      %2673 = vmatprep.subr.bf16.mxu0 0
      %2674 = vmatpush1.bf16.msra.mxu0 0
      %2675 = vmatprep.subr.bf16.mxu0 0
      %2676 = vmatpush1.bf16.msra.mxu0 0
      %2677 = vmatprep.subr.bf16.mxu0 0
      %2678 = vmatpush1.bf16.msra.mxu0 0
      %2679 = vmatprep.subr.bf16.mxu0 0
      %2680 = vmatpush1.bf16.msra.mxu0 0
      %2681 = vmatprep.subr.bf16.mxu0 0
      %2682 = vmatpush1.bf16.msra.mxu0 0
      %2683 = vmatprep.subr.bf16.mxu0 0
      %2684 = vmatpush1.bf16.msra.mxu0 0
      %2685 = vmatprep.mubr.bf16.mxu0 0
      %2686 = vmatmul.mubr.bf16.gmra.mrb[0].mxu0 %v2584
      %v2687 = vpop.f32.mrb[0].mxu0
      %v2688 = vadd.f32 0.0, %v2687
      %v2689 = vpop.f32.mrb[0].mxu0
      %v2690 = vpop.f32.mrb[0].mxu0
      %v2691 = vadd.f32 0.0, %v2690
      %v2692 = vpop.f32.mrb[0].mxu0
      %2693 = vmatprep.mubr.bf16.mxu0 0
      %2694 = vmatmul.mubr.bf16.gmra.mrb[0].mxu0 %v2585
      %v2695 = vpop.f32.mrb[0].mxu0
      %v2696 = vadd.f32 0.0, %v2695
      %v2697 = vpop.f32.mrb[0].mxu0
      %v2698 = vpop.f32.mrb[0].mxu0
      %v2699 = vadd.f32 0.0, %v2698
      %v2700 = vpop.f32.mrb[0].mxu0
      %2701 = vmatprep.mubr.bf16.mxu0 0
      %2702 = vmatmul.mubr.bf16.gmra.mrb[0].mxu0 %v2586
      %v2703 = vpop.f32.mrb[0].mxu0
      %v2704 = vadd.f32 0.0, %v2703
      %v2705 = vpop.f32.mrb[0].mxu0
      %v2706 = vpop.f32.mrb[0].mxu0
      %v2707 = vadd.f32 0.0, %v2706
      %v2708 = vpop.f32.mrb[0].mxu0
      %2709 = vmatprep.mubr.bf16.mxu0 0
      %2710 = vmatmul.mubr.bf16.gmra.mrb[0].mxu0 %v2587
      %v2711 = vpop.f32.mrb[0].mxu0
      %v2712 = vadd.f32 0.0, %v2711
      %v2713 = vpop.f32.mrb[0].mxu0
      %v2714 = vpop.f32.mrb[0].mxu0
      %v2715 = vadd.f32 0.0, %v2714
      %v2716 = vpop.f32.mrb[0].mxu0
      %2717 = vdwg.mxu0
      %v2718 = vadd.f32 %v2568, %v2688
      %v2719 = vadd.f32 %v2569, %v2691
      %v2720 = vadd.f32 %v2570, %v2696
      %v2721 = vadd.f32 %v2571, %v2699
      %v2722 = vadd.f32 %v2572, %v2704
      %v2723 = vadd.f32 %v2573, %v2707
      %v2724 = vadd.f32 %v2574, %v2712
      %v2725 = vadd.f32 %v2575, %v2715
      %v2726 = vld [vmem:[%s2134 + $0x1] sm:$0xff]
      %v2727 = vld [vmem:[%s2134 + $0x11] sm:$0xff]
      %v2728 = vld [vmem:[%s2134 + $0x21] sm:$0xff]
      %v2729 = vld [vmem:[%s2134 + $0x31] sm:$0xff]
      %v2730 = vld [vmem:[%s2134 + $0x41] sm:$0xff]
      %v2731 = vld [vmem:[%s2134 + $0x51] sm:$0xff]
      %v2732 = vld [vmem:[%s2134 + $0x61] sm:$0xff]
      %v2733 = vld [vmem:[%s2134 + $0x71] sm:$0xff]
      %v2734 = vpack.c.bf16 %v2727, %v2726
      %v2735 = vpack.c.bf16 %v2729, %v2728
      %v2736 = vpack.c.bf16 %v2731, %v2730
      %v2737 = vpack.c.bf16 %v2733, %v2732
      %s2738 = scalar_lea.vmem %s3, 256
      %v2739 = vld [vmem:[%s2738] sm:$0xf]
      %v2740 = vld [vmem:[%s2738 + $0x4] sm:$0xf]
      %v2741 = vld [vmem:[%s2738 + $0x8] sm:$0xf]
      %v2742 = vld [vmem:[%s2738 + $0xc] sm:$0xf]
      %v2743 = vld [vmem:[%s2738 + $0x10] sm:$0xf]
      %v2744 = vld [vmem:[%s2738 + $0x14] sm:$0xf]
      %v2745 = vld [vmem:[%s2738 + $0x18] sm:$0xf]
      %v2746 = vld [vmem:[%s2738 + $0x1c] sm:$0xf]
      %v2747 = vld [vmem:[%s2738 + $0x20] sm:$0xf]
      %v2748 = vld [vmem:[%s2738 + $0x24] sm:$0xf]
      %v2749 = vld [vmem:[%s2738 + $0x28] sm:$0xf]
      %v2750 = vld [vmem:[%s2738 + $0x2c] sm:$0xf]
      %v2751 = vld [vmem:[%s2738 + $0x30] sm:$0xf]
      %v2752 = vld [vmem:[%s2738 + $0x34] sm:$0xf]
      %v2753 = vld [vmem:[%s2738 + $0x38] sm:$0xf]
      %v2754 = vld [vmem:[%s2738 + $0x3c] sm:$0xf]
      %v2771 = vunpack.c.l.b16 %v2739
      %v2772 = vunpack.c.l.b16 %v2740
      %v2773 = vunpack.c.l.b16 %v2741
      %v2774 = vunpack.c.l.b16 %v2742
      %v2775 = vunpack.c.l.b16 %v2743
      %v2776 = vunpack.c.l.b16 %v2744
      %v2777 = vunpack.c.l.b16 %v2745
      %v2778 = vunpack.c.l.b16 %v2746
      %v2779 = vunpack.c.l.b16 %v2747
      %v2780 = vunpack.c.l.b16 %v2748
      %v2781 = vunpack.c.l.b16 %v2749
      %v2782 = vunpack.c.l.b16 %v2750
      %v2783 = vunpack.c.l.b16 %v2751
      %v2784 = vunpack.c.l.b16 %v2752
      %v2785 = vunpack.c.l.b16 %v2753
      %v2786 = vunpack.c.l.b16 %v2754
      %v2787 = vpack.c.b16 %v2772, %v2771
      %v2788 = vpack.c.b16 %v2774, %v2773
      %v2789 = vpack.c.b16 %v2776, %v2775
      %v2790 = vpack.c.b16 %v2778, %v2777
      %v2791 = vpack.c.b16 %v2780, %v2779
      %v2792 = vpack.c.b16 %v2782, %v2781
      %v2793 = vpack.c.b16 %v2784, %v2783
      %v2794 = vpack.c.b16 %v2786, %v2785
      %2803 = vmatprep.subr.bf16.mxu0 0
      %2804 = vmatpush1.bf16.msra.mxu0 %v2787
      %2805 = vmatprep.subr.bf16.mxu0 0
      %2806 = vmatpush1.bf16.msra.mxu0 %v2788
      %2807 = vmatprep.subr.bf16.mxu0 0
      %2808 = vmatpush1.bf16.msra.mxu0 %v2789
      %2809 = vmatprep.subr.bf16.mxu0 0
      %2810 = vmatpush1.bf16.msra.mxu0 %v2790
      %2811 = vmatprep.subr.bf16.mxu0 0
      %2812 = vmatpush1.bf16.msra.mxu0 %v2791
      %2813 = vmatprep.subr.bf16.mxu0 0
      %2814 = vmatpush1.bf16.msra.mxu0 %v2792
      %2815 = vmatprep.subr.bf16.mxu0 0
      %2816 = vmatpush1.bf16.msra.mxu0 %v2793
      %2817 = vmatprep.subr.bf16.mxu0 0
      %2818 = vmatpush1.bf16.msra.mxu0 %v2794
      %2819 = vmatprep.subr.bf16.mxu0 0
      %2820 = vmatpush1.bf16.msra.mxu0 0
      %2821 = vmatprep.subr.bf16.mxu0 0
      %2822 = vmatpush1.bf16.msra.mxu0 0
      %2823 = vmatprep.subr.bf16.mxu0 0
      %2824 = vmatpush1.bf16.msra.mxu0 0
      %2825 = vmatprep.subr.bf16.mxu0 0
      %2826 = vmatpush1.bf16.msra.mxu0 0
      %2827 = vmatprep.subr.bf16.mxu0 0
      %2828 = vmatpush1.bf16.msra.mxu0 0
      %2829 = vmatprep.subr.bf16.mxu0 0
      %2830 = vmatpush1.bf16.msra.mxu0 0
      %2831 = vmatprep.subr.bf16.mxu0 0
      %2832 = vmatpush1.bf16.msra.mxu0 0
      %2833 = vmatprep.subr.bf16.mxu0 0
      %2834 = vmatpush1.bf16.msra.mxu0 0
      %2835 = vmatprep.mubr.bf16.mxu0 0
      %2836 = vmatmul.mubr.bf16.gmra.mrb[0].mxu0 %v2734
      %v2837 = vpop.f32.mrb[0].mxu0
      %v2838 = vadd.f32 0.0, %v2837
      %v2839 = vpop.f32.mrb[0].mxu0
      %v2840 = vpop.f32.mrb[0].mxu0
      %v2841 = vadd.f32 0.0, %v2840
      %v2842 = vpop.f32.mrb[0].mxu0
      %2843 = vmatprep.mubr.bf16.mxu0 0
      %2844 = vmatmul.mubr.bf16.gmra.mrb[0].mxu0 %v2735
      %v2845 = vpop.f32.mrb[0].mxu0
      %v2846 = vadd.f32 0.0, %v2845
      %v2847 = vpop.f32.mrb[0].mxu0
      %v2848 = vpop.f32.mrb[0].mxu0
      %v2849 = vadd.f32 0.0, %v2848
      %v2850 = vpop.f32.mrb[0].mxu0
      %2851 = vmatprep.mubr.bf16.mxu0 0
      %2852 = vmatmul.mubr.bf16.gmra.mrb[0].mxu0 %v2736
      %v2853 = vpop.f32.mrb[0].mxu0
      %v2854 = vadd.f32 0.0, %v2853
      %v2855 = vpop.f32.mrb[0].mxu0
      %v2856 = vpop.f32.mrb[0].mxu0
      %v2857 = vadd.f32 0.0, %v2856
      %v2858 = vpop.f32.mrb[0].mxu0
      %2859 = vmatprep.mubr.bf16.mxu0 0
      %2860 = vmatmul.mubr.bf16.gmra.mrb[0].mxu0 %v2737
      %v2861 = vpop.f32.mrb[0].mxu0
      %v2862 = vadd.f32 0.0, %v2861
      %v2863 = vpop.f32.mrb[0].mxu0
      %v2864 = vpop.f32.mrb[0].mxu0
      %v2865 = vadd.f32 0.0, %v2864
      %v2866 = vpop.f32.mrb[0].mxu0
      %2867 = vdwg.mxu0
      %v2868 = vadd.f32 %v2718, %v2838
      %v2869 = vadd.f32 %v2719, %v2841
      %v2870 = vadd.f32 %v2720, %v2846
      %v2871 = vadd.f32 %v2721, %v2849
      %v2872 = vadd.f32 %v2722, %v2854
      %v2873 = vadd.f32 %v2723, %v2857
      %v2874 = vadd.f32 %v2724, %v2862
      %v2875 = vadd.f32 %v2725, %v2865
      %v2876 = vld [vmem:[%s2134 + $0x2] sm:$0xff]
      %v2877 = vld [vmem:[%s2134 + $0x12] sm:$0xff]
      %v2878 = vld [vmem:[%s2134 + $0x22] sm:$0xff]
      %v2879 = vld [vmem:[%s2134 + $0x32] sm:$0xff]
      %v2880 = vld [vmem:[%s2134 + $0x42] sm:$0xff]
      %v2881 = vld [vmem:[%s2134 + $0x52] sm:$0xff]
      %v2882 = vld [vmem:[%s2134 + $0x62] sm:$0xff]
      %v2883 = vld [vmem:[%s2134 + $0x72] sm:$0xff]
      %v2884 = vpack.c.bf16 %v2877, %v2876
      %v2885 = vpack.c.bf16 %v2879, %v2878
      %v2886 = vpack.c.bf16 %v2881, %v2880
      %v2887 = vpack.c.bf16 %v2883, %v2882
      %s2888 = scalar_lea.vmem %s3, 320
      %v2889 = vld [vmem:[%s2888] sm:$0xf]
      %v2890 = vld [vmem:[%s2888 + $0x4] sm:$0xf]
      %v2891 = vld [vmem:[%s2888 + $0x8] sm:$0xf]
      %v2892 = vld [vmem:[%s2888 + $0xc] sm:$0xf]
      %v2893 = vld [vmem:[%s2888 + $0x10] sm:$0xf]
      %v2894 = vld [vmem:[%s2888 + $0x14] sm:$0xf]
      %v2895 = vld [vmem:[%s2888 + $0x18] sm:$0xf]
      %v2896 = vld [vmem:[%s2888 + $0x1c] sm:$0xf]
      %v2897 = vld [vmem:[%s2888 + $0x20] sm:$0xf]
      %v2898 = vld [vmem:[%s2888 + $0x24] sm:$0xf]
      %v2899 = vld [vmem:[%s2888 + $0x28] sm:$0xf]
      %v2900 = vld [vmem:[%s2888 + $0x2c] sm:$0xf]
      %v2901 = vld [vmem:[%s2888 + $0x30] sm:$0xf]
      %v2902 = vld [vmem:[%s2888 + $0x34] sm:$0xf]
      %v2903 = vld [vmem:[%s2888 + $0x38] sm:$0xf]
      %v2904 = vld [vmem:[%s2888 + $0x3c] sm:$0xf]
      %v2921 = vunpack.c.l.b16 %v2889
      %v2922 = vunpack.c.l.b16 %v2890
      %v2923 = vunpack.c.l.b16 %v2891
      %v2924 = vunpack.c.l.b16 %v2892
      %v2925 = vunpack.c.l.b16 %v2893
      %v2926 = vunpack.c.l.b16 %v2894
      %v2927 = vunpack.c.l.b16 %v2895
      %v2928 = vunpack.c.l.b16 %v2896
      %v2929 = vunpack.c.l.b16 %v2897
      %v2930 = vunpack.c.l.b16 %v2898
      %v2931 = vunpack.c.l.b16 %v2899
      %v2932 = vunpack.c.l.b16 %v2900
      %v2933 = vunpack.c.l.b16 %v2901
      %v2934 = vunpack.c.l.b16 %v2902
      %v2935 = vunpack.c.l.b16 %v2903
      %v2936 = vunpack.c.l.b16 %v2904
      %v2937 = vpack.c.b16 %v2922, %v2921
      %v2938 = vpack.c.b16 %v2924, %v2923
      %v2939 = vpack.c.b16 %v2926, %v2925
      %v2940 = vpack.c.b16 %v2928, %v2927
      %v2941 = vpack.c.b16 %v2930, %v2929
      %v2942 = vpack.c.b16 %v2932, %v2931
      %v2943 = vpack.c.b16 %v2934, %v2933
      %v2944 = vpack.c.b16 %v2936, %v2935
      %2953 = vmatprep.subr.bf16.mxu0 0
      %2954 = vmatpush1.bf16.msra.mxu0 %v2937
      %2955 = vmatprep.subr.bf16.mxu0 0
      %2956 = vmatpush1.bf16.msra.mxu0 %v2938
      %2957 = vmatprep.subr.bf16.mxu0 0
      %2958 = vmatpush1.bf16.msra.mxu0 %v2939
      %2959 = vmatprep.subr.bf16.mxu0 0
      %2960 = vmatpush1.bf16.msra.mxu0 %v2940
      %2961 = vmatprep.subr.bf16.mxu0 0
      %2962 = vmatpush1.bf16.msra.mxu0 %v2941
      %2963 = vmatprep.subr.bf16.mxu0 0
      %2964 = vmatpush1.bf16.msra.mxu0 %v2942
      %2965 = vmatprep.subr.bf16.mxu0 0
      %2966 = vmatpush1.bf16.msra.mxu0 %v2943
      %2967 = vmatprep.subr.bf16.mxu0 0
      %2968 = vmatpush1.bf16.msra.mxu0 %v2944
      %2969 = vmatprep.subr.bf16.mxu0 0
      %2970 = vmatpush1.bf16.msra.mxu0 0
      %2971 = vmatprep.subr.bf16.mxu0 0
      %2972 = vmatpush1.bf16.msra.mxu0 0
      %2973 = vmatprep.subr.bf16.mxu0 0
      %2974 = vmatpush1.bf16.msra.mxu0 0
      %2975 = vmatprep.subr.bf16.mxu0 0
      %2976 = vmatpush1.bf16.msra.mxu0 0
      %2977 = vmatprep.subr.bf16.mxu0 0
      %2978 = vmatpush1.bf16.msra.mxu0 0
      %2979 = vmatprep.subr.bf16.mxu0 0
      %2980 = vmatpush1.bf16.msra.mxu0 0
      %2981 = vmatprep.subr.bf16.mxu0 0
      %2982 = vmatpush1.bf16.msra.mxu0 0
      %2983 = vmatprep.subr.bf16.mxu0 0
      %2984 = vmatpush1.bf16.msra.mxu0 0
      %2985 = vmatprep.mubr.bf16.mxu0 0
      %2986 = vmatmul.mubr.bf16.gmra.mrb[0].mxu0 %v2884
      %v2987 = vpop.f32.mrb[0].mxu0
      %v2988 = vadd.f32 0.0, %v2987
      %v2989 = vpop.f32.mrb[0].mxu0
      %v2990 = vpop.f32.mrb[0].mxu0
      %v2991 = vadd.f32 0.0, %v2990
      %v2992 = vpop.f32.mrb[0].mxu0
      %2993 = vmatprep.mubr.bf16.mxu0 0
      %2994 = vmatmul.mubr.bf16.gmra.mrb[0].mxu0 %v2885
      %v2995 = vpop.f32.mrb[0].mxu0
      %v2996 = vadd.f32 0.0, %v2995
      %v2997 = vpop.f32.mrb[0].mxu0
      %v2998 = vpop.f32.mrb[0].mxu0
      %v2999 = vadd.f32 0.0, %v2998
      %v3000 = vpop.f32.mrb[0].mxu0
      %3001 = vmatprep.mubr.bf16.mxu0 0
      %3002 = vmatmul.mubr.bf16.gmra.mrb[0].mxu0 %v2886
      %v3003 = vpop.f32.mrb[0].mxu0
      %v3004 = vadd.f32 0.0, %v3003
      %v3005 = vpop.f32.mrb[0].mxu0
      %v3006 = vpop.f32.mrb[0].mxu0
      %v3007 = vadd.f32 0.0, %v3006
      %v3008 = vpop.f32.mrb[0].mxu0
      %3009 = vmatprep.mubr.bf16.mxu0 0
      %3010 = vmatmul.mubr.bf16.gmra.mrb[0].mxu0 %v2887
      %v3011 = vpop.f32.mrb[0].mxu0
      %v3012 = vadd.f32 0.0, %v3011
      %v3013 = vpop.f32.mrb[0].mxu0
      %v3014 = vpop.f32.mrb[0].mxu0
      %v3015 = vadd.f32 0.0, %v3014
      %v3016 = vpop.f32.mrb[0].mxu0
      %3017 = vdwg.mxu0
      %v3018 = vadd.f32 %v2868, %v2988
      %v3019 = vadd.f32 %v2869, %v2991
      %v3020 = vadd.f32 %v2870, %v2996
      %v3021 = vadd.f32 %v2871, %v2999
      %v3022 = vadd.f32 %v2872, %v3004
      %v3023 = vadd.f32 %v2873, %v3007
      %v3024 = vadd.f32 %v2874, %v3012
      %v3025 = vadd.f32 %v2875, %v3015
      %s3026 = scalar_lea.vmem [#allocation2], 32
      %v3027 = vld [vmem:[%s3026] sm:$0xff]
      %v3028 = vld [vmem:[%s3026 + $0x10] sm:$0xff]
      %v3029 = vld [vmem:[%s3026 + $0x20] sm:$0xff]
      %v3030 = vld [vmem:[%s3026 + $0x30] sm:$0xff]
      %v3031 = vld [vmem:[%s3026 + $0x40] sm:$0xff]
      %v3032 = vld [vmem:[%s3026 + $0x50] sm:$0xff]
      %v3033 = vld [vmem:[%s3026 + $0x60] sm:$0xff]
      %v3034 = vld [vmem:[%s3026 + $0x70] sm:$0xff]
      %v3035 = vpack.c.bf16 %v3028, %v3027
      %v3036 = vpack.c.bf16 %v3030, %v3029
      %v3037 = vpack.c.bf16 %v3032, %v3031
      %v3038 = vpack.c.bf16 %v3034, %v3033
      %s3039 = scalar_lea.vmem %s3, 384
      %v3040 = vld [vmem:[%s3039] sm:$0xf]
      %v3041 = vld [vmem:[%s3039 + $0x4] sm:$0xf]
      %v3042 = vld [vmem:[%s3039 + $0x8] sm:$0xf]
      %v3043 = vld [vmem:[%s3039 + $0xc] sm:$0xf]
      %v3044 = vld [vmem:[%s3039 + $0x10] sm:$0xf]
      %v3045 = vld [vmem:[%s3039 + $0x14] sm:$0xf]
      %v3046 = vld [vmem:[%s3039 + $0x18] sm:$0xf]
      %v3047 = vld [vmem:[%s3039 + $0x1c] sm:$0xf]
      %v3048 = vld [vmem:[%s3039 + $0x20] sm:$0xf]
      %v3049 = vld [vmem:[%s3039 + $0x24] sm:$0xf]
      %v3050 = vld [vmem:[%s3039 + $0x28] sm:$0xf]
      %v3051 = vld [vmem:[%s3039 + $0x2c] sm:$0xf]
      %v3052 = vld [vmem:[%s3039 + $0x30] sm:$0xf]
      %v3053 = vld [vmem:[%s3039 + $0x34] sm:$0xf]
      %v3054 = vld [vmem:[%s3039 + $0x38] sm:$0xf]
      %v3055 = vld [vmem:[%s3039 + $0x3c] sm:$0xf]
      %v3072 = vunpack.c.l.b16 %v3040
      %v3073 = vunpack.c.l.b16 %v3041
      %v3074 = vunpack.c.l.b16 %v3042
      %v3075 = vunpack.c.l.b16 %v3043
      %v3076 = vunpack.c.l.b16 %v3044
      %v3077 = vunpack.c.l.b16 %v3045
      %v3078 = vunpack.c.l.b16 %v3046
      %v3079 = vunpack.c.l.b16 %v3047
      %v3080 = vunpack.c.l.b16 %v3048
      %v3081 = vunpack.c.l.b16 %v3049
      %v3082 = vunpack.c.l.b16 %v3050
      %v3083 = vunpack.c.l.b16 %v3051
      %v3084 = vunpack.c.l.b16 %v3052
      %v3085 = vunpack.c.l.b16 %v3053
      %v3086 = vunpack.c.l.b16 %v3054
      %v3087 = vunpack.c.l.b16 %v3055
      %v3088 = vpack.c.b16 %v3073, %v3072
      %v3089 = vpack.c.b16 %v3075, %v3074
      %v3090 = vpack.c.b16 %v3077, %v3076
      %v3091 = vpack.c.b16 %v3079, %v3078
      %v3092 = vpack.c.b16 %v3081, %v3080
      %v3093 = vpack.c.b16 %v3083, %v3082
      %v3094 = vpack.c.b16 %v3085, %v3084
      %v3095 = vpack.c.b16 %v3087, %v3086
      %3104 = vmatprep.subr.bf16.mxu0 0
      %3105 = vmatpush1.bf16.msra.mxu0 %v3088
      %3106 = vmatprep.subr.bf16.mxu0 0
      %3107 = vmatpush1.bf16.msra.mxu0 %v3089
      %3108 = vmatprep.subr.bf16.mxu0 0
      %3109 = vmatpush1.bf16.msra.mxu0 %v3090
      %3110 = vmatprep.subr.bf16.mxu0 0
      %3111 = vmatpush1.bf16.msra.mxu0 %v3091
      %3112 = vmatprep.subr.bf16.mxu0 0
      %3113 = vmatpush1.bf16.msra.mxu0 %v3092
      %3114 = vmatprep.subr.bf16.mxu0 0
      %3115 = vmatpush1.bf16.msra.mxu0 %v3093
      %3116 = vmatprep.subr.bf16.mxu0 0
      %3117 = vmatpush1.bf16.msra.mxu0 %v3094
      %3118 = vmatprep.subr.bf16.mxu0 0
      %3119 = vmatpush1.bf16.msra.mxu0 %v3095
      %3120 = vmatprep.subr.bf16.mxu0 0
      %3121 = vmatpush1.bf16.msra.mxu0 0
      %3122 = vmatprep.subr.bf16.mxu0 0
      %3123 = vmatpush1.bf16.msra.mxu0 0
      %3124 = vmatprep.subr.bf16.mxu0 0
      %3125 = vmatpush1.bf16.msra.mxu0 0
      %3126 = vmatprep.subr.bf16.mxu0 0
      %3127 = vmatpush1.bf16.msra.mxu0 0
      %3128 = vmatprep.subr.bf16.mxu0 0
      %3129 = vmatpush1.bf16.msra.mxu0 0
      %3130 = vmatprep.subr.bf16.mxu0 0
      %3131 = vmatpush1.bf16.msra.mxu0 0
      %3132 = vmatprep.subr.bf16.mxu0 0
      %3133 = vmatpush1.bf16.msra.mxu0 0
      %3134 = vmatprep.subr.bf16.mxu0 0
      %3135 = vmatpush1.bf16.msra.mxu0 0
      %3136 = vmatprep.mubr.bf16.mxu0 0
      %3137 = vmatmul.mubr.bf16.gmra.mrb[0].mxu0 %v3035
      %v3138 = vpop.f32.mrb[0].mxu0
      %v3139 = vadd.f32 0.0, %v3138
      %v3140 = vpop.f32.mrb[0].mxu0
      %v3141 = vpop.f32.mrb[0].mxu0
      %v3142 = vadd.f32 0.0, %v3141
      %v3143 = vpop.f32.mrb[0].mxu0
      %3144 = vmatprep.mubr.bf16.mxu0 0
      %3145 = vmatmul.mubr.bf16.gmra.mrb[0].mxu0 %v3036
      %v3146 = vpop.f32.mrb[0].mxu0
      %v3147 = vadd.f32 0.0, %v3146
      %v3148 = vpop.f32.mrb[0].mxu0
      %v3149 = vpop.f32.mrb[0].mxu0
      %v3150 = vadd.f32 0.0, %v3149
      %v3151 = vpop.f32.mrb[0].mxu0
      %3152 = vmatprep.mubr.bf16.mxu0 0
      %3153 = vmatmul.mubr.bf16.gmra.mrb[0].mxu0 %v3037
      %v3154 = vpop.f32.mrb[0].mxu0
      %v3155 = vadd.f32 0.0, %v3154
      %v3156 = vpop.f32.mrb[0].mxu0
      %v3157 = vpop.f32.mrb[0].mxu0
      %v3158 = vadd.f32 0.0, %v3157
      %v3159 = vpop.f32.mrb[0].mxu0
      %3160 = vmatprep.mubr.bf16.mxu0 0
      %3161 = vmatmul.mubr.bf16.gmra.mrb[0].mxu0 %v3038
      %v3162 = vpop.f32.mrb[0].mxu0
      %v3163 = vadd.f32 0.0, %v3162
      %v3164 = vpop.f32.mrb[0].mxu0
      %v3165 = vpop.f32.mrb[0].mxu0
      %v3166 = vadd.f32 0.0, %v3165
      %v3167 = vpop.f32.mrb[0].mxu0
      %3168 = vdwg.mxu0
      %v3169 = vadd.f32 %v3018, %v3139
      %v3170 = vadd.f32 %v3019, %v3142
      %v3171 = vadd.f32 %v3020, %v3147
      %v3172 = vadd.f32 %v3021, %v3150
      %v3173 = vadd.f32 %v3022, %v3155
      %v3174 = vadd.f32 %v3023, %v3158
      %v3175 = vadd.f32 %v3024, %v3163
      %v3176 = vadd.f32 %v3025, %v3166
      %v3177 = vld [vmem:[%s3026 + $0x1] sm:$0xff]
      %v3178 = vld [vmem:[%s3026 + $0x11] sm:$0xff]
      %v3179 = vld [vmem:[%s3026 + $0x21] sm:$0xff]
      %v3180 = vld [vmem:[%s3026 + $0x31] sm:$0xff]
      %v3181 = vld [vmem:[%s3026 + $0x41] sm:$0xff]
      %v3182 = vld [vmem:[%s3026 + $0x51] sm:$0xff]
      %v3183 = vld [vmem:[%s3026 + $0x61] sm:$0xff]
      %v3184 = vld [vmem:[%s3026 + $0x71] sm:$0xff]
      %v3185 = vpack.c.bf16 %v3178, %v3177
      %v3186 = vpack.c.bf16 %v3180, %v3179
      %v3187 = vpack.c.bf16 %v3182, %v3181
      %v3188 = vpack.c.bf16 %v3184, %v3183
      %s3189 = scalar_lea.vmem %s3, 448
      %v3190 = vld [vmem:[%s3189] sm:$0xf]
      %v3191 = vld [vmem:[%s3189 + $0x4] sm:$0xf]
      %v3192 = vld [vmem:[%s3189 + $0x8] sm:$0xf]
      %v3193 = vld [vmem:[%s3189 + $0xc] sm:$0xf]
      %v3194 = vld [vmem:[%s3189 + $0x10] sm:$0xf]
      %v3195 = vld [vmem:[%s3189 + $0x14] sm:$0xf]
      %v3196 = vld [vmem:[%s3189 + $0x18] sm:$0xf]
      %v3197 = vld [vmem:[%s3189 + $0x1c] sm:$0xf]
      %v3198 = vld [vmem:[%s3189 + $0x20] sm:$0xf]
      %v3199 = vld [vmem:[%s3189 + $0x24] sm:$0xf]
      %v3200 = vld [vmem:[%s3189 + $0x28] sm:$0xf]
      %v3201 = vld [vmem:[%s3189 + $0x2c] sm:$0xf]
      %v3202 = vld [vmem:[%s3189 + $0x30] sm:$0xf]
      %v3203 = vld [vmem:[%s3189 + $0x34] sm:$0xf]
      %v3204 = vld [vmem:[%s3189 + $0x38] sm:$0xf]
      %v3205 = vld [vmem:[%s3189 + $0x3c] sm:$0xf]
      %v3222 = vunpack.c.l.b16 %v3190
      %v3223 = vunpack.c.l.b16 %v3191
      %v3224 = vunpack.c.l.b16 %v3192
      %v3225 = vunpack.c.l.b16 %v3193
      %v3226 = vunpack.c.l.b16 %v3194
      %v3227 = vunpack.c.l.b16 %v3195
      %v3228 = vunpack.c.l.b16 %v3196
      %v3229 = vunpack.c.l.b16 %v3197
      %v3230 = vunpack.c.l.b16 %v3198
      %v3231 = vunpack.c.l.b16 %v3199
      %v3232 = vunpack.c.l.b16 %v3200
      %v3233 = vunpack.c.l.b16 %v3201
      %v3234 = vunpack.c.l.b16 %v3202
      %v3235 = vunpack.c.l.b16 %v3203
      %v3236 = vunpack.c.l.b16 %v3204
      %v3237 = vunpack.c.l.b16 %v3205
      %v3238 = vpack.c.b16 %v3223, %v3222
      %v3239 = vpack.c.b16 %v3225, %v3224
      %v3240 = vpack.c.b16 %v3227, %v3226
      %v3241 = vpack.c.b16 %v3229, %v3228
      %v3242 = vpack.c.b16 %v3231, %v3230
      %v3243 = vpack.c.b16 %v3233, %v3232
      %v3244 = vpack.c.b16 %v3235, %v3234
      %v3245 = vpack.c.b16 %v3237, %v3236
      %3254 = vmatprep.subr.bf16.mxu0 0
      %3255 = vmatpush1.bf16.msra.mxu0 %v3238
      %3256 = vmatprep.subr.bf16.mxu0 0
      %3257 = vmatpush1.bf16.msra.mxu0 %v3239
      %3258 = vmatprep.subr.bf16.mxu0 0
      %3259 = vmatpush1.bf16.msra.mxu0 %v3240
      %3260 = vmatprep.subr.bf16.mxu0 0
      %3261 = vmatpush1.bf16.msra.mxu0 %v3241
      %3262 = vmatprep.subr.bf16.mxu0 0
      %3263 = vmatpush1.bf16.msra.mxu0 %v3242
      %3264 = vmatprep.subr.bf16.mxu0 0
      %3265 = vmatpush1.bf16.msra.mxu0 %v3243
      %3266 = vmatprep.subr.bf16.mxu0 0
      %3267 = vmatpush1.bf16.msra.mxu0 %v3244
      %3268 = vmatprep.subr.bf16.mxu0 0
      %3269 = vmatpush1.bf16.msra.mxu0 %v3245
      %3270 = vmatprep.subr.bf16.mxu0 0
      %3271 = vmatpush1.bf16.msra.mxu0 0
      %3272 = vmatprep.subr.bf16.mxu0 0
      %3273 = vmatpush1.bf16.msra.mxu0 0
      %3274 = vmatprep.subr.bf16.mxu0 0
      %3275 = vmatpush1.bf16.msra.mxu0 0
      %3276 = vmatprep.subr.bf16.mxu0 0
      %3277 = vmatpush1.bf16.msra.mxu0 0
      %3278 = vmatprep.subr.bf16.mxu0 0
      %3279 = vmatpush1.bf16.msra.mxu0 0
      %3280 = vmatprep.subr.bf16.mxu0 0
      %3281 = vmatpush1.bf16.msra.mxu0 0
      %3282 = vmatprep.subr.bf16.mxu0 0
      %3283 = vmatpush1.bf16.msra.mxu0 0
      %3284 = vmatprep.subr.bf16.mxu0 0
      %3285 = vmatpush1.bf16.msra.mxu0 0
      %3286 = vmatprep.mubr.bf16.mxu0 0
      %3287 = vmatmul.mubr.bf16.gmra.mrb[0].mxu0 %v3185
      %v3288 = vpop.f32.mrb[0].mxu0
      %v3289 = vadd.f32 0.0, %v3288
      %v3290 = vpop.f32.mrb[0].mxu0
      %v3291 = vpop.f32.mrb[0].mxu0
      %v3292 = vadd.f32 0.0, %v3291
      %v3293 = vpop.f32.mrb[0].mxu0
      %3294 = vmatprep.mubr.bf16.mxu0 0
      %3295 = vmatmul.mubr.bf16.gmra.mrb[0].mxu0 %v3186
      %v3296 = vpop.f32.mrb[0].mxu0
      %v3297 = vadd.f32 0.0, %v3296
      %v3298 = vpop.f32.mrb[0].mxu0
      %v3299 = vpop.f32.mrb[0].mxu0
      %v3300 = vadd.f32 0.0, %v3299
      %v3301 = vpop.f32.mrb[0].mxu0
      %3302 = vmatprep.mubr.bf16.mxu0 0
      %3303 = vmatmul.mubr.bf16.gmra.mrb[0].mxu0 %v3187
      %v3304 = vpop.f32.mrb[0].mxu0
      %v3305 = vadd.f32 0.0, %v3304
      %v3306 = vpop.f32.mrb[0].mxu0
      %v3307 = vpop.f32.mrb[0].mxu0
      %v3308 = vadd.f32 0.0, %v3307
      %v3309 = vpop.f32.mrb[0].mxu0
      %3310 = vmatprep.mubr.bf16.mxu0 0
      %3311 = vmatmul.mubr.bf16.gmra.mrb[0].mxu0 %v3188
      %v3312 = vpop.f32.mrb[0].mxu0
      %v3313 = vadd.f32 0.0, %v3312
      %v3314 = vpop.f32.mrb[0].mxu0
      %v3315 = vpop.f32.mrb[0].mxu0
      %v3316 = vadd.f32 0.0, %v3315
      %v3317 = vpop.f32.mrb[0].mxu0
      %3318 = vdwg.mxu0
      %v3319 = vadd.f32 %v3169, %v3289
      %v3320 = vadd.f32 %v3170, %v3292
      %v3321 = vadd.f32 %v3171, %v3297
      %v3322 = vadd.f32 %v3172, %v3300
      %v3323 = vadd.f32 %v3173, %v3305
      %v3324 = vadd.f32 %v3174, %v3308
      %v3325 = vadd.f32 %v3175, %v3313
      %v3326 = vadd.f32 %v3176, %v3316
      %v3327 = vld [vmem:[%s3026 + $0x2] sm:$0xff]
      %v3328 = vld [vmem:[%s3026 + $0x12] sm:$0xff]
      %v3329 = vld [vmem:[%s3026 + $0x22] sm:$0xff]
      %v3330 = vld [vmem:[%s3026 + $0x32] sm:$0xff]
      %v3331 = vld [vmem:[%s3026 + $0x42] sm:$0xff]
      %v3332 = vld [vmem:[%s3026 + $0x52] sm:$0xff]
      %v3333 = vld [vmem:[%s3026 + $0x62] sm:$0xff]
      %v3334 = vld [vmem:[%s3026 + $0x72] sm:$0xff]
      %v3335 = vpack.c.bf16 %v3328, %v3327
      %v3336 = vpack.c.bf16 %v3330, %v3329
      %v3337 = vpack.c.bf16 %v3332, %v3331
      %v3338 = vpack.c.bf16 %v3334, %v3333
      %s3339 = scalar_lea.vmem %s3, 512
      %v3340 = vld [vmem:[%s3339] sm:$0xf]
      %v3341 = vld [vmem:[%s3339 + $0x4] sm:$0xf]
      %v3342 = vld [vmem:[%s3339 + $0x8] sm:$0xf]
      %v3343 = vld [vmem:[%s3339 + $0xc] sm:$0xf]
      %v3344 = vld [vmem:[%s3339 + $0x10] sm:$0xf]
      %v3345 = vld [vmem:[%s3339 + $0x14] sm:$0xf]
      %v3346 = vld [vmem:[%s3339 + $0x18] sm:$0xf]
      %v3347 = vld [vmem:[%s3339 + $0x1c] sm:$0xf]
      %v3348 = vld [vmem:[%s3339 + $0x20] sm:$0xf]
      %v3349 = vld [vmem:[%s3339 + $0x24] sm:$0xf]
      %v3350 = vld [vmem:[%s3339 + $0x28] sm:$0xf]
      %v3351 = vld [vmem:[%s3339 + $0x2c] sm:$0xf]
      %v3352 = vld [vmem:[%s3339 + $0x30] sm:$0xf]
      %v3353 = vld [vmem:[%s3339 + $0x34] sm:$0xf]
      %v3354 = vld [vmem:[%s3339 + $0x38] sm:$0xf]
      %v3355 = vld [vmem:[%s3339 + $0x3c] sm:$0xf]
      %v3372 = vunpack.c.l.b16 %v3340
      %v3373 = vunpack.c.l.b16 %v3341
      %v3374 = vunpack.c.l.b16 %v3342
      %v3375 = vunpack.c.l.b16 %v3343
      %v3376 = vunpack.c.l.b16 %v3344
      %v3377 = vunpack.c.l.b16 %v3345
      %v3378 = vunpack.c.l.b16 %v3346
      %v3379 = vunpack.c.l.b16 %v3347
      %v3380 = vunpack.c.l.b16 %v3348
      %v3381 = vunpack.c.l.b16 %v3349
      %v3382 = vunpack.c.l.b16 %v3350
      %v3383 = vunpack.c.l.b16 %v3351
      %v3384 = vunpack.c.l.b16 %v3352
      %v3385 = vunpack.c.l.b16 %v3353
      %v3386 = vunpack.c.l.b16 %v3354
      %v3387 = vunpack.c.l.b16 %v3355
      %v3388 = vpack.c.b16 %v3373, %v3372
      %v3389 = vpack.c.b16 %v3375, %v3374
      %v3390 = vpack.c.b16 %v3377, %v3376
      %v3391 = vpack.c.b16 %v3379, %v3378
      %v3392 = vpack.c.b16 %v3381, %v3380
      %v3393 = vpack.c.b16 %v3383, %v3382
      %v3394 = vpack.c.b16 %v3385, %v3384
      %v3395 = vpack.c.b16 %v3387, %v3386
      %3404 = vmatprep.subr.bf16.mxu0 0
      %3405 = vmatpush1.bf16.msra.mxu0 %v3388
      %3406 = vmatprep.subr.bf16.mxu0 0
      %3407 = vmatpush1.bf16.msra.mxu0 %v3389
      %3408 = vmatprep.subr.bf16.mxu0 0
      %3409 = vmatpush1.bf16.msra.mxu0 %v3390
      %3410 = vmatprep.subr.bf16.mxu0 0
      %3411 = vmatpush1.bf16.msra.mxu0 %v3391
      %3412 = vmatprep.subr.bf16.mxu0 0
      %3413 = vmatpush1.bf16.msra.mxu0 %v3392
      %3414 = vmatprep.subr.bf16.mxu0 0
      %3415 = vmatpush1.bf16.msra.mxu0 %v3393
      %3416 = vmatprep.subr.bf16.mxu0 0
      %3417 = vmatpush1.bf16.msra.mxu0 %v3394
      %3418 = vmatprep.subr.bf16.mxu0 0
      %3419 = vmatpush1.bf16.msra.mxu0 %v3395
      %3420 = vmatprep.subr.bf16.mxu0 0
      %3421 = vmatpush1.bf16.msra.mxu0 0
      %3422 = vmatprep.subr.bf16.mxu0 0
      %3423 = vmatpush1.bf16.msra.mxu0 0
      %3424 = vmatprep.subr.bf16.mxu0 0
      %3425 = vmatpush1.bf16.msra.mxu0 0
      %3426 = vmatprep.subr.bf16.mxu0 0
      %3427 = vmatpush1.bf16.msra.mxu0 0
      %3428 = vmatprep.subr.bf16.mxu0 0
      %3429 = vmatpush1.bf16.msra.mxu0 0
      %3430 = vmatprep.subr.bf16.mxu0 0
      %3431 = vmatpush1.bf16.msra.mxu0 0
      %3432 = vmatprep.subr.bf16.mxu0 0
      %3433 = vmatpush1.bf16.msra.mxu0 0
      %3434 = vmatprep.subr.bf16.mxu0 0
      %3435 = vmatpush1.bf16.msra.mxu0 0
      %3436 = vmatprep.mubr.bf16.mxu0 0
      %3437 = vmatmul.mubr.bf16.gmra.mrb[0].mxu0 %v3335
      %v3438 = vpop.f32.mrb[0].mxu0
      %v3439 = vadd.f32 0.0, %v3438
      %v3440 = vpop.f32.mrb[0].mxu0
      %v3441 = vpop.f32.mrb[0].mxu0
      %v3442 = vadd.f32 0.0, %v3441
      %v3443 = vpop.f32.mrb[0].mxu0
      %3444 = vmatprep.mubr.bf16.mxu0 0
      %3445 = vmatmul.mubr.bf16.gmra.mrb[0].mxu0 %v3336
      %v3446 = vpop.f32.mrb[0].mxu0
      %v3447 = vadd.f32 0.0, %v3446
      %v3448 = vpop.f32.mrb[0].mxu0
      %v3449 = vpop.f32.mrb[0].mxu0
      %v3450 = vadd.f32 0.0, %v3449
      %v3451 = vpop.f32.mrb[0].mxu0
      %3452 = vmatprep.mubr.bf16.mxu0 0
      %3453 = vmatmul.mubr.bf16.gmra.mrb[0].mxu0 %v3337
      %v3454 = vpop.f32.mrb[0].mxu0
      %v3455 = vadd.f32 0.0, %v3454
      %v3456 = vpop.f32.mrb[0].mxu0
      %v3457 = vpop.f32.mrb[0].mxu0
      %v3458 = vadd.f32 0.0, %v3457
      %v3459 = vpop.f32.mrb[0].mxu0
      %3460 = vmatprep.mubr.bf16.mxu0 0
      %3461 = vmatmul.mubr.bf16.gmra.mrb[0].mxu0 %v3338
      %v3462 = vpop.f32.mrb[0].mxu0
      %v3463 = vadd.f32 0.0, %v3462
      %v3464 = vpop.f32.mrb[0].mxu0
      %v3465 = vpop.f32.mrb[0].mxu0
      %v3466 = vadd.f32 0.0, %v3465
      %v3467 = vpop.f32.mrb[0].mxu0
      %3468 = vdwg.mxu0
      %v3469 = vadd.f32 %v3319, %v3439
      %v3470 = vadd.f32 %v3320, %v3442
      %v3471 = vadd.f32 %v3321, %v3447
      %v3472 = vadd.f32 %v3322, %v3450
      %v3473 = vadd.f32 %v3323, %v3455
      %v3474 = vadd.f32 %v3324, %v3458
      %v3475 = vadd.f32 %v3325, %v3463
      %v3476 = vadd.f32 %v3326, %v3466
      %v3477 = vld [vmem:[%s4] sm:$0x1]
      %v3479 = vlaneseq
      %v3480 = vshrl.u32 %v3479, 7
      %v3481 = vsub.s32 0, %v3480
      %v3482 = vrot.slane %v3477, %v3481
      %v3484 = vadd.f32 %v3469, %v3482
      %v3485 = vadd.f32 %v3470, %v3482
      %v3486 = vadd.f32 %v3471, %v3482
      %v3487 = vadd.f32 %v3472, %v3482
      %v3488 = vadd.f32 %v3473, %v3482
      %v3489 = vadd.f32 %v3474, %v3482
      %v3490 = vadd.f32 %v3475, %v3482
      %v3491 = vadd.f32 %v3476, %v3482
      %v3492 = vmax.f32 %v3484, 0.0
      %v3493 = vmax.f32 %v3485, 0.0
      %v3494 = vmax.f32 %v3486, 0.0
      %v3495 = vmax.f32 %v3487, 0.0
      %v3496 = vmax.f32 %v3488, 0.0
      %v3497 = vmax.f32 %v3489, 0.0
      %v3498 = vmax.f32 %v3490, 0.0
      %v3499 = vmax.f32 %v3491, 0.0
      %v3500 = vmin.f32 %v3492, 6.0
      %v3501 = vmin.f32 %v3493, 6.0
      %v3502 = vmin.f32 %v3494, 6.0
      %v3503 = vmin.f32 %v3495, 6.0
      %v3504 = vmin.f32 %v3496, 6.0
      %v3505 = vmin.f32 %v3497, 6.0
      %v3506 = vmin.f32 %v3498, 6.0
      %v3507 = vmin.f32 %v3499, 6.0
      %3508 = vst [vmem:[%s224] sm:$0xff] %v3500
      %3509 = vst [vmem:[%s224 + $0x8] sm:$0xff] %v3501
      %3510 = vst [vmem:[%s224 + $0x10] sm:$0xff] %v3502
      %3511 = vst [vmem:[%s224 + $0x18] sm:$0xff] %v3503
      %3512 = vst [vmem:[%s224 + $0x20] sm:$0xff] %v3504
      %3513 = vst [vmem:[%s224 + $0x28] sm:$0xff] %v3505
      %3514 = vst [vmem:[%s224 + $0x30] sm:$0xff] %v3506
      %3515 = vst [vmem:[%s224 + $0x38] sm:$0xff] %v3507
      %p3516 = scmp.lt.s32.totalorder %s16, 1
      %s3517 = scalar_select %p3516, %s16, 1
      %s3518 = smul.addr %s3517, 8
      %s3519 = smul.addr %s3518, 8
      %s3520 = scalar_lea.vmem %s5, %s3519
      // Predicated region
      $region41: #{double_conv_block.1} parent=39 // pred_check
        %p3521 = pneg %p144
      $region42: #{double_conv_block.1} parent=39 // pred_check_branch
        %3523 = sbr.rel (%p3521) target = $region44
      $region43: #{double_conv_block.1} parent=39 // pred_region
        _
      $region44: #{double_conv_block.1} parent=39 // pred_fallthru
        _
    $region40: #{double_conv_block.1} parent=5 // pred_fallthru
      _
    %p3524 = scmp.le.s32.totalorder 2, %s11
    // Predicated region
    $region45: #{double_conv_block.1} parent=5 // pred_check
      %p3525 = pneg %p3524
    $region46: #{double_conv_block.1} parent=5 // pred_check_branch
      %3527 = sbr.rel (%p3525) target = $region48
    $region47: #{double_conv_block.1} parent=5 // pred_region
      %s3528 = ssub.s32 %s11, 2
      // Predicated region
      $region49: #{double_conv_block.1} parent=47 // pred_check
        %p3529 = pneg %p150
      $region50: #{double_conv_block.1} parent=47 // pred_check_branch
        %3531 = sbr.rel (%p3529) target = $region52
      $region51: #{double_conv_block.1} parent=47 // pred_region
        %p3532 = scmp.lt.s32.totalorder %s17, 1
        %s3533 = scalar_select %p3532, %s17, 1
        %s3534 = smul.addr %s3533, 8
        %s3535 = smul.addr %s3534, 8
        %s3536 = scalar_lea.vmem %s5, %s3535
      $region52: #{double_conv_block.1} parent=47 // pred_fallthru
        _
    $region48: #{double_conv_block.1} parent=5 // pred_fallthru
      _
  $region6: #{double_conv_block.1} parent=0 // loop_footer
    %s15 = sadd.s32 1, %s11
  $region7: #{double_conv_block.1} parent=0 // loop_footer_branch
    %10 = sbr.rel target = $region3
  $region8: #{double_conv_block.1} parent=0 // loop_exit
    _

</llo_original>
